<compile_context>
chip_gen: v7x
topology: tpu7x:2x2x1
jax: 0.10.0
libtpu: 0.0.40
codegen_flags: <defaults>
</compile_context>

<pallas_src>
import functools

import jax
import jax.numpy as jnp
from jax.experimental import pallas as pl
from jax.experimental.pallas import tpu as pltpu

VMEM_SPEC = pl.BlockSpec(memory_space=pltpu.MemorySpace.VMEM)


# ----------------------------------------------------------------------------
# single fused kernel: embedding -> n_layers Mamba blocks -> heads
# ----------------------------------------------------------------------------
def fused_actor_kernel(
        # inputs (31)
        md_ref, p_ref,
        we_ref, be_ref, ge_ref, bte_ref, lnm_ref,
        win_ref, bin_ref, cw_ref, cb_ref, wdt_ref, bdt_ref, dsk_ref,
        wout_ref, bout_ref, lng_ref, lnb_ref,
        wp_ref, bp_ref, wf1m_ref, wf1p_ref, bf1_ref, g1_ref, bt1_ref,
        wf2_ref, bf2_ref, g2_ref, bt2_ref, wms_ref, bms_ref,
        # output (1)
        out_ref,
        *, B, S, H, d_inner, d_conv, n_layers, action_dim,
        log_std_min, log_std_max):
    BDi = B * d_inner
    f32 = jnp.float32

    def bdot(a, w):  # bf16 operands on the MXU, f32 accumulation
        return jnp.dot(a.astype(jnp.bfloat16), w, preferred_element_type=f32)

    ln_mat = lnm_ref[...]  # (B*H, B*H) block-averaging matrix (1/H blocks)

    def packed_ln(v, g, b, eps=1e-5):
        # Segmented LayerNorm over each batch's H lanes of the packed stream.
        # Stats via tiny f32 matmuls (MXU idle) -> no cross-lane shuffles.
        mu = jnp.dot(v, ln_mat, preferred_element_type=f32)
        c = v - mu
        var = jnp.dot(c * c, ln_mat, preferred_element_type=f32)
        return c * jax.lax.rsqrt(var + eps) * g + b

    def row_ln(v, g, b, eps=1e-5):
        mu = jnp.mean(v, axis=-1, keepdims=True)
        var = jnp.mean((v - mu) ** 2, axis=-1, keepdims=True)
        return (v - mu) * jax.lax.rsqrt(var + eps) * g + b

    def silu(v):
        return v * jax.nn.sigmoid(v)

    row = jax.lax.broadcasted_iota(jnp.int32, (S, BDi), 0)  # sublane index

    # ---- input embedding: Linear -> LayerNorm -> ReLU (dropout = identity) ----
    x = bdot(md_ref[...], we_ref[...]) + be_ref[...]                # (S, B*H)
    x = jnp.maximum(packed_ln(x, ge_ref[...], bte_ref[...]), 0.0)

    # ---- Mamba blocks (statically unrolled; fully lane-packed) ----
    for l in range(n_layers):
        residual = x

        # in_proj with block-diag weight; output lanes = [xs blocks | res blocks]
        xr = bdot(x, win_ref[l]) + bin_ref[l]                       # (S, 2*B*Di)
        xs_p = silu(xr[:, :BDi])                                    # (S, B*Di)
        res_p = xr[:, BDi:]

        # causal depthwise conv1d via sublane rolls (XLU) + VPU FMAs, no scratch
        cw = cw_ref[l]                                              # (d_conv, B*Di)
        acc = xs_p * cw[d_conv - 1:d_conv, :] + cb_ref[l]
        for j in range(1, d_conv):
            sh = pltpu.roll(xs_p, shift=j, axis=0)                  # sh[t] = xs[t-j]
            sh = jnp.where(row >= j, sh, 0.0)                       # zero the wrap
            acc = acc + sh * cw[d_conv - 1 - j:d_conv - j, :]
        xc_p = silu(acc)                                            # (S, B*Di)

        # TODO(synk): x_proj (B, C) and A = -exp(A_log) are unused by the
        # reference _selective_scan -> not computed.

        dt = jax.nn.softplus(bdot(xc_p, wdt_ref[l]) + bdt_ref[l])   # (S, B*Di)
        a_p = jax.nn.sigmoid(dt)

        # selective scan  y[0]=xc[0]; y[t]=a[t]*xc[t]+(1-a[t])*y[t-1]
        # as a log2(S)-step Hillis-Steele scan of affine maps (A, B): all vregs.
        row0 = row == 0
        acc_a = jnp.where(row0, 0.0, 1.0 - a_p)
        acc_b = jnp.where(row0, xc_p, a_p * xc_p)
        d = 1
        while d < S:
            a_sh = jnp.where(row >= d, pltpu.roll(acc_a, shift=d, axis=0), 1.0)
            b_sh = jnp.where(row >= d, pltpu.roll(acc_b, shift=d, axis=0), 0.0)
            acc_b = acc_a * b_sh + acc_b     # compose: B <- A*B_prev + B
            acc_a = acc_a * a_sh             #          A <- A*A_prev
            d *= 2
        y_p = acc_b

        # D skip + gate + out_proj (block-diag) + residual + segmented LN
        y_p = (y_p + xc_p * dsk_ref[l]) * silu(res_p)
        out = bdot(y_p, wout_ref[l]) + bout_ref[l]                  # (S, B*H)
        x = packed_ln(out + residual, lng_ref[l], lnb_ref[l])

    # ---- heads (tiny, batch-major) ----
    last = x[S - 1:S, :]                                            # (1, B*H)
    mf = jnp.concatenate([last[:, b * H:(b + 1) * H] for b in range(B)],
                         axis=0)                                    # (B, H)

    # portfolio_fc: k=2 "matmul" as broadcast-adds, ReLU (dropout = identity)
    p = p_ref[...]
    wp = wp_ref[...]
    pf = jnp.maximum(p[:, 0:1] * wp[0:1, :] + p[:, 1:2] * wp[1:2, :]
                     + bp_ref[...], 0.0)                            # (B, H//4)

    # fusion layer 1 (weight split by input half -> no feature concat), LN, ReLU
    h = bdot(mf, wf1m_ref[...]) + bdot(pf, wf1p_ref[...]) + bf1_ref[...]
    h = jnp.maximum(row_ln(h, g1_ref[...], bt1_ref[...]), 0.0)
    # fusion layer 2, LN, ReLU
    h = bdot(h, wf2_ref[...]) + bf2_ref[...]
    h = jnp.maximum(row_ln(h, g2_ref[...], bt2_ref[...]), 0.0)

    # fused mean / log_std head: one (H, 2*A) matmul, single output write
    ms = bdot(h, wms_ref[...]) + bms_ref[...]                       # (B, 2*A)
    mean = ms[:, :action_dim]
    log_std = jnp.clip(ms[:, action_dim:], log_std_min, log_std_max)
    out_ref[...] = jnp.concatenate([mean, log_std], axis=1)


# ----------------------------------------------------------------------------
# wrapper: packs / block-diagonalizes weights (hoisted out of the kernel)
# ----------------------------------------------------------------------------
def mamba_actor_forward(market_data, portfolio_state, params, *,
                        d_conv=4, expand=2, action_dim=1,
                        log_std_min=-2.0, log_std_max=2.0):
    B, S, F = market_data.shape
    H = params["embed"]["w"].shape[1]
    Di = expand * H
    L = len(params["mamba"])
    bf16, f32 = jnp.bfloat16, jnp.float32

    def bd(w):           # (in, out) -> block-diagonal (B*in, B*out)
        return jnp.kron(jnp.eye(B, dtype=w.dtype), w)

    def lane_tile(v):    # (n,) -> (1, B*n) lane-packed per-batch copy
        return jnp.tile(v, B)[None, :].astype(f32)

    e, hd = params["embed"], params["heads"]

    # lane-pack the input: (B, S, F) -> (S, B*F), row t lanes [b*F:(b+1)*F]
    md_p = jnp.transpose(market_data.astype(f32), (1, 0, 2)).reshape(S, B * F)
    we_bd = bd(e["w"]).astype(bf16)
    # segmented-LayerNorm block-averaging matrix (f32 for LN-stat precision)
    ln_mat = jnp.kron(jnp.eye(B, dtype=f32), jnp.full((H, H), 1.0 / H, f32))

    def per_layer(lyr):
        w_in = lyr["w_in"]
        win = jnp.concatenate([bd(w_in[:, :Di]), bd(w_in[:, Di:])], axis=1)
        bin_ = jnp.concatenate([jnp.tile(lyr["b_in"][:Di], B),
                                jnp.tile(lyr["b_in"][Di:], B)])[None, :]
        return dict(
            win=win.astype(bf16), bin=bin_.astype(f32),
            cw=jnp.tile(lyr["conv_w"], (1, B)).astype(f32),
            cb=lane_tile(lyr["conv_b"]),
            wdt=bd(lyr["w_dt"]).astype(bf16), bdt=lane_tile(lyr["b_dt"]),
            dsk=lane_tile(lyr["D"]),
            wout=bd(lyr["w_out"]).astype(bf16), bout=lane_tile(lyr["b_out"]),
            lng=lane_tile(lyr["ln_g"]), lnb=lane_tile(lyr["ln_b"]),
        )

    packed = [per_layer(l) for l in params["mamba"]]

    def stack(k):
        return jnp.stack([p[k] for p in packed], axis=0)

    args = (
        md_p, portfolio_state.astype(f32),
        we_bd, lane_tile(e["b"]), lane_tile(e["g"]), lane_tile(e["beta"]), ln_mat,
        stack("win"), stack("bin"), stack("cw"), stack("cb"),
        stack("wdt"), stack("bdt"), stack("dsk"),
        stack("wout"), stack("bout"), stack("lng"), stack("lnb"),
        hd["w_p"].astype(f32), hd["b_p"][None, :].astype(f32),
        hd["w_f1_m"].astype(bf16), hd["w_f1_p"].astype(bf16),
        hd["b_f1"][None, :].astype(f32),
        hd["g1"][None, :].astype(f32), hd["bt1"][None, :].astype(f32),
        hd["w_f2"].astype(bf16), hd["b_f2"][None, :].astype(f32),
        hd["g2"][None, :].astype(f32), hd["bt2"][None, :].astype(f32),
        hd["w_ms"].astype(bf16), hd["b_ms"][None, :].astype(f32),
    )

    kern = functools.partial(
        fused_actor_kernel, B=B, S=S, H=H, d_inner=Di, d_conv=d_conv,
        n_layers=L, action_dim=action_dim,
        log_std_min=log_std_min, log_std_max=log_std_max)

    out = pl.pallas_call(
        kern,
        out_shape=jax.ShapeDtypeStruct((B, 2 * action_dim), jnp.float32),
        in_specs=[VMEM_SPEC] * len(args),   # count derived from args
        out_specs=VMEM_SPEC,
    )(*args)
    return out[:, :action_dim], out[:, action_dim:]


# ----------------------------------------------------------------------------
# parameter construction (matches torch init: xavier linears, zero biases,
# conv1d default uniform, LayerNorm gamma=1/beta=0)
# ----------------------------------------------------------------------------
def xavier(key, fan_in, fan_out, scale_fan_in=None, scale_fan_out=None):
    fi = fan_in if scale_fan_in is None else scale_fan_in
    fo = fan_out if scale_fan_out is None else scale_fan_out
    limit = (6.0 / (fi + fo)) ** 0.5
    return jax.random.uniform(key, (fan_in, fan_out), jnp.float32, -limit, limit)


def make_params(key, feature_dim, hidden_dim, action_dim, n_layers, d_conv, expand):
    Di = expand * hidden_dim
    H4 = hidden_dim // 4
    keys = iter(jax.random.split(key, 16 + 8 * n_layers))

    params = {
        "embed": {
            "w": xavier(next(keys), feature_dim, hidden_dim),
            "b": jnp.zeros((hidden_dim,), jnp.float32),
            "g": jnp.ones((hidden_dim,), jnp.float32),
            "beta": jnp.zeros((hidden_dim,), jnp.float32),
        },
        "mamba": [],
    }
    conv_bound = 1.0 / (d_conv ** 0.5)   # torch Conv1d default bound (groups=Di)
    for _ in range(n_layers):
        params["mamba"].append({
            "w_in": xavier(next(keys), hidden_dim, 2 * Di),
            "b_in": jnp.zeros((2 * Di,), jnp.float32),
            # depthwise conv weight stored as (d_conv, Di): conv_w[k, d] == torch w[d, 0, k]
            "conv_w": jax.random.uniform(next(keys), (d_conv, Di), jnp.float32,
                                         -conv_bound, conv_bound),
            "conv_b": jax.random.uniform(next(keys), (Di,), jnp.float32,
                                         -conv_bound, conv_bound),
            "w_dt": xavier(next(keys), Di, Di),
            "b_dt": jnp.zeros((Di,), jnp.float32),
            "D": jnp.ones((Di,), jnp.float32),
            "w_out": xavier(next(keys), Di, hidden_dim),
            "b_out": jnp.zeros((hidden_dim,), jnp.float32),
            "ln_g": jnp.ones((hidden_dim,), jnp.float32),
            "ln_b": jnp.zeros((hidden_dim,), jnp.float32),
        })

    fused_in = hidden_dim + H4
    w_mean = xavier(next(keys), hidden_dim, action_dim)
    w_ls = xavier(next(keys), hidden_dim, action_dim)
    params["heads"] = {
        "w_p": xavier(next(keys), 2, H4),
        "b_p": jnp.zeros((H4,), jnp.float32),
        # fusion layer-1 weight split into market / portfolio halves (no concat)
        "w_f1_m": xavier(next(keys), hidden_dim, hidden_dim, scale_fan_in=fused_in),
        "w_f1_p": xavier(next(keys), H4, hidden_dim, scale_fan_in=fused_in),
        "b_f1": jnp.zeros((hidden_dim,), jnp.float32),
        "g1": jnp.ones((hidden_dim,), jnp.float32),
        "bt1": jnp.zeros((hidden_dim,), jnp.float32),
        "w_f2": xavier(next(keys), hidden_dim, hidden_dim),
        "b_f2": jnp.zeros((hidden_dim,), jnp.float32),
        "g2": jnp.ones((hidden_dim,), jnp.float32),
        "bt2": jnp.zeros((hidden_dim,), jnp.float32),
        # mean / log_std heads fused into one (H, 2*action_dim) matmul
        "w_ms": jnp.concatenate([w_mean, w_ls], axis=1),
        "b_ms": jnp.zeros((2 * action_dim,), jnp.float32),
    }
    return params


# ----------------------------------------------------------------------------
# demo / self-test
# ----------------------------------------------------------------------------
if __name__ == "__main__":
    B = 2          # batch
    WINDOW = 8     # seq_len (window_size)
    FEAT = 8       # feature_dim
    HIDDEN = 32    # hidden_dim
    LAYERS = 4     # mamba_layers
    ACTION = 1     # action_dim

    key = jax.random.PRNGKey(0)
    k_md, k_ps, k_params = jax.random.split(key, 3)
    market_data = jax.random.normal(k_md, (B, WINDOW, FEAT), jnp.float32)
    portfolio_state = jax.random.normal(k_ps, (B, 2), jnp.float32)

    params = make_params(k_params, FEAT, HIDDEN, ACTION, LAYERS,
                         d_conv=4, expand=2)

    mean, log_std = mamba_actor_forward(market_data, portfolio_state, params,
                                        d_conv=4, expand=2, action_dim=ACTION)
    jax.block_until_ready((mean, log_std))

    assert mean.shape == (B, ACTION) and log_std.shape == (B, ACTION)
    assert bool(jnp.all(jnp.isfinite(mean))) and bool(jnp.all(jnp.isfinite(log_std)))
    assert bool(jnp.all(log_std >= -2.0)) and bool(jnp.all(log_std <= 2.0))
    print("KERNEL_OK")
</pallas_src>

<mosaic_0001>
module attributes {stable_mosaic.version = 11 : i64} {
  func.func @fused_actor_kernel(%arg0: memref<8x16xf32, #tpu.memory_space<vmem>>, %arg1: memref<2x2xf32, #tpu.memory_space<vmem>>, %arg2: memref<16x64xbf16, #tpu.memory_space<vmem>>, %arg3: memref<1x64xf32, #tpu.memory_space<vmem>>, %arg4: memref<1x64xf32, #tpu.memory_space<vmem>>, %arg5: memref<1x64xf32, #tpu.memory_space<vmem>>, %arg6: memref<64x64xf32, #tpu.memory_space<vmem>>, %arg7: memref<4x64x256xbf16, #tpu.memory_space<vmem>>, %arg8: memref<4x1x256xf32, #tpu.memory_space<vmem>>, %arg9: memref<4x4x128xf32, #tpu.memory_space<vmem>>, %arg10: memref<4x1x128xf32, #tpu.memory_space<vmem>>, %arg11: memref<4x128x128xbf16, #tpu.memory_space<vmem>>, %arg12: memref<4x1x128xf32, #tpu.memory_space<vmem>>, %arg13: memref<4x1x128xf32, #tpu.memory_space<vmem>>, %arg14: memref<4x128x64xbf16, #tpu.memory_space<vmem>>, %arg15: memref<4x1x64xf32, #tpu.memory_space<vmem>>, %arg16: memref<4x1x64xf32, #tpu.memory_space<vmem>>, %arg17: memref<4x1x64xf32, #tpu.memory_space<vmem>>, %arg18: memref<2x8xf32, #tpu.memory_space<vmem>>, %arg19: memref<1x8xf32, #tpu.memory_space<vmem>>, %arg20: memref<32x32xbf16, #tpu.memory_space<vmem>>, %arg21: memref<8x32xbf16, #tpu.memory_space<vmem>>, %arg22: memref<1x32xf32, #tpu.memory_space<vmem>>, %arg23: memref<1x32xf32, #tpu.memory_space<vmem>>, %arg24: memref<1x32xf32, #tpu.memory_space<vmem>>, %arg25: memref<32x32xbf16, #tpu.memory_space<vmem>>, %arg26: memref<1x32xf32, #tpu.memory_space<vmem>>, %arg27: memref<1x32xf32, #tpu.memory_space<vmem>>, %arg28: memref<1x32xf32, #tpu.memory_space<vmem>>, %arg29: memref<32x2xbf16, #tpu.memory_space<vmem>>, %arg30: memref<1x2xf32, #tpu.memory_space<vmem>>, %arg31: memref<2x2xf32, #tpu.memory_space<vmem>>) attributes {dimension_semantics = [], scalar_prefetch = 0 : i64, scratch_operands = 0 : i64, tpu.core_type = #tpu.core_type<tc>} {
    %c0 = arith.constant 0 : index
    %c0_0 = arith.constant 0 : index
    %0 = vector.load %arg6[%c0, %c0_0] : memref<64x64xf32, #tpu.memory_space<vmem>>, vector<64x64xf32>
    %1 = tpu.iota {dimensions = array<i32: 0>} : vector<8x128xi32>
    %c0_1 = arith.constant 0 : index
    %c0_2 = arith.constant 0 : index
    %2 = vector.load %arg0[%c0_1, %c0_2] : memref<8x16xf32, #tpu.memory_space<vmem>>, vector<8x16xf32>
    %c0_3 = arith.constant 0 : index
    %c0_4 = arith.constant 0 : index
    %3 = vector.load %arg2[%c0_3, %c0_4] : memref<16x64xbf16, #tpu.memory_space<vmem>>, vector<16x64xbf16>
    %4 = arith.truncf %2 : vector<8x16xf32> to vector<8x16xbf16>
    %cst = arith.constant dense<0.000000e+00> : vector<8x64xf32>
    %5 = tpu.matmul %4, %3, %cst {dimension_numbers = #tpu.dot_dimension_numbers<[1], [0], [0], [1], [0, 0, 1, 1], [], []>} : vector<8x16xbf16>, vector<16x64xbf16>, vector<8x64xf32> -> vector<8x64xf32>
    %c0_5 = arith.constant 0 : index
    %c0_6 = arith.constant 0 : index
    %6 = vector.load %arg3[%c0_5, %c0_6] : memref<1x64xf32, #tpu.memory_space<vmem>>, vector<1x64xf32>
    %7 = vector.broadcast %6 : vector<1x64xf32> to vector<8x64xf32>
    %8 = arith.addf %5, %7 : vector<8x64xf32>
    %c0_7 = arith.constant 0 : index
    %c0_8 = arith.constant 0 : index
    %9 = vector.load %arg4[%c0_7, %c0_8] : memref<1x64xf32, #tpu.memory_space<vmem>>, vector<1x64xf32>
    %c0_9 = arith.constant 0 : index
    %c0_10 = arith.constant 0 : index
    %10 = vector.load %arg5[%c0_9, %c0_10] : memref<1x64xf32, #tpu.memory_space<vmem>>, vector<1x64xf32>
    %cst_11 = arith.constant dense<0.000000e+00> : vector<8x64xf32>
    %11 = tpu.matmul %8, %0, %cst_11 {dimension_numbers = #tpu.dot_dimension_numbers<[1], [0], [0], [1], [0, 0, 1, 1], [], []>} : vector<8x64xf32>, vector<64x64xf32>, vector<8x64xf32> -> vector<8x64xf32>
    %12 = arith.subf %8, %11 : vector<8x64xf32>
    %13 = arith.mulf %12, %12 : vector<8x64xf32>
    %cst_12 = arith.constant dense<0.000000e+00> : vector<8x64xf32>
    %14 = tpu.matmul %13, %0, %cst_12 {dimension_numbers = #tpu.dot_dimension_numbers<[1], [0], [0], [1], [0, 0, 1, 1], [], []>} : vector<8x64xf32>, vector<64x64xf32>, vector<8x64xf32> -> vector<8x64xf32>
    %cst_13 = arith.constant 9.99999974E-6 : f32
    %15 = vector.broadcast %cst_13 : f32 to vector<8x64xf32>
    %16 = arith.addf %14, %15 : vector<8x64xf32>
    %17 = math.rsqrt %16 : vector<8x64xf32>
    %18 = arith.mulf %12, %17 : vector<8x64xf32>
    %19 = vector.broadcast %9 : vector<1x64xf32> to vector<8x64xf32>
    %20 = arith.mulf %18, %19 : vector<8x64xf32>
    %21 = vector.broadcast %10 : vector<1x64xf32> to vector<8x64xf32>
    %22 = arith.addf %20, %21 : vector<8x64xf32>
    %cst_14 = arith.constant 0.000000e+00 : f32
    %23 = vector.broadcast %cst_14 : f32 to vector<8x64xf32>
    %24 = arith.maximumf %22, %23 : vector<8x64xf32>
    %c0_15 = arith.constant 0 : index
    %c0_16 = arith.constant 0 : index
    %c0_17 = arith.constant 0 : index
    %25 = vector.load %arg7[%c0_15, %c0_16, %c0_17] : memref<4x64x256xbf16, #tpu.memory_space<vmem>>, vector<1x64x256xbf16>
    %26 = vector.shape_cast %25 : vector<1x64x256xbf16> to vector<64x256xbf16>
    %27 = arith.truncf %24 : vector<8x64xf32> to vector<8x64xbf16>
    %cst_18 = arith.constant dense<0.000000e+00> : vector<8x256xf32>
    %28 = tpu.matmul %27, %26, %cst_18 {dimension_numbers = #tpu.dot_dimension_numbers<[1], [0], [0], [1], [0, 0, 1, 1], [], []>} : vector<8x64xbf16>, vector<64x256xbf16>, vector<8x256xf32> -> vector<8x256xf32>
    %c0_19 = arith.constant 0 : index
    %c0_20 = arith.constant 0 : index
    %c0_21 = arith.constant 0 : index
    %29 = vector.load %arg8[%c0_19, %c0_20, %c0_21] : memref<4x1x256xf32, #tpu.memory_space<vmem>>, vector<1x1x256xf32>
    %30 = vector.shape_cast %29 : vector<1x1x256xf32> to vector<1x256xf32>
    %31 = vector.broadcast %30 : vector<1x256xf32> to vector<8x256xf32>
    %32 = arith.addf %28, %31 : vector<8x256xf32>
    %33 = vector.extract_strided_slice %32 {offsets = [0, 0], sizes = [8, 128], strides = [1, 1]} : vector<8x256xf32> to vector<8x128xf32>
    %34 = arith.negf %33 : vector<8x128xf32>
    %35 = math.exp %34 : vector<8x128xf32>
    %cst_22 = arith.constant 1.000000e+00 : f32
    %36 = vector.broadcast %cst_22 : f32 to vector<8x128xf32>
    %37 = arith.addf %36, %35 : vector<8x128xf32>
    %38 = arith.divf %36, %37 : vector<8x128xf32>
    %39 = arith.mulf %33, %38 : vector<8x128xf32>
    %40 = vector.extract_strided_slice %32 {offsets = [0, 128], sizes = [8, 128], strides = [1, 1]} : vector<8x256xf32> to vector<8x128xf32>
    %c0_23 = arith.constant 0 : index
    %c0_24 = arith.constant 0 : index
    %c0_25 = arith.constant 0 : index
    %41 = vector.load %arg9[%c0_23, %c0_24, %c0_25] : memref<4x4x128xf32, #tpu.memory_space<vmem>>, vector<1x4x128xf32>
    %42 = vector.shape_cast %41 : vector<1x4x128xf32> to vector<4x128xf32>
    %43 = vector.extract_strided_slice %42 {offsets = [3, 0], sizes = [1, 128], strides = [1, 1]} : vector<4x128xf32> to vector<1x128xf32>
    %44 = vector.broadcast %43 : vector<1x128xf32> to vector<8x128xf32>
    %45 = arith.mulf %39, %44 : vector<8x128xf32>
    %c0_26 = arith.constant 0 : index
    %c0_27 = arith.constant 0 : index
    %c0_28 = arith.constant 0 : index
    %46 = vector.load %arg10[%c0_26, %c0_27, %c0_28] : memref<4x1x128xf32, #tpu.memory_space<vmem>>, vector<1x1x128xf32>
    %47 = vector.shape_cast %46 : vector<1x1x128xf32> to vector<1x128xf32>
    %48 = vector.broadcast %47 : vector<1x128xf32> to vector<8x128xf32>
    %49 = arith.addf %45, %48 : vector<8x128xf32>
    %c1_i32 = arith.constant 1 : i32
    %50 = tpu.dynamic_rotate %39 by %c1_i32 dim 0 : vector<8x128xf32>, i32 -> vector<8x128xf32>
    %c1_i32_29 = arith.constant 1 : i32
    %51 = vector.broadcast %c1_i32_29 : i32 to vector<8x128xi32>
    %52 = arith.cmpi sge, %1, %51 : vector<8x128xi32>
    %cst_30 = arith.constant 0.000000e+00 : f32
    %53 = vector.broadcast %cst_30 : f32 to vector<8x128xf32>
    %54 = arith.select %52, %50, %53 : vector<8x128xi1>, vector<8x128xf32>
    %55 = vector.extract_strided_slice %42 {offsets = [2, 0], sizes = [1, 128], strides = [1, 1]} : vector<4x128xf32> to vector<1x128xf32>
    %56 = vector.broadcast %55 : vector<1x128xf32> to vector<8x128xf32>
    %57 = arith.mulf %54, %56 : vector<8x128xf32>
    %58 = arith.addf %49, %57 : vector<8x128xf32>
    %c2_i32 = arith.constant 2 : i32
    %59 = tpu.dynamic_rotate %39 by %c2_i32 dim 0 : vector<8x128xf32>, i32 -> vector<8x128xf32>
    %c2_i32_31 = arith.constant 2 : i32
    %60 = vector.broadcast %c2_i32_31 : i32 to vector<8x128xi32>
    %61 = arith.cmpi sge, %1, %60 : vector<8x128xi32>
    %cst_32 = arith.constant 0.000000e+00 : f32
    %62 = vector.broadcast %cst_32 : f32 to vector<8x128xf32>
    %63 = arith.select %61, %59, %62 : vector<8x128xi1>, vector<8x128xf32>
    %64 = vector.extract_strided_slice %42 {offsets = [1, 0], sizes = [1, 128], strides = [1, 1]} : vector<4x128xf32> to vector<1x128xf32>
    %65 = vector.broadcast %64 : vector<1x128xf32> to vector<8x128xf32>
    %66 = arith.mulf %63, %65 : vector<8x128xf32>
    %67 = arith.addf %58, %66 : vector<8x128xf32>
    %c3_i32 = arith.constant 3 : i32
    %68 = tpu.dynamic_rotate %39 by %c3_i32 dim 0 : vector<8x128xf32>, i32 -> vector<8x128xf32>
    %c3_i32_33 = arith.constant 3 : i32
    %69 = vector.broadcast %c3_i32_33 : i32 to vector<8x128xi32>
    %70 = arith.cmpi sge, %1, %69 : vector<8x128xi32>
    %cst_34 = arith.constant 0.000000e+00 : f32
    %71 = vector.broadcast %cst_34 : f32 to vector<8x128xf32>
    %72 = arith.select %70, %68, %71 : vector<8x128xi1>, vector<8x128xf32>
    %73 = vector.extract_strided_slice %42 {offsets = [0, 0], sizes = [1, 128], strides = [1, 1]} : vector<4x128xf32> to vector<1x128xf32>
    %74 = vector.broadcast %73 : vector<1x128xf32> to vector<8x128xf32>
    %75 = arith.mulf %72, %74 : vector<8x128xf32>
    %76 = arith.addf %67, %75 : vector<8x128xf32>
    %77 = arith.negf %76 : vector<8x128xf32>
    %78 = math.exp %77 : vector<8x128xf32>
    %cst_35 = arith.constant 1.000000e+00 : f32
    %79 = vector.broadcast %cst_35 : f32 to vector<8x128xf32>
    %80 = arith.addf %79, %78 : vector<8x128xf32>
    %81 = arith.divf %79, %80 : vector<8x128xf32>
    %82 = arith.mulf %76, %81 : vector<8x128xf32>
    %c0_36 = arith.constant 0 : index
    %c0_37 = arith.constant 0 : index
    %c0_38 = arith.constant 0 : index
    %83 = vector.load %arg11[%c0_36, %c0_37, %c0_38] : memref<4x128x128xbf16, #tpu.memory_space<vmem>>, vector<1x128x128xbf16>
    %84 = vector.shape_cast %83 : vector<1x128x128xbf16> to vector<128x128xbf16>
    %85 = arith.truncf %82 : vector<8x128xf32> to vector<8x128xbf16>
    %cst_39 = arith.constant dense<0.000000e+00> : vector<8x128xf32>
    %86 = tpu.matmul %85, %84, %cst_39 {dimension_numbers = #tpu.dot_dimension_numbers<[1], [0], [0], [1], [0, 0, 1, 1], [], []>} : vector<8x128xbf16>, vector<128x128xbf16>, vector<8x128xf32> -> vector<8x128xf32>
    %c0_40 = arith.constant 0 : index
    %c0_41 = arith.constant 0 : index
    %c0_42 = arith.constant 0 : index
    %87 = vector.load %arg12[%c0_40, %c0_41, %c0_42] : memref<4x1x128xf32, #tpu.memory_space<vmem>>, vector<1x1x128xf32>
    %88 = vector.shape_cast %87 : vector<1x1x128xf32> to vector<1x128xf32>
    %89 = vector.broadcast %88 : vector<1x128xf32> to vector<8x128xf32>
    %90 = arith.addf %86, %89 : vector<8x128xf32>
    %cst_43 = arith.constant 0.000000e+00 : f32
    %91 = vector.broadcast %cst_43 : f32 to vector<8x128xf32>
    %92 = arith.maximumf %90, %91 : vector<8x128xf32>
    %93 = vector.broadcast %cst_43 : f32 to vector<8x128xf32>
    %94 = arith.subf %90, %93 : vector<8x128xf32>
    %95 = arith.cmpf one, %94, %94 : vector<8x128xf32>
    %96 = vector.broadcast %cst_43 : f32 to vector<8x128xf32>
    %97 = arith.addf %90, %96 : vector<8x128xf32>
    %98 = math.absf %94 : vector<8x128xf32>
    %cst_44 = arith.constant 0.000000e+00 : f32
    %99 = vector.broadcast %cst_44 : f32 to vector<8x128xf32>
    %100 = arith.subf %99, %98 : vector<8x128xf32>
    %101 = math.exp %100 : vector<8x128xf32>
    %102 = math.log1p %101 : vector<8x128xf32>
    %103 = arith.addf %92, %102 : vector<8x128xf32>
    %104 = arith.select %95, %97, %103 : vector<8x128xi1>, vector<8x128xf32>
    %105 = arith.negf %104 : vector<8x128xf32>
    %106 = math.exp %105 : vector<8x128xf32>
    %cst_45 = arith.constant 1.000000e+00 : f32
    %107 = vector.broadcast %cst_45 : f32 to vector<8x128xf32>
    %108 = arith.addf %107, %106 : vector<8x128xf32>
    %109 = arith.divf %107, %108 : vector<8x128xf32>
    %c0_i32 = arith.constant 0 : i32
    %110 = vector.broadcast %c0_i32 : i32 to vector<8x128xi32>
    %111 = arith.cmpi eq, %1, %110 : vector<8x128xi32>
    %cst_46 = arith.constant 1.000000e+00 : f32
    %112 = vector.broadcast %cst_46 : f32 to vector<8x128xf32>
    %113 = arith.subf %112, %109 : vector<8x128xf32>
    %cst_47 = arith.constant 0.000000e+00 : f32
    %114 = vector.broadcast %cst_47 : f32 to vector<8x128xf32>
    %115 = arith.select %111, %114, %113 : vector<8x128xi1>, vector<8x128xf32>
    %116 = arith.mulf %109, %82 : vector<8x128xf32>
    %117 = arith.select %111, %82, %116 : vector<8x128xi1>, vector<8x128xf32>
    %c1_i32_48 = arith.constant 1 : i32
    %118 = vector.broadcast %c1_i32_48 : i32 to vector<8x128xi32>
    %119 = arith.cmpi sge, %1, %118 : vector<8x128xi32>
    %c1_i32_49 = arith.constant 1 : i32
    %120 = tpu.dynamic_rotate %115 by %c1_i32_49 dim 0 : vector<8x128xf32>, i32 -> vector<8x128xf32>
    %cst_50 = arith.constant 1.000000e+00 : f32
    %121 = vector.broadcast %cst_50 : f32 to vector<8x128xf32>
    %122 = arith.select %119, %120, %121 : vector<8x128xi1>, vector<8x128xf32>
    %c1_i32_51 = arith.constant 1 : i32
    %123 = vector.broadcast %c1_i32_51 : i32 to vector<8x128xi32>
    %124 = arith.cmpi sge, %1, %123 : vector<8x128xi32>
    %c1_i32_52 = arith.constant 1 : i32
    %125 = tpu.dynamic_rotate %117 by %c1_i32_52 dim 0 : vector<8x128xf32>, i32 -> vector<8x128xf32>
    %cst_53 = arith.constant 0.000000e+00 : f32
    %126 = vector.broadcast %cst_53 : f32 to vector<8x128xf32>
    %127 = arith.select %124, %125, %126 : vector<8x128xi1>, vector<8x128xf32>
    %128 = arith.mulf %115, %127 : vector<8x128xf32>
    %129 = arith.addf %128, %117 : vector<8x128xf32>
    %130 = arith.mulf %115, %122 : vector<8x128xf32>
    %c2_i32_54 = arith.constant 2 : i32
    %131 = vector.broadcast %c2_i32_54 : i32 to vector<8x128xi32>
    %132 = arith.cmpi sge, %1, %131 : vector<8x128xi32>
    %c2_i32_55 = arith.constant 2 : i32
    %133 = tpu.dynamic_rotate %130 by %c2_i32_55 dim 0 : vector<8x128xf32>, i32 -> vector<8x128xf32>
    %cst_56 = arith.constant 1.000000e+00 : f32
    %134 = vector.broadcast %cst_56 : f32 to vector<8x128xf32>
    %135 = arith.select %132, %133, %134 : vector<8x128xi1>, vector<8x128xf32>
    %c2_i32_57 = arith.constant 2 : i32
    %136 = vector.broadcast %c2_i32_57 : i32 to vector<8x128xi32>
    %137 = arith.cmpi sge, %1, %136 : vector<8x128xi32>
    %c2_i32_58 = arith.constant 2 : i32
    %138 = tpu.dynamic_rotate %129 by %c2_i32_58 dim 0 : vector<8x128xf32>, i32 -> vector<8x128xf32>
    %cst_59 = arith.constant 0.000000e+00 : f32
    %139 = vector.broadcast %cst_59 : f32 to vector<8x128xf32>
    %140 = arith.select %137, %138, %139 : vector<8x128xi1>, vector<8x128xf32>
    %141 = arith.mulf %130, %140 : vector<8x128xf32>
    %142 = arith.addf %141, %129 : vector<8x128xf32>
    %143 = arith.mulf %130, %135 : vector<8x128xf32>
    %c4_i32 = arith.constant 4 : i32
    %144 = vector.broadcast %c4_i32 : i32 to vector<8x128xi32>
    %145 = arith.cmpi sge, %1, %144 : vector<8x128xi32>
    %c4_i32_60 = arith.constant 4 : i32
    %146 = tpu.dynamic_rotate %142 by %c4_i32_60 dim 0 : vector<8x128xf32>, i32 -> vector<8x128xf32>
    %cst_61 = arith.constant 0.000000e+00 : f32
    %147 = vector.broadcast %cst_61 : f32 to vector<8x128xf32>
    %148 = arith.select %145, %146, %147 : vector<8x128xi1>, vector<8x128xf32>
    %149 = arith.mulf %143, %148 : vector<8x128xf32>
    %150 = arith.addf %149, %142 : vector<8x128xf32>
    %c0_62 = arith.constant 0 : index
    %c0_63 = arith.constant 0 : index
    %c0_64 = arith.constant 0 : index
    %151 = vector.load %arg13[%c0_62, %c0_63, %c0_64] : memref<4x1x128xf32, #tpu.memory_space<vmem>>, vector<1x1x128xf32>
    %152 = vector.shape_cast %151 : vector<1x1x128xf32> to vector<1x128xf32>
    %153 = vector.broadcast %152 : vector<1x128xf32> to vector<8x128xf32>
    %154 = arith.mulf %82, %153 : vector<8x128xf32>
    %155 = arith.addf %150, %154 : vector<8x128xf32>
    %156 = arith.negf %40 : vector<8x128xf32>
    %157 = math.exp %156 : vector<8x128xf32>
    %cst_65 = arith.constant 1.000000e+00 : f32
    %158 = vector.broadcast %cst_65 : f32 to vector<8x128xf32>
    %159 = arith.addf %158, %157 : vector<8x128xf32>
    %160 = arith.divf %158, %159 : vector<8x128xf32>
    %161 = arith.mulf %40, %160 : vector<8x128xf32>
    %162 = arith.mulf %155, %161 : vector<8x128xf32>
    %c0_66 = arith.constant 0 : index
    %c0_67 = arith.constant 0 : index
    %c0_68 = arith.constant 0 : index
    %163 = vector.load %arg14[%c0_66, %c0_67, %c0_68] : memref<4x128x64xbf16, #tpu.memory_space<vmem>>, vector<1x128x64xbf16>
    %164 = vector.shape_cast %163 : vector<1x128x64xbf16> to vector<128x64xbf16>
    %165 = arith.truncf %162 : vector<8x128xf32> to vector<8x128xbf16>
    %cst_69 = arith.constant dense<0.000000e+00> : vector<8x64xf32>
    %166 = tpu.matmul %165, %164, %cst_69 {dimension_numbers = #tpu.dot_dimension_numbers<[1], [0], [0], [1], [0, 0, 1, 1], [], []>} : vector<8x128xbf16>, vector<128x64xbf16>, vector<8x64xf32> -> vector<8x64xf32>
    %c0_70 = arith.constant 0 : index
    %c0_71 = arith.constant 0 : index
    %c0_72 = arith.constant 0 : index
    %167 = vector.load %arg15[%c0_70, %c0_71, %c0_72] : memref<4x1x64xf32, #tpu.memory_space<vmem>>, vector<1x1x64xf32>
    %168 = vector.shape_cast %167 : vector<1x1x64xf32> to vector<1x64xf32>
    %169 = vector.broadcast %168 : vector<1x64xf32> to vector<8x64xf32>
    %170 = arith.addf %166, %169 : vector<8x64xf32>
    %171 = arith.addf %170, %24 : vector<8x64xf32>
    %c0_73 = arith.constant 0 : index
    %c0_74 = arith.constant 0 : index
    %c0_75 = arith.constant 0 : index
    %172 = vector.load %arg16[%c0_73, %c0_74, %c0_75] : memref<4x1x64xf32, #tpu.memory_space<vmem>>, vector<1x1x64xf32>
    %173 = vector.shape_cast %172 : vector<1x1x64xf32> to vector<1x64xf32>
    %c0_76 = arith.constant 0 : index
    %c0_77 = arith.constant 0 : index
    %c0_78 = arith.constant 0 : index
    %174 = vector.load %arg17[%c0_76, %c0_77, %c0_78] : memref<4x1x64xf32, #tpu.memory_space<vmem>>, vector<1x1x64xf32>
    %175 = vector.shape_cast %174 : vector<1x1x64xf32> to vector<1x64xf32>
    %cst_79 = arith.constant dense<0.000000e+00> : vector<8x64xf32>
    %176 = tpu.matmul %171, %0, %cst_79 {dimension_numbers = #tpu.dot_dimension_numbers<[1], [0], [0], [1], [0, 0, 1, 1], [], []>} : vector<8x64xf32>, vector<64x64xf32>, vector<8x64xf32> -> vector<8x64xf32>
    %177 = arith.subf %171, %176 : vector<8x64xf32>
    %178 = arith.mulf %177, %177 : vector<8x64xf32>
    %cst_80 = arith.constant dense<0.000000e+00> : vector<8x64xf32>
    %179 = tpu.matmul %178, %0, %cst_80 {dimension_numbers = #tpu.dot_dimension_numbers<[1], [0], [0], [1], [0, 0, 1, 1], [], []>} : vector<8x64xf32>, vector<64x64xf32>, vector<8x64xf32> -> vector<8x64xf32>
    %cst_81 = arith.constant 9.99999974E-6 : f32
    %180 = vector.broadcast %cst_81 : f32 to vector<8x64xf32>
    %181 = arith.addf %179, %180 : vector<8x64xf32>
    %182 = math.rsqrt %181 : vector<8x64xf32>
    %183 = arith.mulf %177, %182 : vector<8x64xf32>
    %184 = vector.broadcast %173 : vector<1x64xf32> to vector<8x64xf32>
    %185 = arith.mulf %183, %184 : vector<8x64xf32>
    %186 = vector.broadcast %175 : vector<1x64xf32> to vector<8x64xf32>
    %187 = arith.addf %185, %186 : vector<8x64xf32>
    %c1 = arith.constant 1 : index
    %c0_82 = arith.constant 0 : index
    %c0_83 = arith.constant 0 : index
    %188 = vector.load %arg7[%c1, %c0_82, %c0_83] : memref<4x64x256xbf16, #tpu.memory_space<vmem>>, vector<1x64x256xbf16>
    %189 = vector.shape_cast %188 : vector<1x64x256xbf16> to vector<64x256xbf16>
    %190 = arith.truncf %187 : vector<8x64xf32> to vector<8x64xbf16>
    %cst_84 = arith.constant dense<0.000000e+00> : vector<8x256xf32>
    %191 = tpu.matmul %190, %189, %cst_84 {dimension_numbers = #tpu.dot_dimension_numbers<[1], [0], [0], [1], [0, 0, 1, 1], [], []>} : vector<8x64xbf16>, vector<64x256xbf16>, vector<8x256xf32> -> vector<8x256xf32>
    %c1_85 = arith.constant 1 : index
    %c0_86 = arith.constant 0 : index
    %c0_87 = arith.constant 0 : index
    %192 = vector.load %arg8[%c1_85, %c0_86, %c0_87] : memref<4x1x256xf32, #tpu.memory_space<vmem>>, vector<1x1x256xf32>
    %193 = vector.shape_cast %192 : vector<1x1x256xf32> to vector<1x256xf32>
    %194 = vector.broadcast %193 : vector<1x256xf32> to vector<8x256xf32>
    %195 = arith.addf %191, %194 : vector<8x256xf32>
    %196 = vector.extract_strided_slice %195 {offsets = [0, 0], sizes = [8, 128], strides = [1, 1]} : vector<8x256xf32> to vector<8x128xf32>
    %197 = arith.negf %196 : vector<8x128xf32>
    %198 = math.exp %197 : vector<8x128xf32>
    %cst_88 = arith.constant 1.000000e+00 : f32
    %199 = vector.broadcast %cst_88 : f32 to vector<8x128xf32>
    %200 = arith.addf %199, %198 : vector<8x128xf32>
    %201 = arith.divf %199, %200 : vector<8x128xf32>
    %202 = arith.mulf %196, %201 : vector<8x128xf32>
    %203 = vector.extract_strided_slice %195 {offsets = [0, 128], sizes = [8, 128], strides = [1, 1]} : vector<8x256xf32> to vector<8x128xf32>
    %c1_89 = arith.constant 1 : index
    %c0_90 = arith.constant 0 : index
    %c0_91 = arith.constant 0 : index
    %204 = vector.load %arg9[%c1_89, %c0_90, %c0_91] : memref<4x4x128xf32, #tpu.memory_space<vmem>>, vector<1x4x128xf32>
    %205 = vector.shape_cast %204 : vector<1x4x128xf32> to vector<4x128xf32>
    %206 = vector.extract_strided_slice %205 {offsets = [3, 0], sizes = [1, 128], strides = [1, 1]} : vector<4x128xf32> to vector<1x128xf32>
    %207 = vector.broadcast %206 : vector<1x128xf32> to vector<8x128xf32>
    %208 = arith.mulf %202, %207 : vector<8x128xf32>
    %c1_92 = arith.constant 1 : index
    %c0_93 = arith.constant 0 : index
    %c0_94 = arith.constant 0 : index
    %209 = vector.load %arg10[%c1_92, %c0_93, %c0_94] : memref<4x1x128xf32, #tpu.memory_space<vmem>>, vector<1x1x128xf32>
    %210 = vector.shape_cast %209 : vector<1x1x128xf32> to vector<1x128xf32>
    %211 = vector.broadcast %210 : vector<1x128xf32> to vector<8x128xf32>
    %212 = arith.addf %208, %211 : vector<8x128xf32>
    %c1_i32_95 = arith.constant 1 : i32
    %213 = tpu.dynamic_rotate %202 by %c1_i32_95 dim 0 : vector<8x128xf32>, i32 -> vector<8x128xf32>
    %c1_i32_96 = arith.constant 1 : i32
    %214 = vector.broadcast %c1_i32_96 : i32 to vector<8x128xi32>
    %215 = arith.cmpi sge, %1, %214 : vector<8x128xi32>
    %cst_97 = arith.constant 0.000000e+00 : f32
    %216 = vector.broadcast %cst_97 : f32 to vector<8x128xf32>
    %217 = arith.select %215, %213, %216 : vector<8x128xi1>, vector<8x128xf32>
    %218 = vector.extract_strided_slice %205 {offsets = [2, 0], sizes = [1, 128], strides = [1, 1]} : vector<4x128xf32> to vector<1x128xf32>
    %219 = vector.broadcast %218 : vector<1x128xf32> to vector<8x128xf32>
    %220 = arith.mulf %217, %219 : vector<8x128xf32>
    %221 = arith.addf %212, %220 : vector<8x128xf32>
    %c2_i32_98 = arith.constant 2 : i32
    %222 = tpu.dynamic_rotate %202 by %c2_i32_98 dim 0 : vector<8x128xf32>, i32 -> vector<8x128xf32>
    %c2_i32_99 = arith.constant 2 : i32
    %223 = vector.broadcast %c2_i32_99 : i32 to vector<8x128xi32>
    %224 = arith.cmpi sge, %1, %223 : vector<8x128xi32>
    %cst_100 = arith.constant 0.000000e+00 : f32
    %225 = vector.broadcast %cst_100 : f32 to vector<8x128xf32>
    %226 = arith.select %224, %222, %225 : vector<8x128xi1>, vector<8x128xf32>
    %227 = vector.extract_strided_slice %205 {offsets = [1, 0], sizes = [1, 128], strides = [1, 1]} : vector<4x128xf32> to vector<1x128xf32>
    %228 = vector.broadcast %227 : vector<1x128xf32> to vector<8x128xf32>
    %229 = arith.mulf %226, %228 : vector<8x128xf32>
    %230 = arith.addf %221, %229 : vector<8x128xf32>
    %c3_i32_101 = arith.constant 3 : i32
    %231 = tpu.dynamic_rotate %202 by %c3_i32_101 dim 0 : vector<8x128xf32>, i32 -> vector<8x128xf32>
    %c3_i32_102 = arith.constant 3 : i32
    %232 = vector.broadcast %c3_i32_102 : i32 to vector<8x128xi32>
    %233 = arith.cmpi sge, %1, %232 : vector<8x128xi32>
    %cst_103 = arith.constant 0.000000e+00 : f32
    %234 = vector.broadcast %cst_103 : f32 to vector<8x128xf32>
    %235 = arith.select %233, %231, %234 : vector<8x128xi1>, vector<8x128xf32>
    %236 = vector.extract_strided_slice %205 {offsets = [0, 0], sizes = [1, 128], strides = [1, 1]} : vector<4x128xf32> to vector<1x128xf32>
    %237 = vector.broadcast %236 : vector<1x128xf32> to vector<8x128xf32>
    %238 = arith.mulf %235, %237 : vector<8x128xf32>
    %239 = arith.addf %230, %238 : vector<8x128xf32>
    %240 = arith.negf %239 : vector<8x128xf32>
    %241 = math.exp %240 : vector<8x128xf32>
    %cst_104 = arith.constant 1.000000e+00 : f32
    %242 = vector.broadcast %cst_104 : f32 to vector<8x128xf32>
    %243 = arith.addf %242, %241 : vector<8x128xf32>
    %244 = arith.divf %242, %243 : vector<8x128xf32>
    %245 = arith.mulf %239, %244 : vector<8x128xf32>
    %c1_105 = arith.constant 1 : index
    %c0_106 = arith.constant 0 : index
    %c0_107 = arith.constant 0 : index
    %246 = vector.load %arg11[%c1_105, %c0_106, %c0_107] : memref<4x128x128xbf16, #tpu.memory_space<vmem>>, vector<1x128x128xbf16>
    %247 = vector.shape_cast %246 : vector<1x128x128xbf16> to vector<128x128xbf16>
    %248 = arith.truncf %245 : vector<8x128xf32> to vector<8x128xbf16>
    %cst_108 = arith.constant dense<0.000000e+00> : vector<8x128xf32>
    %249 = tpu.matmul %248, %247, %cst_108 {dimension_numbers = #tpu.dot_dimension_numbers<[1], [0], [0], [1], [0, 0, 1, 1], [], []>} : vector<8x128xbf16>, vector<128x128xbf16>, vector<8x128xf32> -> vector<8x128xf32>
    %c1_109 = arith.constant 1 : index
    %c0_110 = arith.constant 0 : index
    %c0_111 = arith.constant 0 : index
    %250 = vector.load %arg12[%c1_109, %c0_110, %c0_111] : memref<4x1x128xf32, #tpu.memory_space<vmem>>, vector<1x1x128xf32>
    %251 = vector.shape_cast %250 : vector<1x1x128xf32> to vector<1x128xf32>
    %252 = vector.broadcast %251 : vector<1x128xf32> to vector<8x128xf32>
    %253 = arith.addf %249, %252 : vector<8x128xf32>
    %cst_112 = arith.constant 0.000000e+00 : f32
    %254 = vector.broadcast %cst_112 : f32 to vector<8x128xf32>
    %255 = arith.maximumf %253, %254 : vector<8x128xf32>
    %256 = vector.broadcast %cst_112 : f32 to vector<8x128xf32>
    %257 = arith.subf %253, %256 : vector<8x128xf32>
    %258 = arith.cmpf one, %257, %257 : vector<8x128xf32>
    %259 = vector.broadcast %cst_112 : f32 to vector<8x128xf32>
    %260 = arith.addf %253, %259 : vector<8x128xf32>
    %261 = math.absf %257 : vector<8x128xf32>
    %cst_113 = arith.constant 0.000000e+00 : f32
    %262 = vector.broadcast %cst_113 : f32 to vector<8x128xf32>
    %263 = arith.subf %262, %261 : vector<8x128xf32>
    %264 = math.exp %263 : vector<8x128xf32>
    %265 = math.log1p %264 : vector<8x128xf32>
    %266 = arith.addf %255, %265 : vector<8x128xf32>
    %267 = arith.select %258, %260, %266 : vector<8x128xi1>, vector<8x128xf32>
    %268 = arith.negf %267 : vector<8x128xf32>
    %269 = math.exp %268 : vector<8x128xf32>
    %cst_114 = arith.constant 1.000000e+00 : f32
    %270 = vector.broadcast %cst_114 : f32 to vector<8x128xf32>
    %271 = arith.addf %270, %269 : vector<8x128xf32>
    %272 = arith.divf %270, %271 : vector<8x128xf32>
    %c0_i32_115 = arith.constant 0 : i32
    %273 = vector.broadcast %c0_i32_115 : i32 to vector<8x128xi32>
    %274 = arith.cmpi eq, %1, %273 : vector<8x128xi32>
    %cst_116 = arith.constant 1.000000e+00 : f32
    %275 = vector.broadcast %cst_116 : f32 to vector<8x128xf32>
    %276 = arith.subf %275, %272 : vector<8x128xf32>
    %cst_117 = arith.constant 0.000000e+00 : f32
    %277 = vector.broadcast %cst_117 : f32 to vector<8x128xf32>
    %278 = arith.select %274, %277, %276 : vector<8x128xi1>, vector<8x128xf32>
    %279 = arith.mulf %272, %245 : vector<8x128xf32>
    %280 = arith.select %274, %245, %279 : vector<8x128xi1>, vector<8x128xf32>
    %c1_i32_118 = arith.constant 1 : i32
    %281 = vector.broadcast %c1_i32_118 : i32 to vector<8x128xi32>
    %282 = arith.cmpi sge, %1, %281 : vector<8x128xi32>
    %c1_i32_119 = arith.constant 1 : i32
    %283 = tpu.dynamic_rotate %278 by %c1_i32_119 dim 0 : vector<8x128xf32>, i32 -> vector<8x128xf32>
    %cst_120 = arith.constant 1.000000e+00 : f32
    %284 = vector.broadcast %cst_120 : f32 to vector<8x128xf32>
    %285 = arith.select %282, %283, %284 : vector<8x128xi1>, vector<8x128xf32>
    %c1_i32_121 = arith.constant 1 : i32
    %286 = vector.broadcast %c1_i32_121 : i32 to vector<8x128xi32>
    %287 = arith.cmpi sge, %1, %286 : vector<8x128xi32>
    %c1_i32_122 = arith.constant 1 : i32
    %288 = tpu.dynamic_rotate %280 by %c1_i32_122 dim 0 : vector<8x128xf32>, i32 -> vector<8x128xf32>
    %cst_123 = arith.constant 0.000000e+00 : f32
    %289 = vector.broadcast %cst_123 : f32 to vector<8x128xf32>
    %290 = arith.select %287, %288, %289 : vector<8x128xi1>, vector<8x128xf32>
    %291 = arith.mulf %278, %290 : vector<8x128xf32>
    %292 = arith.addf %291, %280 : vector<8x128xf32>
    %293 = arith.mulf %278, %285 : vector<8x128xf32>
    %c2_i32_124 = arith.constant 2 : i32
    %294 = vector.broadcast %c2_i32_124 : i32 to vector<8x128xi32>
    %295 = arith.cmpi sge, %1, %294 : vector<8x128xi32>
    %c2_i32_125 = arith.constant 2 : i32
    %296 = tpu.dynamic_rotate %293 by %c2_i32_125 dim 0 : vector<8x128xf32>, i32 -> vector<8x128xf32>
    %cst_126 = arith.constant 1.000000e+00 : f32
    %297 = vector.broadcast %cst_126 : f32 to vector<8x128xf32>
    %298 = arith.select %295, %296, %297 : vector<8x128xi1>, vector<8x128xf32>
    %c2_i32_127 = arith.constant 2 : i32
    %299 = vector.broadcast %c2_i32_127 : i32 to vector<8x128xi32>
    %300 = arith.cmpi sge, %1, %299 : vector<8x128xi32>
    %c2_i32_128 = arith.constant 2 : i32
    %301 = tpu.dynamic_rotate %292 by %c2_i32_128 dim 0 : vector<8x128xf32>, i32 -> vector<8x128xf32>
    %cst_129 = arith.constant 0.000000e+00 : f32
    %302 = vector.broadcast %cst_129 : f32 to vector<8x128xf32>
    %303 = arith.select %300, %301, %302 : vector<8x128xi1>, vector<8x128xf32>
    %304 = arith.mulf %293, %303 : vector<8x128xf32>
    %305 = arith.addf %304, %292 : vector<8x128xf32>
    %306 = arith.mulf %293, %298 : vector<8x128xf32>
    %c4_i32_130 = arith.constant 4 : i32
    %307 = vector.broadcast %c4_i32_130 : i32 to vector<8x128xi32>
    %308 = arith.cmpi sge, %1, %307 : vector<8x128xi32>
    %c4_i32_131 = arith.constant 4 : i32
    %309 = tpu.dynamic_rotate %305 by %c4_i32_131 dim 0 : vector<8x128xf32>, i32 -> vector<8x128xf32>
    %cst_132 = arith.constant 0.000000e+00 : f32
    %310 = vector.broadcast %cst_132 : f32 to vector<8x128xf32>
    %311 = arith.select %308, %309, %310 : vector<8x128xi1>, vector<8x128xf32>
    %312 = arith.mulf %306, %311 : vector<8x128xf32>
    %313 = arith.addf %312, %305 : vector<8x128xf32>
    %c1_133 = arith.constant 1 : index
    %c0_134 = arith.constant 0 : index
    %c0_135 = arith.constant 0 : index
    %314 = vector.load %arg13[%c1_133, %c0_134, %c0_135] : memref<4x1x128xf32, #tpu.memory_space<vmem>>, vector<1x1x128xf32>
    %315 = vector.shape_cast %314 : vector<1x1x128xf32> to vector<1x128xf32>
    %316 = vector.broadcast %315 : vector<1x128xf32> to vector<8x128xf32>
    %317 = arith.mulf %245, %316 : vector<8x128xf32>
    %318 = arith.addf %313, %317 : vector<8x128xf32>
    %319 = arith.negf %203 : vector<8x128xf32>
    %320 = math.exp %319 : vector<8x128xf32>
    %cst_136 = arith.constant 1.000000e+00 : f32
    %321 = vector.broadcast %cst_136 : f32 to vector<8x128xf32>
    %322 = arith.addf %321, %320 : vector<8x128xf32>
    %323 = arith.divf %321, %322 : vector<8x128xf32>
    %324 = arith.mulf %203, %323 : vector<8x128xf32>
    %325 = arith.mulf %318, %324 : vector<8x128xf32>
    %c1_137 = arith.constant 1 : index
    %c0_138 = arith.constant 0 : index
    %c0_139 = arith.constant 0 : index
    %326 = vector.load %arg14[%c1_137, %c0_138, %c0_139] : memref<4x128x64xbf16, #tpu.memory_space<vmem>>, vector<1x128x64xbf16>
    %327 = vector.shape_cast %326 : vector<1x128x64xbf16> to vector<128x64xbf16>
    %328 = arith.truncf %325 : vector<8x128xf32> to vector<8x128xbf16>
    %cst_140 = arith.constant dense<0.000000e+00> : vector<8x64xf32>
    %329 = tpu.matmul %328, %327, %cst_140 {dimension_numbers = #tpu.dot_dimension_numbers<[1], [0], [0], [1], [0, 0, 1, 1], [], []>} : vector<8x128xbf16>, vector<128x64xbf16>, vector<8x64xf32> -> vector<8x64xf32>
    %c1_141 = arith.constant 1 : index
    %c0_142 = arith.constant 0 : index
    %c0_143 = arith.constant 0 : index
    %330 = vector.load %arg15[%c1_141, %c0_142, %c0_143] : memref<4x1x64xf32, #tpu.memory_space<vmem>>, vector<1x1x64xf32>
    %331 = vector.shape_cast %330 : vector<1x1x64xf32> to vector<1x64xf32>
    %332 = vector.broadcast %331 : vector<1x64xf32> to vector<8x64xf32>
    %333 = arith.addf %329, %332 : vector<8x64xf32>
    %334 = arith.addf %333, %187 : vector<8x64xf32>
    %c1_144 = arith.constant 1 : index
    %c0_145 = arith.constant 0 : index
    %c0_146 = arith.constant 0 : index
    %335 = vector.load %arg16[%c1_144, %c0_145, %c0_146] : memref<4x1x64xf32, #tpu.memory_space<vmem>>, vector<1x1x64xf32>
    %336 = vector.shape_cast %335 : vector<1x1x64xf32> to vector<1x64xf32>
    %c1_147 = arith.constant 1 : index
    %c0_148 = arith.constant 0 : index
    %c0_149 = arith.constant 0 : index
    %337 = vector.load %arg17[%c1_147, %c0_148, %c0_149] : memref<4x1x64xf32, #tpu.memory_space<vmem>>, vector<1x1x64xf32>
    %338 = vector.shape_cast %337 : vector<1x1x64xf32> to vector<1x64xf32>
    %cst_150 = arith.constant dense<0.000000e+00> : vector<8x64xf32>
    %339 = tpu.matmul %334, %0, %cst_150 {dimension_numbers = #tpu.dot_dimension_numbers<[1], [0], [0], [1], [0, 0, 1, 1], [], []>} : vector<8x64xf32>, vector<64x64xf32>, vector<8x64xf32> -> vector<8x64xf32>
    %340 = arith.subf %334, %339 : vector<8x64xf32>
    %341 = arith.mulf %340, %340 : vector<8x64xf32>
    %cst_151 = arith.constant dense<0.000000e+00> : vector<8x64xf32>
    %342 = tpu.matmul %341, %0, %cst_151 {dimension_numbers = #tpu.dot_dimension_numbers<[1], [0], [0], [1], [0, 0, 1, 1], [], []>} : vector<8x64xf32>, vector<64x64xf32>, vector<8x64xf32> -> vector<8x64xf32>
    %cst_152 = arith.constant 9.99999974E-6 : f32
    %343 = vector.broadcast %cst_152 : f32 to vector<8x64xf32>
    %344 = arith.addf %342, %343 : vector<8x64xf32>
    %345 = math.rsqrt %344 : vector<8x64xf32>
    %346 = arith.mulf %340, %345 : vector<8x64xf32>
    %347 = vector.broadcast %336 : vector<1x64xf32> to vector<8x64xf32>
    %348 = arith.mulf %346, %347 : vector<8x64xf32>
    %349 = vector.broadcast %338 : vector<1x64xf32> to vector<8x64xf32>
    %350 = arith.addf %348, %349 : vector<8x64xf32>
    %c2 = arith.constant 2 : index
    %c0_153 = arith.constant 0 : index
    %c0_154 = arith.constant 0 : index
    %351 = vector.load %arg7[%c2, %c0_153, %c0_154] : memref<4x64x256xbf16, #tpu.memory_space<vmem>>, vector<1x64x256xbf16>
    %352 = vector.shape_cast %351 : vector<1x64x256xbf16> to vector<64x256xbf16>
    %353 = arith.truncf %350 : vector<8x64xf32> to vector<8x64xbf16>
    %cst_155 = arith.constant dense<0.000000e+00> : vector<8x256xf32>
    %354 = tpu.matmul %353, %352, %cst_155 {dimension_numbers = #tpu.dot_dimension_numbers<[1], [0], [0], [1], [0, 0, 1, 1], [], []>} : vector<8x64xbf16>, vector<64x256xbf16>, vector<8x256xf32> -> vector<8x256xf32>
    %c2_156 = arith.constant 2 : index
    %c0_157 = arith.constant 0 : index
    %c0_158 = arith.constant 0 : index
    %355 = vector.load %arg8[%c2_156, %c0_157, %c0_158] : memref<4x1x256xf32, #tpu.memory_space<vmem>>, vector<1x1x256xf32>
    %356 = vector.shape_cast %355 : vector<1x1x256xf32> to vector<1x256xf32>
    %357 = vector.broadcast %356 : vector<1x256xf32> to vector<8x256xf32>
    %358 = arith.addf %354, %357 : vector<8x256xf32>
    %359 = vector.extract_strided_slice %358 {offsets = [0, 0], sizes = [8, 128], strides = [1, 1]} : vector<8x256xf32> to vector<8x128xf32>
    %360 = arith.negf %359 : vector<8x128xf32>
    %361 = math.exp %360 : vector<8x128xf32>
    %cst_159 = arith.constant 1.000000e+00 : f32
    %362 = vector.broadcast %cst_159 : f32 to vector<8x128xf32>
    %363 = arith.addf %362, %361 : vector<8x128xf32>
    %364 = arith.divf %362, %363 : vector<8x128xf32>
    %365 = arith.mulf %359, %364 : vector<8x128xf32>
    %366 = vector.extract_strided_slice %358 {offsets = [0, 128], sizes = [8, 128], strides = [1, 1]} : vector<8x256xf32> to vector<8x128xf32>
    %c2_160 = arith.constant 2 : index
    %c0_161 = arith.constant 0 : index
    %c0_162 = arith.constant 0 : index
    %367 = vector.load %arg9[%c2_160, %c0_161, %c0_162] : memref<4x4x128xf32, #tpu.memory_space<vmem>>, vector<1x4x128xf32>
    %368 = vector.shape_cast %367 : vector<1x4x128xf32> to vector<4x128xf32>
    %369 = vector.extract_strided_slice %368 {offsets = [3, 0], sizes = [1, 128], strides = [1, 1]} : vector<4x128xf32> to vector<1x128xf32>
    %370 = vector.broadcast %369 : vector<1x128xf32> to vector<8x128xf32>
    %371 = arith.mulf %365, %370 : vector<8x128xf32>
    %c2_163 = arith.constant 2 : index
    %c0_164 = arith.constant 0 : index
    %c0_165 = arith.constant 0 : index
    %372 = vector.load %arg10[%c2_163, %c0_164, %c0_165] : memref<4x1x128xf32, #tpu.memory_space<vmem>>, vector<1x1x128xf32>
    %373 = vector.shape_cast %372 : vector<1x1x128xf32> to vector<1x128xf32>
    %374 = vector.broadcast %373 : vector<1x128xf32> to vector<8x128xf32>
    %375 = arith.addf %371, %374 : vector<8x128xf32>
    %c1_i32_166 = arith.constant 1 : i32
    %376 = tpu.dynamic_rotate %365 by %c1_i32_166 dim 0 : vector<8x128xf32>, i32 -> vector<8x128xf32>
    %c1_i32_167 = arith.constant 1 : i32
    %377 = vector.broadcast %c1_i32_167 : i32 to vector<8x128xi32>
    %378 = arith.cmpi sge, %1, %377 : vector<8x128xi32>
    %cst_168 = arith.constant 0.000000e+00 : f32
    %379 = vector.broadcast %cst_168 : f32 to vector<8x128xf32>
    %380 = arith.select %378, %376, %379 : vector<8x128xi1>, vector<8x128xf32>
    %381 = vector.extract_strided_slice %368 {offsets = [2, 0], sizes = [1, 128], strides = [1, 1]} : vector<4x128xf32> to vector<1x128xf32>
    %382 = vector.broadcast %381 : vector<1x128xf32> to vector<8x128xf32>
    %383 = arith.mulf %380, %382 : vector<8x128xf32>
    %384 = arith.addf %375, %383 : vector<8x128xf32>
    %c2_i32_169 = arith.constant 2 : i32
    %385 = tpu.dynamic_rotate %365 by %c2_i32_169 dim 0 : vector<8x128xf32>, i32 -> vector<8x128xf32>
    %c2_i32_170 = arith.constant 2 : i32
    %386 = vector.broadcast %c2_i32_170 : i32 to vector<8x128xi32>
    %387 = arith.cmpi sge, %1, %386 : vector<8x128xi32>
    %cst_171 = arith.constant 0.000000e+00 : f32
    %388 = vector.broadcast %cst_171 : f32 to vector<8x128xf32>
    %389 = arith.select %387, %385, %388 : vector<8x128xi1>, vector<8x128xf32>
    %390 = vector.extract_strided_slice %368 {offsets = [1, 0], sizes = [1, 128], strides = [1, 1]} : vector<4x128xf32> to vector<1x128xf32>
    %391 = vector.broadcast %390 : vector<1x128xf32> to vector<8x128xf32>
    %392 = arith.mulf %389, %391 : vector<8x128xf32>
    %393 = arith.addf %384, %392 : vector<8x128xf32>
    %c3_i32_172 = arith.constant 3 : i32
    %394 = tpu.dynamic_rotate %365 by %c3_i32_172 dim 0 : vector<8x128xf32>, i32 -> vector<8x128xf32>
    %c3_i32_173 = arith.constant 3 : i32
    %395 = vector.broadcast %c3_i32_173 : i32 to vector<8x128xi32>
    %396 = arith.cmpi sge, %1, %395 : vector<8x128xi32>
    %cst_174 = arith.constant 0.000000e+00 : f32
    %397 = vector.broadcast %cst_174 : f32 to vector<8x128xf32>
    %398 = arith.select %396, %394, %397 : vector<8x128xi1>, vector<8x128xf32>
    %399 = vector.extract_strided_slice %368 {offsets = [0, 0], sizes = [1, 128], strides = [1, 1]} : vector<4x128xf32> to vector<1x128xf32>
    %400 = vector.broadcast %399 : vector<1x128xf32> to vector<8x128xf32>
    %401 = arith.mulf %398, %400 : vector<8x128xf32>
    %402 = arith.addf %393, %401 : vector<8x128xf32>
    %403 = arith.negf %402 : vector<8x128xf32>
    %404 = math.exp %403 : vector<8x128xf32>
    %cst_175 = arith.constant 1.000000e+00 : f32
    %405 = vector.broadcast %cst_175 : f32 to vector<8x128xf32>
    %406 = arith.addf %405, %404 : vector<8x128xf32>
    %407 = arith.divf %405, %406 : vector<8x128xf32>
    %408 = arith.mulf %402, %407 : vector<8x128xf32>
    %c2_176 = arith.constant 2 : index
    %c0_177 = arith.constant 0 : index
    %c0_178 = arith.constant 0 : index
    %409 = vector.load %arg11[%c2_176, %c0_177, %c0_178] : memref<4x128x128xbf16, #tpu.memory_space<vmem>>, vector<1x128x128xbf16>
    %410 = vector.shape_cast %409 : vector<1x128x128xbf16> to vector<128x128xbf16>
    %411 = arith.truncf %408 : vector<8x128xf32> to vector<8x128xbf16>
    %cst_179 = arith.constant dense<0.000000e+00> : vector<8x128xf32>
    %412 = tpu.matmul %411, %410, %cst_179 {dimension_numbers = #tpu.dot_dimension_numbers<[1], [0], [0], [1], [0, 0, 1, 1], [], []>} : vector<8x128xbf16>, vector<128x128xbf16>, vector<8x128xf32> -> vector<8x128xf32>
    %c2_180 = arith.constant 2 : index
    %c0_181 = arith.constant 0 : index
    %c0_182 = arith.constant 0 : index
    %413 = vector.load %arg12[%c2_180, %c0_181, %c0_182] : memref<4x1x128xf32, #tpu.memory_space<vmem>>, vector<1x1x128xf32>
    %414 = vector.shape_cast %413 : vector<1x1x128xf32> to vector<1x128xf32>
    %415 = vector.broadcast %414 : vector<1x128xf32> to vector<8x128xf32>
    %416 = arith.addf %412, %415 : vector<8x128xf32>
    %cst_183 = arith.constant 0.000000e+00 : f32
    %417 = vector.broadcast %cst_183 : f32 to vector<8x128xf32>
    %418 = arith.maximumf %416, %417 : vector<8x128xf32>
    %419 = vector.broadcast %cst_183 : f32 to vector<8x128xf32>
    %420 = arith.subf %416, %419 : vector<8x128xf32>
    %421 = arith.cmpf one, %420, %420 : vector<8x128xf32>
    %422 = vector.broadcast %cst_183 : f32 to vector<8x128xf32>
    %423 = arith.addf %416, %422 : vector<8x128xf32>
    %424 = math.absf %420 : vector<8x128xf32>
    %cst_184 = arith.constant 0.000000e+00 : f32
    %425 = vector.broadcast %cst_184 : f32 to vector<8x128xf32>
    %426 = arith.subf %425, %424 : vector<8x128xf32>
    %427 = math.exp %426 : vector<8x128xf32>
    %428 = math.log1p %427 : vector<8x128xf32>
    %429 = arith.addf %418, %428 : vector<8x128xf32>
    %430 = arith.select %421, %423, %429 : vector<8x128xi1>, vector<8x128xf32>
    %431 = arith.negf %430 : vector<8x128xf32>
    %432 = math.exp %431 : vector<8x128xf32>
    %cst_185 = arith.constant 1.000000e+00 : f32
    %433 = vector.broadcast %cst_185 : f32 to vector<8x128xf32>
    %434 = arith.addf %433, %432 : vector<8x128xf32>
    %435 = arith.divf %433, %434 : vector<8x128xf32>
    %c0_i32_186 = arith.constant 0 : i32
    %436 = vector.broadcast %c0_i32_186 : i32 to vector<8x128xi32>
    %437 = arith.cmpi eq, %1, %436 : vector<8x128xi32>
    %cst_187 = arith.constant 1.000000e+00 : f32
    %438 = vector.broadcast %cst_187 : f32 to vector<8x128xf32>
    %439 = arith.subf %438, %435 : vector<8x128xf32>
    %cst_188 = arith.constant 0.000000e+00 : f32
    %440 = vector.broadcast %cst_188 : f32 to vector<8x128xf32>
    %441 = arith.select %437, %440, %439 : vector<8x128xi1>, vector<8x128xf32>
    %442 = arith.mulf %435, %408 : vector<8x128xf32>
    %443 = arith.select %437, %408, %442 : vector<8x128xi1>, vector<8x128xf32>
    %c1_i32_189 = arith.constant 1 : i32
    %444 = vector.broadcast %c1_i32_189 : i32 to vector<8x128xi32>
    %445 = arith.cmpi sge, %1, %444 : vector<8x128xi32>
    %c1_i32_190 = arith.constant 1 : i32
    %446 = tpu.dynamic_rotate %441 by %c1_i32_190 dim 0 : vector<8x128xf32>, i32 -> vector<8x128xf32>
    %cst_191 = arith.constant 1.000000e+00 : f32
    %447 = vector.broadcast %cst_191 : f32 to vector<8x128xf32>
    %448 = arith.select %445, %446, %447 : vector<8x128xi1>, vector<8x128xf32>
    %c1_i32_192 = arith.constant 1 : i32
    %449 = vector.broadcast %c1_i32_192 : i32 to vector<8x128xi32>
    %450 = arith.cmpi sge, %1, %449 : vector<8x128xi32>
    %c1_i32_193 = arith.constant 1 : i32
    %451 = tpu.dynamic_rotate %443 by %c1_i32_193 dim 0 : vector<8x128xf32>, i32 -> vector<8x128xf32>
    %cst_194 = arith.constant 0.000000e+00 : f32
    %452 = vector.broadcast %cst_194 : f32 to vector<8x128xf32>
    %453 = arith.select %450, %451, %452 : vector<8x128xi1>, vector<8x128xf32>
    %454 = arith.mulf %441, %453 : vector<8x128xf32>
    %455 = arith.addf %454, %443 : vector<8x128xf32>
    %456 = arith.mulf %441, %448 : vector<8x128xf32>
    %c2_i32_195 = arith.constant 2 : i32
    %457 = vector.broadcast %c2_i32_195 : i32 to vector<8x128xi32>
    %458 = arith.cmpi sge, %1, %457 : vector<8x128xi32>
    %c2_i32_196 = arith.constant 2 : i32
    %459 = tpu.dynamic_rotate %456 by %c2_i32_196 dim 0 : vector<8x128xf32>, i32 -> vector<8x128xf32>
    %cst_197 = arith.constant 1.000000e+00 : f32
    %460 = vector.broadcast %cst_197 : f32 to vector<8x128xf32>
    %461 = arith.select %458, %459, %460 : vector<8x128xi1>, vector<8x128xf32>
    %c2_i32_198 = arith.constant 2 : i32
    %462 = vector.broadcast %c2_i32_198 : i32 to vector<8x128xi32>
    %463 = arith.cmpi sge, %1, %462 : vector<8x128xi32>
    %c2_i32_199 = arith.constant 2 : i32
    %464 = tpu.dynamic_rotate %455 by %c2_i32_199 dim 0 : vector<8x128xf32>, i32 -> vector<8x128xf32>
    %cst_200 = arith.constant 0.000000e+00 : f32
    %465 = vector.broadcast %cst_200 : f32 to vector<8x128xf32>
    %466 = arith.select %463, %464, %465 : vector<8x128xi1>, vector<8x128xf32>
    %467 = arith.mulf %456, %466 : vector<8x128xf32>
    %468 = arith.addf %467, %455 : vector<8x128xf32>
    %469 = arith.mulf %456, %461 : vector<8x128xf32>
    %c4_i32_201 = arith.constant 4 : i32
    %470 = vector.broadcast %c4_i32_201 : i32 to vector<8x128xi32>
    %471 = arith.cmpi sge, %1, %470 : vector<8x128xi32>
    %c4_i32_202 = arith.constant 4 : i32
    %472 = tpu.dynamic_rotate %468 by %c4_i32_202 dim 0 : vector<8x128xf32>, i32 -> vector<8x128xf32>
    %cst_203 = arith.constant 0.000000e+00 : f32
    %473 = vector.broadcast %cst_203 : f32 to vector<8x128xf32>
    %474 = arith.select %471, %472, %473 : vector<8x128xi1>, vector<8x128xf32>
    %475 = arith.mulf %469, %474 : vector<8x128xf32>
    %476 = arith.addf %475, %468 : vector<8x128xf32>
    %c2_204 = arith.constant 2 : index
    %c0_205 = arith.constant 0 : index
    %c0_206 = arith.constant 0 : index
    %477 = vector.load %arg13[%c2_204, %c0_205, %c0_206] : memref<4x1x128xf32, #tpu.memory_space<vmem>>, vector<1x1x128xf32>
    %478 = vector.shape_cast %477 : vector<1x1x128xf32> to vector<1x128xf32>
    %479 = vector.broadcast %478 : vector<1x128xf32> to vector<8x128xf32>
    %480 = arith.mulf %408, %479 : vector<8x128xf32>
    %481 = arith.addf %476, %480 : vector<8x128xf32>
    %482 = arith.negf %366 : vector<8x128xf32>
    %483 = math.exp %482 : vector<8x128xf32>
    %cst_207 = arith.constant 1.000000e+00 : f32
    %484 = vector.broadcast %cst_207 : f32 to vector<8x128xf32>
    %485 = arith.addf %484, %483 : vector<8x128xf32>
    %486 = arith.divf %484, %485 : vector<8x128xf32>
    %487 = arith.mulf %366, %486 : vector<8x128xf32>
    %488 = arith.mulf %481, %487 : vector<8x128xf32>
    %c2_208 = arith.constant 2 : index
    %c0_209 = arith.constant 0 : index
    %c0_210 = arith.constant 0 : index
    %489 = vector.load %arg14[%c2_208, %c0_209, %c0_210] : memref<4x128x64xbf16, #tpu.memory_space<vmem>>, vector<1x128x64xbf16>
    %490 = vector.shape_cast %489 : vector<1x128x64xbf16> to vector<128x64xbf16>
    %491 = arith.truncf %488 : vector<8x128xf32> to vector<8x128xbf16>
    %cst_211 = arith.constant dense<0.000000e+00> : vector<8x64xf32>
    %492 = tpu.matmul %491, %490, %cst_211 {dimension_numbers = #tpu.dot_dimension_numbers<[1], [0], [0], [1], [0, 0, 1, 1], [], []>} : vector<8x128xbf16>, vector<128x64xbf16>, vector<8x64xf32> -> vector<8x64xf32>
    %c2_212 = arith.constant 2 : index
    %c0_213 = arith.constant 0 : index
    %c0_214 = arith.constant 0 : index
    %493 = vector.load %arg15[%c2_212, %c0_213, %c0_214] : memref<4x1x64xf32, #tpu.memory_space<vmem>>, vector<1x1x64xf32>
    %494 = vector.shape_cast %493 : vector<1x1x64xf32> to vector<1x64xf32>
    %495 = vector.broadcast %494 : vector<1x64xf32> to vector<8x64xf32>
    %496 = arith.addf %492, %495 : vector<8x64xf32>
    %497 = arith.addf %496, %350 : vector<8x64xf32>
    %c2_215 = arith.constant 2 : index
    %c0_216 = arith.constant 0 : index
    %c0_217 = arith.constant 0 : index
    %498 = vector.load %arg16[%c2_215, %c0_216, %c0_217] : memref<4x1x64xf32, #tpu.memory_space<vmem>>, vector<1x1x64xf32>
    %499 = vector.shape_cast %498 : vector<1x1x64xf32> to vector<1x64xf32>
    %c2_218 = arith.constant 2 : index
    %c0_219 = arith.constant 0 : index
    %c0_220 = arith.constant 0 : index
    %500 = vector.load %arg17[%c2_218, %c0_219, %c0_220] : memref<4x1x64xf32, #tpu.memory_space<vmem>>, vector<1x1x64xf32>
    %501 = vector.shape_cast %500 : vector<1x1x64xf32> to vector<1x64xf32>
    %cst_221 = arith.constant dense<0.000000e+00> : vector<8x64xf32>
    %502 = tpu.matmul %497, %0, %cst_221 {dimension_numbers = #tpu.dot_dimension_numbers<[1], [0], [0], [1], [0, 0, 1, 1], [], []>} : vector<8x64xf32>, vector<64x64xf32>, vector<8x64xf32> -> vector<8x64xf32>
    %503 = arith.subf %497, %502 : vector<8x64xf32>
    %504 = arith.mulf %503, %503 : vector<8x64xf32>
    %cst_222 = arith.constant dense<0.000000e+00> : vector<8x64xf32>
    %505 = tpu.matmul %504, %0, %cst_222 {dimension_numbers = #tpu.dot_dimension_numbers<[1], [0], [0], [1], [0, 0, 1, 1], [], []>} : vector<8x64xf32>, vector<64x64xf32>, vector<8x64xf32> -> vector<8x64xf32>
    %cst_223 = arith.constant 9.99999974E-6 : f32
    %506 = vector.broadcast %cst_223 : f32 to vector<8x64xf32>
    %507 = arith.addf %505, %506 : vector<8x64xf32>
    %508 = math.rsqrt %507 : vector<8x64xf32>
    %509 = arith.mulf %503, %508 : vector<8x64xf32>
    %510 = vector.broadcast %499 : vector<1x64xf32> to vector<8x64xf32>
    %511 = arith.mulf %509, %510 : vector<8x64xf32>
    %512 = vector.broadcast %501 : vector<1x64xf32> to vector<8x64xf32>
    %513 = arith.addf %511, %512 : vector<8x64xf32>
    %c3 = arith.constant 3 : index
    %c0_224 = arith.constant 0 : index
    %c0_225 = arith.constant 0 : index
    %514 = vector.load %arg7[%c3, %c0_224, %c0_225] : memref<4x64x256xbf16, #tpu.memory_space<vmem>>, vector<1x64x256xbf16>
    %515 = vector.shape_cast %514 : vector<1x64x256xbf16> to vector<64x256xbf16>
    %516 = arith.truncf %513 : vector<8x64xf32> to vector<8x64xbf16>
    %cst_226 = arith.constant dense<0.000000e+00> : vector<8x256xf32>
    %517 = tpu.matmul %516, %515, %cst_226 {dimension_numbers = #tpu.dot_dimension_numbers<[1], [0], [0], [1], [0, 0, 1, 1], [], []>} : vector<8x64xbf16>, vector<64x256xbf16>, vector<8x256xf32> -> vector<8x256xf32>
    %c3_227 = arith.constant 3 : index
    %c0_228 = arith.constant 0 : index
    %c0_229 = arith.constant 0 : index
    %518 = vector.load %arg8[%c3_227, %c0_228, %c0_229] : memref<4x1x256xf32, #tpu.memory_space<vmem>>, vector<1x1x256xf32>
    %519 = vector.shape_cast %518 : vector<1x1x256xf32> to vector<1x256xf32>
    %520 = vector.broadcast %519 : vector<1x256xf32> to vector<8x256xf32>
    %521 = arith.addf %517, %520 : vector<8x256xf32>
    %522 = vector.extract_strided_slice %521 {offsets = [0, 0], sizes = [8, 128], strides = [1, 1]} : vector<8x256xf32> to vector<8x128xf32>
    %523 = arith.negf %522 : vector<8x128xf32>
    %524 = math.exp %523 : vector<8x128xf32>
    %cst_230 = arith.constant 1.000000e+00 : f32
    %525 = vector.broadcast %cst_230 : f32 to vector<8x128xf32>
    %526 = arith.addf %525, %524 : vector<8x128xf32>
    %527 = arith.divf %525, %526 : vector<8x128xf32>
    %528 = arith.mulf %522, %527 : vector<8x128xf32>
    %529 = vector.extract_strided_slice %521 {offsets = [0, 128], sizes = [8, 128], strides = [1, 1]} : vector<8x256xf32> to vector<8x128xf32>
    %c3_231 = arith.constant 3 : index
    %c0_232 = arith.constant 0 : index
    %c0_233 = arith.constant 0 : index
    %530 = vector.load %arg9[%c3_231, %c0_232, %c0_233] : memref<4x4x128xf32, #tpu.memory_space<vmem>>, vector<1x4x128xf32>
    %531 = vector.shape_cast %530 : vector<1x4x128xf32> to vector<4x128xf32>
    %532 = vector.extract_strided_slice %531 {offsets = [3, 0], sizes = [1, 128], strides = [1, 1]} : vector<4x128xf32> to vector<1x128xf32>
    %533 = vector.broadcast %532 : vector<1x128xf32> to vector<8x128xf32>
    %534 = arith.mulf %528, %533 : vector<8x128xf32>
    %c3_234 = arith.constant 3 : index
    %c0_235 = arith.constant 0 : index
    %c0_236 = arith.constant 0 : index
    %535 = vector.load %arg10[%c3_234, %c0_235, %c0_236] : memref<4x1x128xf32, #tpu.memory_space<vmem>>, vector<1x1x128xf32>
    %536 = vector.shape_cast %535 : vector<1x1x128xf32> to vector<1x128xf32>
    %537 = vector.broadcast %536 : vector<1x128xf32> to vector<8x128xf32>
    %538 = arith.addf %534, %537 : vector<8x128xf32>
    %c1_i32_237 = arith.constant 1 : i32
    %539 = tpu.dynamic_rotate %528 by %c1_i32_237 dim 0 : vector<8x128xf32>, i32 -> vector<8x128xf32>
    %c1_i32_238 = arith.constant 1 : i32
    %540 = vector.broadcast %c1_i32_238 : i32 to vector<8x128xi32>
    %541 = arith.cmpi sge, %1, %540 : vector<8x128xi32>
    %cst_239 = arith.constant 0.000000e+00 : f32
    %542 = vector.broadcast %cst_239 : f32 to vector<8x128xf32>
    %543 = arith.select %541, %539, %542 : vector<8x128xi1>, vector<8x128xf32>
    %544 = vector.extract_strided_slice %531 {offsets = [2, 0], sizes = [1, 128], strides = [1, 1]} : vector<4x128xf32> to vector<1x128xf32>
    %545 = vector.broadcast %544 : vector<1x128xf32> to vector<8x128xf32>
    %546 = arith.mulf %543, %545 : vector<8x128xf32>
    %547 = arith.addf %538, %546 : vector<8x128xf32>
    %c2_i32_240 = arith.constant 2 : i32
    %548 = tpu.dynamic_rotate %528 by %c2_i32_240 dim 0 : vector<8x128xf32>, i32 -> vector<8x128xf32>
    %c2_i32_241 = arith.constant 2 : i32
    %549 = vector.broadcast %c2_i32_241 : i32 to vector<8x128xi32>
    %550 = arith.cmpi sge, %1, %549 : vector<8x128xi32>
    %cst_242 = arith.constant 0.000000e+00 : f32
    %551 = vector.broadcast %cst_242 : f32 to vector<8x128xf32>
    %552 = arith.select %550, %548, %551 : vector<8x128xi1>, vector<8x128xf32>
    %553 = vector.extract_strided_slice %531 {offsets = [1, 0], sizes = [1, 128], strides = [1, 1]} : vector<4x128xf32> to vector<1x128xf32>
    %554 = vector.broadcast %553 : vector<1x128xf32> to vector<8x128xf32>
    %555 = arith.mulf %552, %554 : vector<8x128xf32>
    %556 = arith.addf %547, %555 : vector<8x128xf32>
    %c3_i32_243 = arith.constant 3 : i32
    %557 = tpu.dynamic_rotate %528 by %c3_i32_243 dim 0 : vector<8x128xf32>, i32 -> vector<8x128xf32>
    %c3_i32_244 = arith.constant 3 : i32
    %558 = vector.broadcast %c3_i32_244 : i32 to vector<8x128xi32>
    %559 = arith.cmpi sge, %1, %558 : vector<8x128xi32>
    %cst_245 = arith.constant 0.000000e+00 : f32
    %560 = vector.broadcast %cst_245 : f32 to vector<8x128xf32>
    %561 = arith.select %559, %557, %560 : vector<8x128xi1>, vector<8x128xf32>
    %562 = vector.extract_strided_slice %531 {offsets = [0, 0], sizes = [1, 128], strides = [1, 1]} : vector<4x128xf32> to vector<1x128xf32>
    %563 = vector.broadcast %562 : vector<1x128xf32> to vector<8x128xf32>
    %564 = arith.mulf %561, %563 : vector<8x128xf32>
    %565 = arith.addf %556, %564 : vector<8x128xf32>
    %566 = arith.negf %565 : vector<8x128xf32>
    %567 = math.exp %566 : vector<8x128xf32>
    %cst_246 = arith.constant 1.000000e+00 : f32
    %568 = vector.broadcast %cst_246 : f32 to vector<8x128xf32>
    %569 = arith.addf %568, %567 : vector<8x128xf32>
    %570 = arith.divf %568, %569 : vector<8x128xf32>
    %571 = arith.mulf %565, %570 : vector<8x128xf32>
    %c3_247 = arith.constant 3 : index
    %c0_248 = arith.constant 0 : index
    %c0_249 = arith.constant 0 : index
    %572 = vector.load %arg11[%c3_247, %c0_248, %c0_249] : memref<4x128x128xbf16, #tpu.memory_space<vmem>>, vector<1x128x128xbf16>
    %573 = vector.shape_cast %572 : vector<1x128x128xbf16> to vector<128x128xbf16>
    %574 = arith.truncf %571 : vector<8x128xf32> to vector<8x128xbf16>
    %cst_250 = arith.constant dense<0.000000e+00> : vector<8x128xf32>
    %575 = tpu.matmul %574, %573, %cst_250 {dimension_numbers = #tpu.dot_dimension_numbers<[1], [0], [0], [1], [0, 0, 1, 1], [], []>} : vector<8x128xbf16>, vector<128x128xbf16>, vector<8x128xf32> -> vector<8x128xf32>
    %c3_251 = arith.constant 3 : index
    %c0_252 = arith.constant 0 : index
    %c0_253 = arith.constant 0 : index
    %576 = vector.load %arg12[%c3_251, %c0_252, %c0_253] : memref<4x1x128xf32, #tpu.memory_space<vmem>>, vector<1x1x128xf32>
    %577 = vector.shape_cast %576 : vector<1x1x128xf32> to vector<1x128xf32>
    %578 = vector.broadcast %577 : vector<1x128xf32> to vector<8x128xf32>
    %579 = arith.addf %575, %578 : vector<8x128xf32>
    %cst_254 = arith.constant 0.000000e+00 : f32
    %580 = vector.broadcast %cst_254 : f32 to vector<8x128xf32>
    %581 = arith.maximumf %579, %580 : vector<8x128xf32>
    %582 = vector.broadcast %cst_254 : f32 to vector<8x128xf32>
    %583 = arith.subf %579, %582 : vector<8x128xf32>
    %584 = arith.cmpf one, %583, %583 : vector<8x128xf32>
    %585 = vector.broadcast %cst_254 : f32 to vector<8x128xf32>
    %586 = arith.addf %579, %585 : vector<8x128xf32>
    %587 = math.absf %583 : vector<8x128xf32>
    %cst_255 = arith.constant 0.000000e+00 : f32
    %588 = vector.broadcast %cst_255 : f32 to vector<8x128xf32>
    %589 = arith.subf %588, %587 : vector<8x128xf32>
    %590 = math.exp %589 : vector<8x128xf32>
    %591 = math.log1p %590 : vector<8x128xf32>
    %592 = arith.addf %581, %591 : vector<8x128xf32>
    %593 = arith.select %584, %586, %592 : vector<8x128xi1>, vector<8x128xf32>
    %594 = arith.negf %593 : vector<8x128xf32>
    %595 = math.exp %594 : vector<8x128xf32>
    %cst_256 = arith.constant 1.000000e+00 : f32
    %596 = vector.broadcast %cst_256 : f32 to vector<8x128xf32>
    %597 = arith.addf %596, %595 : vector<8x128xf32>
    %598 = arith.divf %596, %597 : vector<8x128xf32>
    %c0_i32_257 = arith.constant 0 : i32
    %599 = vector.broadcast %c0_i32_257 : i32 to vector<8x128xi32>
    %600 = arith.cmpi eq, %1, %599 : vector<8x128xi32>
    %cst_258 = arith.constant 1.000000e+00 : f32
    %601 = vector.broadcast %cst_258 : f32 to vector<8x128xf32>
    %602 = arith.subf %601, %598 : vector<8x128xf32>
    %cst_259 = arith.constant 0.000000e+00 : f32
    %603 = vector.broadcast %cst_259 : f32 to vector<8x128xf32>
    %604 = arith.select %600, %603, %602 : vector<8x128xi1>, vector<8x128xf32>
    %605 = arith.mulf %598, %571 : vector<8x128xf32>
    %606 = arith.select %600, %571, %605 : vector<8x128xi1>, vector<8x128xf32>
    %c1_i32_260 = arith.constant 1 : i32
    %607 = vector.broadcast %c1_i32_260 : i32 to vector<8x128xi32>
    %608 = arith.cmpi sge, %1, %607 : vector<8x128xi32>
    %c1_i32_261 = arith.constant 1 : i32
    %609 = tpu.dynamic_rotate %604 by %c1_i32_261 dim 0 : vector<8x128xf32>, i32 -> vector<8x128xf32>
    %cst_262 = arith.constant 1.000000e+00 : f32
    %610 = vector.broadcast %cst_262 : f32 to vector<8x128xf32>
    %611 = arith.select %608, %609, %610 : vector<8x128xi1>, vector<8x128xf32>
    %c1_i32_263 = arith.constant 1 : i32
    %612 = vector.broadcast %c1_i32_263 : i32 to vector<8x128xi32>
    %613 = arith.cmpi sge, %1, %612 : vector<8x128xi32>
    %c1_i32_264 = arith.constant 1 : i32
    %614 = tpu.dynamic_rotate %606 by %c1_i32_264 dim 0 : vector<8x128xf32>, i32 -> vector<8x128xf32>
    %cst_265 = arith.constant 0.000000e+00 : f32
    %615 = vector.broadcast %cst_265 : f32 to vector<8x128xf32>
    %616 = arith.select %613, %614, %615 : vector<8x128xi1>, vector<8x128xf32>
    %617 = arith.mulf %604, %616 : vector<8x128xf32>
    %618 = arith.addf %617, %606 : vector<8x128xf32>
    %619 = arith.mulf %604, %611 : vector<8x128xf32>
    %c2_i32_266 = arith.constant 2 : i32
    %620 = vector.broadcast %c2_i32_266 : i32 to vector<8x128xi32>
    %621 = arith.cmpi sge, %1, %620 : vector<8x128xi32>
    %c2_i32_267 = arith.constant 2 : i32
    %622 = tpu.dynamic_rotate %619 by %c2_i32_267 dim 0 : vector<8x128xf32>, i32 -> vector<8x128xf32>
    %cst_268 = arith.constant 1.000000e+00 : f32
    %623 = vector.broadcast %cst_268 : f32 to vector<8x128xf32>
    %624 = arith.select %621, %622, %623 : vector<8x128xi1>, vector<8x128xf32>
    %c2_i32_269 = arith.constant 2 : i32
    %625 = vector.broadcast %c2_i32_269 : i32 to vector<8x128xi32>
    %626 = arith.cmpi sge, %1, %625 : vector<8x128xi32>
    %c2_i32_270 = arith.constant 2 : i32
    %627 = tpu.dynamic_rotate %618 by %c2_i32_270 dim 0 : vector<8x128xf32>, i32 -> vector<8x128xf32>
    %cst_271 = arith.constant 0.000000e+00 : f32
    %628 = vector.broadcast %cst_271 : f32 to vector<8x128xf32>
    %629 = arith.select %626, %627, %628 : vector<8x128xi1>, vector<8x128xf32>
    %630 = arith.mulf %619, %629 : vector<8x128xf32>
    %631 = arith.addf %630, %618 : vector<8x128xf32>
    %632 = arith.mulf %619, %624 : vector<8x128xf32>
    %c4_i32_272 = arith.constant 4 : i32
    %633 = vector.broadcast %c4_i32_272 : i32 to vector<8x128xi32>
    %634 = arith.cmpi sge, %1, %633 : vector<8x128xi32>
    %c4_i32_273 = arith.constant 4 : i32
    %635 = tpu.dynamic_rotate %631 by %c4_i32_273 dim 0 : vector<8x128xf32>, i32 -> vector<8x128xf32>
    %cst_274 = arith.constant 0.000000e+00 : f32
    %636 = vector.broadcast %cst_274 : f32 to vector<8x128xf32>
    %637 = arith.select %634, %635, %636 : vector<8x128xi1>, vector<8x128xf32>
    %638 = arith.mulf %632, %637 : vector<8x128xf32>
    %639 = arith.addf %638, %631 : vector<8x128xf32>
    %c3_275 = arith.constant 3 : index
    %c0_276 = arith.constant 0 : index
    %c0_277 = arith.constant 0 : index
    %640 = vector.load %arg13[%c3_275, %c0_276, %c0_277] : memref<4x1x128xf32, #tpu.memory_space<vmem>>, vector<1x1x128xf32>
    %641 = vector.shape_cast %640 : vector<1x1x128xf32> to vector<1x128xf32>
    %642 = vector.broadcast %641 : vector<1x128xf32> to vector<8x128xf32>
    %643 = arith.mulf %571, %642 : vector<8x128xf32>
    %644 = arith.addf %639, %643 : vector<8x128xf32>
    %645 = arith.negf %529 : vector<8x128xf32>
    %646 = math.exp %645 : vector<8x128xf32>
    %cst_278 = arith.constant 1.000000e+00 : f32
    %647 = vector.broadcast %cst_278 : f32 to vector<8x128xf32>
    %648 = arith.addf %647, %646 : vector<8x128xf32>
    %649 = arith.divf %647, %648 : vector<8x128xf32>
    %650 = arith.mulf %529, %649 : vector<8x128xf32>
    %651 = arith.mulf %644, %650 : vector<8x128xf32>
    %c3_279 = arith.constant 3 : index
    %c0_280 = arith.constant 0 : index
    %c0_281 = arith.constant 0 : index
    %652 = vector.load %arg14[%c3_279, %c0_280, %c0_281] : memref<4x128x64xbf16, #tpu.memory_space<vmem>>, vector<1x128x64xbf16>
    %653 = vector.shape_cast %652 : vector<1x128x64xbf16> to vector<128x64xbf16>
    %654 = arith.truncf %651 : vector<8x128xf32> to vector<8x128xbf16>
    %cst_282 = arith.constant dense<0.000000e+00> : vector<8x64xf32>
    %655 = tpu.matmul %654, %653, %cst_282 {dimension_numbers = #tpu.dot_dimension_numbers<[1], [0], [0], [1], [0, 0, 1, 1], [], []>} : vector<8x128xbf16>, vector<128x64xbf16>, vector<8x64xf32> -> vector<8x64xf32>
    %c3_283 = arith.constant 3 : index
    %c0_284 = arith.constant 0 : index
    %c0_285 = arith.constant 0 : index
    %656 = vector.load %arg15[%c3_283, %c0_284, %c0_285] : memref<4x1x64xf32, #tpu.memory_space<vmem>>, vector<1x1x64xf32>
    %657 = vector.shape_cast %656 : vector<1x1x64xf32> to vector<1x64xf32>
    %658 = vector.broadcast %657 : vector<1x64xf32> to vector<8x64xf32>
    %659 = arith.addf %655, %658 : vector<8x64xf32>
    %660 = arith.addf %659, %513 : vector<8x64xf32>
    %c3_286 = arith.constant 3 : index
    %c0_287 = arith.constant 0 : index
    %c0_288 = arith.constant 0 : index
    %661 = vector.load %arg16[%c3_286, %c0_287, %c0_288] : memref<4x1x64xf32, #tpu.memory_space<vmem>>, vector<1x1x64xf32>
    %662 = vector.shape_cast %661 : vector<1x1x64xf32> to vector<1x64xf32>
    %c3_289 = arith.constant 3 : index
    %c0_290 = arith.constant 0 : index
    %c0_291 = arith.constant 0 : index
    %663 = vector.load %arg17[%c3_289, %c0_290, %c0_291] : memref<4x1x64xf32, #tpu.memory_space<vmem>>, vector<1x1x64xf32>
    %664 = vector.shape_cast %663 : vector<1x1x64xf32> to vector<1x64xf32>
    %cst_292 = arith.constant dense<0.000000e+00> : vector<8x64xf32>
    %665 = tpu.matmul %660, %0, %cst_292 {dimension_numbers = #tpu.dot_dimension_numbers<[1], [0], [0], [1], [0, 0, 1, 1], [], []>} : vector<8x64xf32>, vector<64x64xf32>, vector<8x64xf32> -> vector<8x64xf32>
    %666 = arith.subf %660, %665 : vector<8x64xf32>
    %667 = arith.mulf %666, %666 : vector<8x64xf32>
    %cst_293 = arith.constant dense<0.000000e+00> : vector<8x64xf32>
    %668 = tpu.matmul %667, %0, %cst_293 {dimension_numbers = #tpu.dot_dimension_numbers<[1], [0], [0], [1], [0, 0, 1, 1], [], []>} : vector<8x64xf32>, vector<64x64xf32>, vector<8x64xf32> -> vector<8x64xf32>
    %cst_294 = arith.constant 9.99999974E-6 : f32
    %669 = vector.broadcast %cst_294 : f32 to vector<8x64xf32>
    %670 = arith.addf %668, %669 : vector<8x64xf32>
    %671 = math.rsqrt %670 : vector<8x64xf32>
    %672 = arith.mulf %666, %671 : vector<8x64xf32>
    %673 = vector.broadcast %662 : vector<1x64xf32> to vector<8x64xf32>
    %674 = arith.mulf %672, %673 : vector<8x64xf32>
    %675 = vector.broadcast %664 : vector<1x64xf32> to vector<8x64xf32>
    %676 = arith.addf %674, %675 : vector<8x64xf32>
    %677 = vector.extract_strided_slice %676 {offsets = [7, 0], sizes = [1, 64], strides = [1, 1]} : vector<8x64xf32> to vector<1x64xf32>
    %678 = vector.extract_strided_slice %677 {offsets = [0, 0], sizes = [1, 32], strides = [1, 1]} : vector<1x64xf32> to vector<1x32xf32>
    %679 = vector.extract_strided_slice %677 {offsets = [0, 32], sizes = [1, 32], strides = [1, 1]} : vector<1x64xf32> to vector<1x32xf32>
    %680 = tpu.concatenate %678, %679 in 0 : vector<1x32xf32>, vector<1x32xf32> -> vector<2x32xf32>
    %c0_295 = arith.constant 0 : index
    %c0_296 = arith.constant 0 : index
    %681 = vector.load %arg1[%c0_295, %c0_296] : memref<2x2xf32, #tpu.memory_space<vmem>>, vector<2x2xf32>
    %c0_297 = arith.constant 0 : index
    %c0_298 = arith.constant 0 : index
    %682 = vector.load %arg18[%c0_297, %c0_298] : memref<2x8xf32, #tpu.memory_space<vmem>>, vector<2x8xf32>
    %683 = vector.extract_strided_slice %681 {offsets = [0, 0], sizes = [2, 1], strides = [1, 1]} : vector<2x2xf32> to vector<2x1xf32>
    %684 = vector.extract_strided_slice %682 {offsets = [0, 0], sizes = [1, 8], strides = [1, 1]} : vector<2x8xf32> to vector<1x8xf32>
    %685 = vector.broadcast %683 : vector<2x1xf32> to vector<2x8xf32>
    %686 = vector.broadcast %684 : vector<1x8xf32> to vector<2x8xf32>
    %687 = arith.mulf %685, %686 : vector<2x8xf32>
    %688 = vector.extract_strided_slice %681 {offsets = [0, 1], sizes = [2, 1], strides = [1, 1]} : vector<2x2xf32> to vector<2x1xf32>
    %689 = vector.extract_strided_slice %682 {offsets = [1, 0], sizes = [1, 8], strides = [1, 1]} : vector<2x8xf32> to vector<1x8xf32>
    %690 = vector.broadcast %688 : vector<2x1xf32> to vector<2x8xf32>
    %691 = vector.broadcast %689 : vector<1x8xf32> to vector<2x8xf32>
    %692 = arith.mulf %690, %691 : vector<2x8xf32>
    %693 = arith.addf %687, %692 : vector<2x8xf32>
    %c0_299 = arith.constant 0 : index
    %c0_300 = arith.constant 0 : index
    %694 = vector.load %arg19[%c0_299, %c0_300] : memref<1x8xf32, #tpu.memory_space<vmem>>, vector<1x8xf32>
    %695 = vector.broadcast %694 : vector<1x8xf32> to vector<2x8xf32>
    %696 = arith.addf %693, %695 : vector<2x8xf32>
    %cst_301 = arith.constant 0.000000e+00 : f32
    %697 = vector.broadcast %cst_301 : f32 to vector<2x8xf32>
    %698 = arith.maximumf %696, %697 : vector<2x8xf32>
    %c0_302 = arith.constant 0 : index
    %c0_303 = arith.constant 0 : index
    %699 = vector.load %arg20[%c0_302, %c0_303] : memref<32x32xbf16, #tpu.memory_space<vmem>>, vector<32x32xbf16>
    %700 = arith.truncf %680 : vector<2x32xf32> to vector<2x32xbf16>
    %cst_304 = arith.constant dense<0.000000e+00> : vector<2x32xf32>
    %701 = tpu.matmul %700, %699, %cst_304 {dimension_numbers = #tpu.dot_dimension_numbers<[1], [0], [0], [1], [0, 0, 1, 1], [], []>} : vector<2x32xbf16>, vector<32x32xbf16>, vector<2x32xf32> -> vector<2x32xf32>
    %c0_305 = arith.constant 0 : index
    %c0_306 = arith.constant 0 : index
    %702 = vector.load %arg21[%c0_305, %c0_306] : memref<8x32xbf16, #tpu.memory_space<vmem>>, vector<8x32xbf16>
    %703 = arith.truncf %698 : vector<2x8xf32> to vector<2x8xbf16>
    %cst_307 = arith.constant dense<0.000000e+00> : vector<2x32xf32>
    %704 = tpu.matmul %703, %702, %cst_307 {dimension_numbers = #tpu.dot_dimension_numbers<[1], [0], [0], [1], [0, 0, 1, 1], [], []>} : vector<2x8xbf16>, vector<8x32xbf16>, vector<2x32xf32> -> vector<2x32xf32>
    %705 = arith.addf %701, %704 : vector<2x32xf32>
    %c0_308 = arith.constant 0 : index
    %c0_309 = arith.constant 0 : index
    %706 = vector.load %arg22[%c0_308, %c0_309] : memref<1x32xf32, #tpu.memory_space<vmem>>, vector<1x32xf32>
    %707 = vector.broadcast %706 : vector<1x32xf32> to vector<2x32xf32>
    %708 = arith.addf %705, %707 : vector<2x32xf32>
    %c0_310 = arith.constant 0 : index
    %c0_311 = arith.constant 0 : index
    %709 = vector.load %arg23[%c0_310, %c0_311] : memref<1x32xf32, #tpu.memory_space<vmem>>, vector<1x32xf32>
    %c0_312 = arith.constant 0 : index
    %c0_313 = arith.constant 0 : index
    %710 = vector.load %arg24[%c0_312, %c0_313] : memref<1x32xf32, #tpu.memory_space<vmem>>, vector<1x32xf32>
    %cst_314 = arith.constant dense<0.000000e+00> : vector<2xf32>
    %711 = vector.multi_reduction <add>, %708, %cst_314 [1] : vector<2x32xf32> to vector<2xf32>
    %712 = vector.shape_cast %711 : vector<2xf32> to vector<2x1xf32>
    %cst_315 = arith.constant 3.200000e+01 : f32
    %713 = vector.broadcast %cst_315 : f32 to vector<2x1xf32>
    %714 = arith.divf %712, %713 : vector<2x1xf32>
    %715 = vector.broadcast %714 : vector<2x1xf32> to vector<2x32xf32>
    %716 = arith.subf %708, %715 : vector<2x32xf32>
    %717 = arith.mulf %716, %716 : vector<2x32xf32>
    %cst_316 = arith.constant dense<0.000000e+00> : vector<2xf32>
    %718 = vector.multi_reduction <add>, %717, %cst_316 [1] : vector<2x32xf32> to vector<2xf32>
    %719 = vector.shape_cast %718 : vector<2xf32> to vector<2x1xf32>
    %cst_317 = arith.constant 3.200000e+01 : f32
    %720 = vector.broadcast %cst_317 : f32 to vector<2x1xf32>
    %721 = arith.divf %719, %720 : vector<2x1xf32>
    %722 = vector.broadcast %714 : vector<2x1xf32> to vector<2x32xf32>
    %723 = arith.subf %708, %722 : vector<2x32xf32>
    %cst_318 = arith.constant 9.99999974E-6 : f32
    %724 = vector.broadcast %cst_318 : f32 to vector<2x1xf32>
    %725 = arith.addf %721, %724 : vector<2x1xf32>
    %726 = math.rsqrt %725 : vector<2x1xf32>
    %727 = vector.broadcast %726 : vector<2x1xf32> to vector<2x32xf32>
    %728 = arith.mulf %723, %727 : vector<2x32xf32>
    %729 = vector.broadcast %709 : vector<1x32xf32> to vector<2x32xf32>
    %730 = arith.mulf %728, %729 : vector<2x32xf32>
    %731 = vector.broadcast %710 : vector<1x32xf32> to vector<2x32xf32>
    %732 = arith.addf %730, %731 : vector<2x32xf32>
    %cst_319 = arith.constant 0.000000e+00 : f32
    %733 = vector.broadcast %cst_319 : f32 to vector<2x32xf32>
    %734 = arith.maximumf %732, %733 : vector<2x32xf32>
    %c0_320 = arith.constant 0 : index
    %c0_321 = arith.constant 0 : index
    %735 = vector.load %arg25[%c0_320, %c0_321] : memref<32x32xbf16, #tpu.memory_space<vmem>>, vector<32x32xbf16>
    %736 = arith.truncf %734 : vector<2x32xf32> to vector<2x32xbf16>
    %cst_322 = arith.constant dense<0.000000e+00> : vector<2x32xf32>
    %737 = tpu.matmul %736, %735, %cst_322 {dimension_numbers = #tpu.dot_dimension_numbers<[1], [0], [0], [1], [0, 0, 1, 1], [], []>} : vector<2x32xbf16>, vector<32x32xbf16>, vector<2x32xf32> -> vector<2x32xf32>
    %c0_323 = arith.constant 0 : index
    %c0_324 = arith.constant 0 : index
    %738 = vector.load %arg26[%c0_323, %c0_324] : memref<1x32xf32, #tpu.memory_space<vmem>>, vector<1x32xf32>
    %739 = vector.broadcast %738 : vector<1x32xf32> to vector<2x32xf32>
    %740 = arith.addf %737, %739 : vector<2x32xf32>
    %c0_325 = arith.constant 0 : index
    %c0_326 = arith.constant 0 : index
    %741 = vector.load %arg27[%c0_325, %c0_326] : memref<1x32xf32, #tpu.memory_space<vmem>>, vector<1x32xf32>
    %c0_327 = arith.constant 0 : index
    %c0_328 = arith.constant 0 : index
    %742 = vector.load %arg28[%c0_327, %c0_328] : memref<1x32xf32, #tpu.memory_space<vmem>>, vector<1x32xf32>
    %cst_329 = arith.constant dense<0.000000e+00> : vector<2xf32>
    %743 = vector.multi_reduction <add>, %740, %cst_329 [1] : vector<2x32xf32> to vector<2xf32>
    %744 = vector.shape_cast %743 : vector<2xf32> to vector<2x1xf32>
    %cst_330 = arith.constant 3.200000e+01 : f32
    %745 = vector.broadcast %cst_330 : f32 to vector<2x1xf32>
    %746 = arith.divf %744, %745 : vector<2x1xf32>
    %747 = vector.broadcast %746 : vector<2x1xf32> to vector<2x32xf32>
    %748 = arith.subf %740, %747 : vector<2x32xf32>
    %749 = arith.mulf %748, %748 : vector<2x32xf32>
    %cst_331 = arith.constant dense<0.000000e+00> : vector<2xf32>
    %750 = vector.multi_reduction <add>, %749, %cst_331 [1] : vector<2x32xf32> to vector<2xf32>
    %751 = vector.shape_cast %750 : vector<2xf32> to vector<2x1xf32>
    %cst_332 = arith.constant 3.200000e+01 : f32
    %752 = vector.broadcast %cst_332 : f32 to vector<2x1xf32>
    %753 = arith.divf %751, %752 : vector<2x1xf32>
    %754 = vector.broadcast %746 : vector<2x1xf32> to vector<2x32xf32>
    %755 = arith.subf %740, %754 : vector<2x32xf32>
    %cst_333 = arith.constant 9.99999974E-6 : f32
    %756 = vector.broadcast %cst_333 : f32 to vector<2x1xf32>
    %757 = arith.addf %753, %756 : vector<2x1xf32>
    %758 = math.rsqrt %757 : vector<2x1xf32>
    %759 = vector.broadcast %758 : vector<2x1xf32> to vector<2x32xf32>
    %760 = arith.mulf %755, %759 : vector<2x32xf32>
    %761 = vector.broadcast %741 : vector<1x32xf32> to vector<2x32xf32>
    %762 = arith.mulf %760, %761 : vector<2x32xf32>
    %763 = vector.broadcast %742 : vector<1x32xf32> to vector<2x32xf32>
    %764 = arith.addf %762, %763 : vector<2x32xf32>
    %cst_334 = arith.constant 0.000000e+00 : f32
    %765 = vector.broadcast %cst_334 : f32 to vector<2x32xf32>
    %766 = arith.maximumf %764, %765 : vector<2x32xf32>
    %c0_335 = arith.constant 0 : index
    %c0_336 = arith.constant 0 : index
    %767 = vector.load %arg29[%c0_335, %c0_336] : memref<32x2xbf16, #tpu.memory_space<vmem>>, vector<32x2xbf16>
    %768 = arith.truncf %766 : vector<2x32xf32> to vector<2x32xbf16>
    %cst_337 = arith.constant dense<0.000000e+00> : vector<2x2xf32>
    %769 = tpu.matmul %768, %767, %cst_337 {dimension_numbers = #tpu.dot_dimension_numbers<[1], [0], [0], [1], [0, 0, 1, 1], [], []>} : vector<2x32xbf16>, vector<32x2xbf16>, vector<2x2xf32> -> vector<2x2xf32>
    %c0_338 = arith.constant 0 : index
    %c0_339 = arith.constant 0 : index
    %770 = vector.load %arg30[%c0_338, %c0_339] : memref<1x2xf32, #tpu.memory_space<vmem>>, vector<1x2xf32>
    %771 = vector.broadcast %770 : vector<1x2xf32> to vector<2x2xf32>
    %772 = arith.addf %769, %771 : vector<2x2xf32>
    %773 = vector.extract_strided_slice %772 {offsets = [0, 0], sizes = [2, 1], strides = [1, 1]} : vector<2x2xf32> to vector<2x1xf32>
    %774 = vector.extract_strided_slice %772 {offsets = [0, 1], sizes = [2, 1], strides = [1, 1]} : vector<2x2xf32> to vector<2x1xf32>
    %cst_340 = arith.constant -2.000000e+00 : f32
    %cst_341 = arith.constant 2.000000e+00 : f32
    %775 = vector.broadcast %cst_340 : f32 to vector<2x1xf32>
    %776 = arith.maximumf %775, %774 : vector<2x1xf32>
    %777 = vector.broadcast %cst_341 : f32 to vector<2x1xf32>
    %778 = arith.minimumf %777, %776 : vector<2x1xf32>
    %779 = tpu.concatenate %773, %778 in 1 : vector<2x1xf32>, vector<2x1xf32> -> vector<2x2xf32>
    %c0_342 = arith.constant 0 : index
    %c0_343 = arith.constant 0 : index
    %780 = vector.load %arg31[%c0_342, %c0_343] : memref<2x2xf32, #tpu.memory_space<vmem>>, vector<2x2xf32>
    tpu.vector_store %arg31[%c0_342, %c0_343], %779 {strides = array<i32>} : memref<2x2xf32, #tpu.memory_space<vmem>>, vector<2x2xf32>,
    return
  }
}

</mosaic_0001>

<llo_original>
// kernel: tpu_custom_call.1
$region0: #{tpu_custom_call.1}
  #allocation0 [shape = 'u32[]', space=smem, size = 0x4, offset = 0x4, fixed_abs, tag = 'smem constant byte address 0x4 - core index']
  #allocation1 [shape = 'u32[144,128]{1,0:T(1,128)}', space=vmem, size = 0x12000, scoped, tag = 'internal scratch']
  %s0 = inlined_call_operand.smem [shape: u32[32], index: -1, kind: input, shape index: {}]
  %s1 = sld [smem:[%s0]]
  %s2 = scalar_lea.smem %s0, 1
  %s3 = sld [smem:[%s2]]
  %s4 = scalar_lea.smem %s0, 2
  %s5 = sld [smem:[%s4]]
  %s6 = scalar_lea.smem %s0, 3
  %s7 = sld [smem:[%s6]]
  %s8 = scalar_lea.smem %s0, 4
  %s9 = sld [smem:[%s8]]
  %s10 = scalar_lea.smem %s0, 5
  %s11 = sld [smem:[%s10]]
  %s12 = scalar_lea.smem %s0, 6
  %s13 = sld [smem:[%s12]]
  %s14 = scalar_lea.smem %s0, 7
  %s15 = sld [smem:[%s14]]
  %s16 = scalar_lea.smem %s0, 8
  %s17 = sld [smem:[%s16]]
  %s18 = scalar_lea.smem %s0, 9
  %s19 = sld [smem:[%s18]]
  %s20 = scalar_lea.smem %s0, 10
  %s21 = sld [smem:[%s20]]
  %s22 = scalar_lea.smem %s0, 11
  %s23 = sld [smem:[%s22]]
  %s24 = scalar_lea.smem %s0, 12
  %s25 = sld [smem:[%s24]]
  %s26 = scalar_lea.smem %s0, 13
  %s27 = sld [smem:[%s26]]
  %s28 = scalar_lea.smem %s0, 14
  %s29 = sld [smem:[%s28]]
  %s30 = scalar_lea.smem %s0, 15
  %s31 = sld [smem:[%s30]]
  %s32 = scalar_lea.smem %s0, 16
  %s33 = sld [smem:[%s32]]
  %s34 = scalar_lea.smem %s0, 17
  %s35 = sld [smem:[%s34]]
  %s36 = scalar_lea.smem %s0, 18
  %s37 = sld [smem:[%s36]]
  %s38 = scalar_lea.smem %s0, 19
  %s39 = sld [smem:[%s38]]
  %s40 = scalar_lea.smem %s0, 20
  %s41 = sld [smem:[%s40]]
  %s42 = scalar_lea.smem %s0, 21
  %s43 = sld [smem:[%s42]]
  %s44 = scalar_lea.smem %s0, 22
  %s45 = sld [smem:[%s44]]
  %s46 = scalar_lea.smem %s0, 23
  %s47 = sld [smem:[%s46]]
  %s48 = scalar_lea.smem %s0, 24
  %s49 = sld [smem:[%s48]]
  %s50 = scalar_lea.smem %s0, 25
  %s51 = sld [smem:[%s50]]
  %s52 = scalar_lea.smem %s0, 26
  %s53 = sld [smem:[%s52]]
  %s54 = scalar_lea.smem %s0, 27
  %s55 = sld [smem:[%s54]]
  %s56 = scalar_lea.smem %s0, 28
  %s57 = sld [smem:[%s56]]
  %s58 = scalar_lea.smem %s0, 29
  %s59 = sld [smem:[%s58]]
  %s60 = scalar_lea.smem %s0, 30
  %s61 = sld [smem:[%s60]]
  %s62 = scalar_lea.smem %s0, 31
  %s63 = sld [smem:[%s62]]
  %s64 = sld [smem:[#allocation0]]
  $region138: #{tpu_custom_call.1} parent=0
    _
  %s66 = ssub.s32 1, %s64
  %s67 = scalar_select 0, %s66, %s64
  $region1: #{tpu_custom_call.1} parent=0
    #allocation2 [shape = 'u8[131072]{0}', space=vmem, size = 0x20000, scoped, tag = 'input window, operand 11, single buffered']
    #allocation3 [shape = 's32[1]{0}', space=sflag, size = 0x4, scoped, tag = 'scoped memory for tpu_custom_call.1']
    #allocation4 [shape = 's32[1]{0}', space=sflag, size = 0x4, scoped, tag = 'scoped memory for tpu_custom_call.1']
    #allocation5 [shape = 'u8[1024]{0}', space=vmem, size = 0x400, scoped, tag = 'output window, operand 0, single buffered']
    %68 = vsyncpa [#allocation3], 0
    %69 = vsyncpa [#allocation4], 0
    // Predicated region
    $region2: #{tpu_custom_call.1} parent=1 // pred_check
      _
    $region3: #{tpu_custom_call.1} parent=1 // pred_check_branch
      %71 = sbr.rel (0) target = $region5
    $region4: #{tpu_custom_call.1} parent=1 // pred_region
      _
    $region5: #{tpu_custom_call.1} parent=1 // pred_fallthru
      _
    // Predicated region
    $region6: #{tpu_custom_call.1} parent=1 // pred_check
      _
    $region7: #{tpu_custom_call.1} parent=1 // pred_check_branch
      %73 = sbr.rel (0) target = $region9
    $region8: #{tpu_custom_call.1} parent=1 // pred_region
      _
    $region9: #{tpu_custom_call.1} parent=1 // pred_fallthru
      _
    // Predicated region
    $region10: #{tpu_custom_call.1} parent=1 // pred_check
      _
    $region11: #{tpu_custom_call.1} parent=1 // pred_check_branch
      %75 = sbr.rel (0) target = $region13
    $region12: #{tpu_custom_call.1} parent=1 // pred_region
      _
    $region13: #{tpu_custom_call.1} parent=1 // pred_fallthru
      _
    // Predicated region
    $region14: #{tpu_custom_call.1} parent=1 // pred_check
      _
    $region15: #{tpu_custom_call.1} parent=1 // pred_check_branch
      %77 = sbr.rel (0) target = $region17
    $region16: #{tpu_custom_call.1} parent=1 // pred_region
      _
    $region17: #{tpu_custom_call.1} parent=1 // pred_fallthru
      _
    // Predicated region
    $region18: #{tpu_custom_call.1} parent=1 // pred_check
      _
    $region19: #{tpu_custom_call.1} parent=1 // pred_check_branch
      %79 = sbr.rel (0) target = $region21
    $region20: #{tpu_custom_call.1} parent=1 // pred_region
      _
    $region21: #{tpu_custom_call.1} parent=1 // pred_fallthru
      _
    // Predicated region
    $region22: #{tpu_custom_call.1} parent=1 // pred_check
      _
    $region23: #{tpu_custom_call.1} parent=1 // pred_check_branch
      %81 = sbr.rel (0) target = $region25
    $region24: #{tpu_custom_call.1} parent=1 // pred_region
      _
    $region25: #{tpu_custom_call.1} parent=1 // pred_fallthru
      _
    // Predicated region
    $region26: #{tpu_custom_call.1} parent=1 // pred_check
      _
    $region27: #{tpu_custom_call.1} parent=1 // pred_check_branch
      %83 = sbr.rel (0) target = $region29
    $region28: #{tpu_custom_call.1} parent=1 // pred_region
      _
    $region29: #{tpu_custom_call.1} parent=1 // pred_fallthru
      _
    // Predicated region
    $region30: #{tpu_custom_call.1} parent=1 // pred_check
      _
    $region31: #{tpu_custom_call.1} parent=1 // pred_check_branch
      %85 = sbr.rel (0) target = $region33
    $region32: #{tpu_custom_call.1} parent=1 // pred_region
      _
    $region33: #{tpu_custom_call.1} parent=1 // pred_fallthru
      _
    // Predicated region
    $region34: #{tpu_custom_call.1} parent=1 // pred_check
      _
    $region35: #{tpu_custom_call.1} parent=1 // pred_check_branch
      %87 = sbr.rel (0) target = $region37
    $region36: #{tpu_custom_call.1} parent=1 // pred_region
      _
    $region37: #{tpu_custom_call.1} parent=1 // pred_fallthru
      _
    // Predicated region
    $region38: #{tpu_custom_call.1} parent=1 // pred_check
      _
    $region39: #{tpu_custom_call.1} parent=1 // pred_check_branch
      %89 = sbr.rel (0) target = $region41
    $region40: #{tpu_custom_call.1} parent=1 // pred_region
      _
    $region41: #{tpu_custom_call.1} parent=1 // pred_fallthru
      _
    // Predicated region
    $region42: #{tpu_custom_call.1} parent=1 // pred_check
      _
    $region43: #{tpu_custom_call.1} parent=1 // pred_check_branch
      %91 = sbr.rel (0) target = $region45
    $region44: #{tpu_custom_call.1} parent=1 // pred_region
      _
    $region45: #{tpu_custom_call.1} parent=1 // pred_fallthru
      _
    // Predicated region
    $region46: #{tpu_custom_call.1} parent=1 // pred_check
      _
    $region47: #{tpu_custom_call.1} parent=1 // pred_check_branch
      %93 = sbr.rel (0) target = $region49
    $region48: #{tpu_custom_call.1} parent=1 // pred_region
      %s95 = ssub.s32 4096, 4096
      %96 = vsyncadd [#allocation3], %s95
      %s97 = sshll.u32 [#allocation2], 4
      %s98 = int_to_ptr.vmem [resolvable:$true] %s97
      %103 = dma.hbm_to_vmem [thread:$0]  %s23, 4096, %s98, [#allocation3], 64, 64, 4
    $region49: #{tpu_custom_call.1} parent=1 // pred_fallthru
      _
    // Predicated region
    $region50: #{tpu_custom_call.1} parent=1 // pred_check
      _
    $region51: #{tpu_custom_call.1} parent=1 // pred_check_branch
      %105 = sbr.rel (0) target = $region53
    $region52: #{tpu_custom_call.1} parent=1 // pred_region
      _
    $region53: #{tpu_custom_call.1} parent=1 // pred_fallthru
      _
    // Predicated region
    $region54: #{tpu_custom_call.1} parent=1 // pred_check
      _
    $region55: #{tpu_custom_call.1} parent=1 // pred_check_branch
      %107 = sbr.rel (0) target = $region57
    $region56: #{tpu_custom_call.1} parent=1 // pred_region
      _
    $region57: #{tpu_custom_call.1} parent=1 // pred_fallthru
      _
    // Predicated region
    $region58: #{tpu_custom_call.1} parent=1 // pred_check
      _
    $region59: #{tpu_custom_call.1} parent=1 // pred_check_branch
      %109 = sbr.rel (0) target = $region61
    $region60: #{tpu_custom_call.1} parent=1 // pred_region
      _
    $region61: #{tpu_custom_call.1} parent=1 // pred_fallthru
      _
    // Predicated region
    $region62: #{tpu_custom_call.1} parent=1 // pred_check
      _
    $region63: #{tpu_custom_call.1} parent=1 // pred_check_branch
      %111 = sbr.rel (0) target = $region65
    $region64: #{tpu_custom_call.1} parent=1 // pred_region
      _
    $region65: #{tpu_custom_call.1} parent=1 // pred_fallthru
      _
    // Predicated region
    $region66: #{tpu_custom_call.1} parent=1 // pred_check
      _
    $region67: #{tpu_custom_call.1} parent=1 // pred_check_branch
      %113 = sbr.rel (0) target = $region69
    $region68: #{tpu_custom_call.1} parent=1 // pred_region
      _
    $region69: #{tpu_custom_call.1} parent=1 // pred_fallthru
      _
    // Predicated region
    $region70: #{tpu_custom_call.1} parent=1 // pred_check
      _
    $region71: #{tpu_custom_call.1} parent=1 // pred_check_branch
      %115 = sbr.rel (0) target = $region73
    $region72: #{tpu_custom_call.1} parent=1 // pred_region
      _
    $region73: #{tpu_custom_call.1} parent=1 // pred_fallthru
      _
    // Predicated region
    $region74: #{tpu_custom_call.1} parent=1 // pred_check
      _
    $region75: #{tpu_custom_call.1} parent=1 // pred_check_branch
      %117 = sbr.rel (0) target = $region77
    $region76: #{tpu_custom_call.1} parent=1 // pred_region
      _
    $region77: #{tpu_custom_call.1} parent=1 // pred_fallthru
      _
    // Predicated region
    $region78: #{tpu_custom_call.1} parent=1 // pred_check
      _
    $region79: #{tpu_custom_call.1} parent=1 // pred_check_branch
      %119 = sbr.rel (0) target = $region81
    $region80: #{tpu_custom_call.1} parent=1 // pred_region
      _
    $region81: #{tpu_custom_call.1} parent=1 // pred_fallthru
      _
    // Predicated region
    $region82: #{tpu_custom_call.1} parent=1 // pred_check
      _
    $region83: #{tpu_custom_call.1} parent=1 // pred_check_branch
      %121 = sbr.rel (0) target = $region85
    $region84: #{tpu_custom_call.1} parent=1 // pred_region
      _
    $region85: #{tpu_custom_call.1} parent=1 // pred_fallthru
      _
    // Predicated region
    $region86: #{tpu_custom_call.1} parent=1 // pred_check
      _
    $region87: #{tpu_custom_call.1} parent=1 // pred_check_branch
      %123 = sbr.rel (0) target = $region89
    $region88: #{tpu_custom_call.1} parent=1 // pred_region
      _
    $region89: #{tpu_custom_call.1} parent=1 // pred_fallthru
      _
    // Predicated region
    $region90: #{tpu_custom_call.1} parent=1 // pred_check
      _
    $region91: #{tpu_custom_call.1} parent=1 // pred_check_branch
      %125 = sbr.rel (0) target = $region93
    $region92: #{tpu_custom_call.1} parent=1 // pred_region
      _
    $region93: #{tpu_custom_call.1} parent=1 // pred_fallthru
      _
    // Predicated region
    $region94: #{tpu_custom_call.1} parent=1 // pred_check
      _
    $region95: #{tpu_custom_call.1} parent=1 // pred_check_branch
      %127 = sbr.rel (0) target = $region97
    $region96: #{tpu_custom_call.1} parent=1 // pred_region
      _
    $region97: #{tpu_custom_call.1} parent=1 // pred_fallthru
      _
    // Predicated region
    $region98: #{tpu_custom_call.1} parent=1 // pred_check
      _
    $region99: #{tpu_custom_call.1} parent=1 // pred_check_branch
      %129 = sbr.rel (0) target = $region101
    $region100: #{tpu_custom_call.1} parent=1 // pred_region
      _
    $region101: #{tpu_custom_call.1} parent=1 // pred_fallthru
      _
    // Predicated region
    $region102: #{tpu_custom_call.1} parent=1 // pred_check
      _
    $region103: #{tpu_custom_call.1} parent=1 // pred_check_branch
      %131 = sbr.rel (0) target = $region105
    $region104: #{tpu_custom_call.1} parent=1 // pred_region
      _
    $region105: #{tpu_custom_call.1} parent=1 // pred_fallthru
      _
    // Predicated region
    $region106: #{tpu_custom_call.1} parent=1 // pred_check
      _
    $region107: #{tpu_custom_call.1} parent=1 // pred_check_branch
      %133 = sbr.rel (0) target = $region109
    $region108: #{tpu_custom_call.1} parent=1 // pred_region
      _
    $region109: #{tpu_custom_call.1} parent=1 // pred_fallthru
      _
    // Predicated region
    $region110: #{tpu_custom_call.1} parent=1 // pred_check
      _
    $region111: #{tpu_custom_call.1} parent=1 // pred_check_branch
      %135 = sbr.rel (0) target = $region113
    $region112: #{tpu_custom_call.1} parent=1 // pred_region
      _
    $region113: #{tpu_custom_call.1} parent=1 // pred_fallthru
      _
    // Predicated region
    $region114: #{tpu_custom_call.1} parent=1 // pred_check
      _
    $region115: #{tpu_custom_call.1} parent=1 // pred_check_branch
      %137 = sbr.rel (0) target = $region117
    $region116: #{tpu_custom_call.1} parent=1 // pred_region
      _
    $region117: #{tpu_custom_call.1} parent=1 // pred_fallthru
      _
    // Predicated region
    $region118: #{tpu_custom_call.1} parent=1 // pred_check
      _
    $region119: #{tpu_custom_call.1} parent=1 // pred_check_branch
      %139 = sbr.rel (0) target = $region121
    $region120: #{tpu_custom_call.1} parent=1 // pred_region
      _
    $region121: #{tpu_custom_call.1} parent=1 // pred_fallthru
      _
    // Predicated region
    $region122: #{tpu_custom_call.1} parent=1 // pred_check
      _
    $region123: #{tpu_custom_call.1} parent=1 // pred_check_branch
      %141 = sbr.rel (0) target = $region125
    $region124: #{tpu_custom_call.1} parent=1 // pred_region
      _
    $region125: #{tpu_custom_call.1} parent=1 // pred_fallthru
      _
    // Predicated region
    $region126: #{tpu_custom_call.1} parent=1 // pred_check
      _
    $region127: #{tpu_custom_call.1} parent=1 // pred_check_branch
      %143 = sbr.rel (0) target = $region129
    $region128: #{tpu_custom_call.1} parent=1 // pred_region
      %144 = dma.done [#allocation3], 4096
    $region129: #{tpu_custom_call.1} parent=1 // pred_fallthru
      _
    %v146 = vld [vmem:[%s13] sm:$0xff]
    %v147 = vld [vmem:[%s13 + $0x8] sm:$0xff]
    %v148 = vld [vmem:[%s13 + $0x10] sm:$0xff]
    %v149 = vld [vmem:[%s13 + $0x18] sm:$0xff]
    %v150 = vld [vmem:[%s13 + $0x20] sm:$0xff]
    %v151 = vld [vmem:[%s13 + $0x28] sm:$0xff]
    %v152 = vld [vmem:[%s13 + $0x30] sm:$0xff]
    %v153 = vld [vmem:[%s13 + $0x38] sm:$0xff]
    %v154 = vlaneseq
    %v155 = vshrl.u32 %v154, 7
    %v156 = vld [vmem:[%s1] sm:$0xff]
    %v157 = vld [vmem:[%s5] sm:$0xf]
    %v158 = vld [vmem:[%s5 + $0x4] sm:$0xf]
    %v159 = vpack.c.bf16 %v156, %v156
    %v160 = vld [vmem:[%s7] sm:$0x1]
    %v162 = vlaneseq
    %v163 = vshrl.u32 %v162, 7
    %v164 = vsub.s32 0, %v163
    %v165 = vrot.slane %v160, %v164
    %v169 = vunpack.c.l.b16 %v157
    %v170 = vunpack.c.l.b16 %v158
    %v171 = vpack.c.b16 %v170, %v169
    %vm173 = vcmask 130048
    %v175 = vsel %vm173, %v159, 0
    %177 = vmatprep.subr.bf16.mxu0 0
    %178 = vmatpush1.bf16.msra.mxu0 %v171
    %179 = vmatprep.subr.bf16.mxu0 0
    %180 = vmatpush1.bf16.msra.mxu0 0
    %181 = vmatprep.subr.bf16.mxu0 0
    %182 = vmatpush1.bf16.msra.mxu0 0
    %183 = vmatprep.subr.bf16.mxu0 0
    %184 = vmatpush1.bf16.msra.mxu0 0
    %185 = vmatprep.subr.bf16.mxu0 0
    %186 = vmatpush1.bf16.msra.mxu0 0
    %187 = vmatprep.subr.bf16.mxu0 0
    %188 = vmatpush1.bf16.msra.mxu0 0
    %189 = vmatprep.subr.bf16.mxu0 0
    %190 = vmatpush1.bf16.msra.mxu0 0
    %191 = vmatprep.subr.bf16.mxu0 0
    %192 = vmatpush1.bf16.msra.mxu0 0
    %193 = vmatprep.subr.bf16.mxu0 0
    %194 = vmatpush1.bf16.msra.mxu0 0
    %195 = vmatprep.subr.bf16.mxu0 0
    %196 = vmatpush1.bf16.msra.mxu0 0
    %197 = vmatprep.subr.bf16.mxu0 0
    %198 = vmatpush1.bf16.msra.mxu0 0
    %199 = vmatprep.subr.bf16.mxu0 0
    %200 = vmatpush1.bf16.msra.mxu0 0
    %201 = vmatprep.subr.bf16.mxu0 0
    %202 = vmatpush1.bf16.msra.mxu0 0
    %203 = vmatprep.subr.bf16.mxu0 0
    %204 = vmatpush1.bf16.msra.mxu0 0
    %205 = vmatprep.subr.bf16.mxu0 0
    %206 = vmatpush1.bf16.msra.mxu0 0
    %207 = vmatprep.subr.bf16.mxu0 0
    %208 = vmatpush1.bf16.msra.mxu0 0
    %209 = vmatprep.mubr.bf16.mxu0 0
    %210 = vmatmul.mubr.bf16.gmra.mrb[0].mxu0 %v175
    %v211 = vpop.f32.mrb[0].mxu0
    %v212 = vadd.f32 %v165, %v211
    %v213 = vpop.f32.mrb[0].mxu0
    %v214 = vpop.f32.mrb[0].mxu0
    %v215 = vpop.f32.mrb[0].mxu0
    %216 = vdwg.mxu0
    %v217 = vld [vmem:[%s9] sm:$0x1]
    %v218 = vld [vmem:[%s11] sm:$0x1]
    %vm219 = vcmask 523264
    %v221 = vsel %vm219, %v212, 0
    %223 = vmatprep.subr.mxu0 0.0
    %224 = vmatpush1.msra.mxu0 %v146
    %225 = vmatprep.subr.mxu0 0.0
    %226 = vmatpush1.msra.mxu0 %v147
    %227 = vmatprep.subr.mxu0 0.0
    %228 = vmatpush1.msra.mxu0 %v148
    %229 = vmatprep.subr.mxu0 0.0
    %230 = vmatpush1.msra.mxu0 %v149
    %231 = vmatprep.subr.mxu0 0.0
    %232 = vmatpush1.msra.mxu0 %v150
    %233 = vmatprep.subr.mxu0 0.0
    %234 = vmatpush1.msra.mxu0 %v151
    %235 = vmatprep.subr.mxu0 0.0
    %236 = vmatpush1.msra.mxu0 %v152
    %237 = vmatprep.subr.mxu0 0.0
    %238 = vmatpush1.msra.mxu0 %v153
    %239 = vmatprep.subr.mxu0 0.0
    %240 = vmatpush1.msra.mxu0 0.0
    %241 = vmatprep.subr.mxu0 0.0
    %242 = vmatpush1.msra.mxu0 0.0
    %243 = vmatprep.subr.mxu0 0.0
    %244 = vmatpush1.msra.mxu0 0.0
    %245 = vmatprep.subr.mxu0 0.0
    %246 = vmatpush1.msra.mxu0 0.0
    %247 = vmatprep.subr.mxu0 0.0
    %248 = vmatpush1.msra.mxu0 0.0
    %249 = vmatprep.subr.mxu0 0.0
    %250 = vmatpush1.msra.mxu0 0.0
    %251 = vmatprep.subr.mxu0 0.0
    %252 = vmatpush1.msra.mxu0 0.0
    %253 = vmatprep.subr.mxu0 0.0
    %254 = vmatpush1.msra.mxu0 0.0
    %255 = vmatprep.subr.mxu0 0.0
    %256 = vmatpush1.msra.mxu0 0.0
    %257 = vmatprep.subr.mxu0 0.0
    %258 = vmatpush1.msra.mxu0 0.0
    %259 = vmatprep.subr.mxu0 0.0
    %260 = vmatpush1.msra.mxu0 0.0
    %261 = vmatprep.subr.mxu0 0.0
    %262 = vmatpush1.msra.mxu0 0.0
    %263 = vmatprep.subr.mxu0 0.0
    %264 = vmatpush1.msra.mxu0 0.0
    %265 = vmatprep.subr.mxu0 0.0
    %266 = vmatpush1.msra.mxu0 0.0
    %267 = vmatprep.subr.mxu0 0.0
    %268 = vmatpush1.msra.mxu0 0.0
    %269 = vmatprep.subr.mxu0 0.0
    %270 = vmatpush1.msra.mxu0 0.0
    %271 = vmatprep.subr.mxu0 0.0
    %272 = vmatpush1.msra.mxu0 0.0
    %273 = vmatprep.subr.mxu0 0.0
    %274 = vmatpush1.msra.mxu0 0.0
    %275 = vmatprep.subr.mxu0 0.0
    %276 = vmatpush1.msra.mxu0 0.0
    %277 = vmatprep.subr.mxu0 0.0
    %278 = vmatpush1.msra.mxu0 0.0
    %279 = vmatprep.subr.mxu0 0.0
    %280 = vmatpush1.msra.mxu0 0.0
    %281 = vmatprep.subr.mxu0 0.0
    %282 = vmatpush1.msra.mxu0 0.0
    %283 = vmatprep.subr.mxu0 0.0
    %284 = vmatpush1.msra.mxu0 0.0
    %285 = vmatprep.subr.mxu0 0.0
    %286 = vmatpush1.msra.mxu0 0.0
    %287 = vmatprep.mubr.f32.mxu0 0.0
    %288 = vmatmul.mubr.f32.gmra.mrb[0].mxu0 %v221
    %v289 = vpop.f32.mrb[0].mxu0
    %v290 = vadd.f32 0.0, %v289
    %v291 = vpop.f32.mrb[0].mxu0
    %292 = vdwg.mxu0
    %v293 = vsub.f32 %v212, %v290
    %v294 = vmul.f32 %v293, %v293
    %v296 = vsel %vm219, %v294, 0
    %298 = vmatprep.subr.mxu0 0.0
    %299 = vmatpush1.msra.mxu0 %v146
    %300 = vmatprep.subr.mxu0 0.0
    %301 = vmatpush1.msra.mxu0 %v147
    %302 = vmatprep.subr.mxu0 0.0
    %303 = vmatpush1.msra.mxu0 %v148
    %304 = vmatprep.subr.mxu0 0.0
    %305 = vmatpush1.msra.mxu0 %v149
    %306 = vmatprep.subr.mxu0 0.0
    %307 = vmatpush1.msra.mxu0 %v150
    %308 = vmatprep.subr.mxu0 0.0
    %309 = vmatpush1.msra.mxu0 %v151
    %310 = vmatprep.subr.mxu0 0.0
    %311 = vmatpush1.msra.mxu0 %v152
    %312 = vmatprep.subr.mxu0 0.0
    %313 = vmatpush1.msra.mxu0 %v153
    %314 = vmatprep.subr.mxu0 0.0
    %315 = vmatpush1.msra.mxu0 0.0
    %316 = vmatprep.subr.mxu0 0.0
    %317 = vmatpush1.msra.mxu0 0.0
    %318 = vmatprep.subr.mxu0 0.0
    %319 = vmatpush1.msra.mxu0 0.0
    %320 = vmatprep.subr.mxu0 0.0
    %321 = vmatpush1.msra.mxu0 0.0
    %322 = vmatprep.subr.mxu0 0.0
    %323 = vmatpush1.msra.mxu0 0.0
    %324 = vmatprep.subr.mxu0 0.0
    %325 = vmatpush1.msra.mxu0 0.0
    %326 = vmatprep.subr.mxu0 0.0
    %327 = vmatpush1.msra.mxu0 0.0
    %328 = vmatprep.subr.mxu0 0.0
    %329 = vmatpush1.msra.mxu0 0.0
    %330 = vmatprep.subr.mxu0 0.0
    %331 = vmatpush1.msra.mxu0 0.0
    %332 = vmatprep.subr.mxu0 0.0
    %333 = vmatpush1.msra.mxu0 0.0
    %334 = vmatprep.subr.mxu0 0.0
    %335 = vmatpush1.msra.mxu0 0.0
    %336 = vmatprep.subr.mxu0 0.0
    %337 = vmatpush1.msra.mxu0 0.0
    %338 = vmatprep.subr.mxu0 0.0
    %339 = vmatpush1.msra.mxu0 0.0
    %340 = vmatprep.subr.mxu0 0.0
    %341 = vmatpush1.msra.mxu0 0.0
    %342 = vmatprep.subr.mxu0 0.0
    %343 = vmatpush1.msra.mxu0 0.0
    %344 = vmatprep.subr.mxu0 0.0
    %345 = vmatpush1.msra.mxu0 0.0
    %346 = vmatprep.subr.mxu0 0.0
    %347 = vmatpush1.msra.mxu0 0.0
    %348 = vmatprep.subr.mxu0 0.0
    %349 = vmatpush1.msra.mxu0 0.0
    %350 = vmatprep.subr.mxu0 0.0
    %351 = vmatpush1.msra.mxu0 0.0
    %352 = vmatprep.subr.mxu0 0.0
    %353 = vmatpush1.msra.mxu0 0.0
    %354 = vmatprep.subr.mxu0 0.0
    %355 = vmatpush1.msra.mxu0 0.0
    %356 = vmatprep.subr.mxu0 0.0
    %357 = vmatpush1.msra.mxu0 0.0
    %358 = vmatprep.subr.mxu0 0.0
    %359 = vmatpush1.msra.mxu0 0.0
    %360 = vmatprep.subr.mxu0 0.0
    %361 = vmatpush1.msra.mxu0 0.0
    %362 = vmatprep.mubr.f32.mxu0 0.0
    %363 = vmatmul.mubr.f32.gmra.mrb[0].mxu0 %v296
    %v364 = vpop.f32.mrb[0].mxu0
    %v365 = vadd.f32 1e-05, %v364
    %v366 = vpop.f32.mrb[0].mxu0
    %367 = vdwg.mxu0
    %v368 = vrsqrt.pop %v365
    %v369 = vmul.f32 %v293, %v368
    %v371 = vlaneseq
    %v372 = vshrl.u32 %v371, 7
    %v373 = vsub.s32 0, %v372
    %v374 = vrot.slane %v217, %v373
    %v376 = vmul.f32 %v369, %v374
    %v378 = vlaneseq
    %v379 = vshrl.u32 %v378, 7
    %v380 = vsub.s32 0, %v379
    %v381 = vrot.slane %v218, %v380
    %v383 = vadd.f32 %v376, %v381
    %v384 = vmax.f32 %v383, 0.0
    %v385 = vld [vmem:[%s15] sm:$0xff]
    %v386 = vld [vmem:[%s15 + $0x8] sm:$0xff]
    %v387 = vld [vmem:[%s15 + $0x10] sm:$0xff]
    %v388 = vld [vmem:[%s15 + $0x18] sm:$0xff]
    %v389 = vld [vmem:[%s15 + $0x20] sm:$0xff]
    %v390 = vld [vmem:[%s15 + $0x28] sm:$0xff]
    %v391 = vld [vmem:[%s15 + $0x30] sm:$0xff]
    %v392 = vld [vmem:[%s15 + $0x38] sm:$0xff]
    %v393 = vpack.c.bf16 %v384, %v384
    %v394 = vld [vmem:[%s17] sm:$0x3]
    %v396 = vlaneseq
    %v397 = vshrl.u32 %v396, 7
    %v398 = vsub.s32 0, %v397
    %v399 = vrot.slane %v394, %v398
    %v400 = vlaneseq
    %v401 = vshrl.u32 %v400, 7
    %v402 = vsub.s32 1, %v401
    %v403 = vrot.slane %v394, %v402
    %v414 = vunpack.c.l.b16 %v385
    %v415 = vunpack.c.h.b16 %v385
    %v416 = vunpack.c.l.b16 %v386
    %v417 = vunpack.c.h.b16 %v386
    %v418 = vunpack.c.l.b16 %v387
    %v419 = vunpack.c.h.b16 %v387
    %v420 = vunpack.c.l.b16 %v388
    %v421 = vunpack.c.h.b16 %v388
    %v422 = vunpack.c.l.b16 %v389
    %v423 = vunpack.c.h.b16 %v389
    %v424 = vunpack.c.l.b16 %v390
    %v425 = vunpack.c.h.b16 %v390
    %v426 = vunpack.c.l.b16 %v391
    %v427 = vunpack.c.h.b16 %v391
    %v428 = vunpack.c.l.b16 %v392
    %v429 = vunpack.c.h.b16 %v392
    %v430 = vpack.c.b16 %v416, %v414
    %v431 = vpack.c.b16 %v417, %v415
    %v432 = vpack.c.b16 %v420, %v418
    %v433 = vpack.c.b16 %v421, %v419
    %v434 = vpack.c.b16 %v424, %v422
    %v435 = vpack.c.b16 %v425, %v423
    %v436 = vpack.c.b16 %v428, %v426
    %v437 = vpack.c.b16 %v429, %v427
    %v447 = vsel %vm219, %v393, 0
    %449 = vmatprep.subr.bf16.mxu0 %v431
    %450 = vmatpush1.bf16.msra.mxu0 %v430
    %451 = vmatprep.subr.bf16.mxu0 %v433
    %452 = vmatpush1.bf16.msra.mxu0 %v432
    %453 = vmatprep.subr.bf16.mxu0 %v435
    %454 = vmatpush1.bf16.msra.mxu0 %v434
    %455 = vmatprep.subr.bf16.mxu0 %v437
    %456 = vmatpush1.bf16.msra.mxu0 %v436
    %457 = vmatprep.subr.bf16.mxu0 0
    %458 = vmatpush1.bf16.msra.mxu0 0
    %459 = vmatprep.subr.bf16.mxu0 0
    %460 = vmatpush1.bf16.msra.mxu0 0
    %461 = vmatprep.subr.bf16.mxu0 0
    %462 = vmatpush1.bf16.msra.mxu0 0
    %463 = vmatprep.subr.bf16.mxu0 0
    %464 = vmatpush1.bf16.msra.mxu0 0
    %465 = vmatprep.subr.bf16.mxu0 0
    %466 = vmatpush1.bf16.msra.mxu0 0
    %467 = vmatprep.subr.bf16.mxu0 0
    %468 = vmatpush1.bf16.msra.mxu0 0
    %469 = vmatprep.subr.bf16.mxu0 0
    %470 = vmatpush1.bf16.msra.mxu0 0
    %471 = vmatprep.subr.bf16.mxu0 0
    %472 = vmatpush1.bf16.msra.mxu0 0
    %473 = vmatprep.subr.bf16.mxu0 0
    %474 = vmatpush1.bf16.msra.mxu0 0
    %475 = vmatprep.subr.bf16.mxu0 0
    %476 = vmatpush1.bf16.msra.mxu0 0
    %477 = vmatprep.subr.bf16.mxu0 0
    %478 = vmatpush1.bf16.msra.mxu0 0
    %479 = vmatprep.subr.bf16.mxu0 0
    %480 = vmatpush1.bf16.msra.mxu0 0
    %481 = vmatprep.mubr.bf16.mxu0 0
    %482 = vmatmul.mubr.bf16.gmra.mrb[0].mxu0 %v447
    %v483 = vpop.f32.mrb[0].mxu0
    %v484 = vadd.f32 %v399, %v483
    %v485 = vpop.f32.mrb[0].mxu0
    %v486 = vadd.f32 %v403, %v485
    %v487 = vpop.f32.mrb[0].mxu0
    %v488 = vpop.f32.mrb[0].mxu0
    %489 = vdwg.mxu0
    %v490 = vxor.u32 %v484, 2147483648
    %v491 = vmul.f32 %v490, 1.442695
    %v492 = vpow.pop %v491
    %v493 = vadd.f32 %v492, 1.0
    %v494 = vrcp.pop %v493
    %v495 = vmul.f32 1.0, %v494
    %v496 = vmul.f32 %v484, %v495
    %v497 = vld [vmem:[%s19] sm:$0xf]
    %v498 = vlaneseq
    %v499 = vshrl.u32 %v498, 7
    %v500 = vsub.s32 3, %v499
    %v501 = vrot.slane %v497, %v500
    %v502 = vmul.f32 %v496, %v501
    %v503 = vld [vmem:[%s21] sm:$0x1]
    %v505 = vlaneseq
    %v506 = vshrl.u32 %v505, 7
    %v507 = vsub.s32 0, %v506
    %v508 = vrot.slane %v503, %v507
    %v510 = vadd.f32 %v502, %v508
    %v511 = vrot.slane %v496, 7
    %vm512 = vcmp.ge.s32.totalorder %v155, 1
    %v513 = vsel %vm512, %v511, 0.0
    %v514 = vlaneseq
    %v515 = vshrl.u32 %v514, 7
    %v516 = vsub.s32 2, %v515
    %v517 = vrot.slane %v497, %v516
    %v518 = vmul.f32 %v513, %v517
    %v519 = vadd.f32 %v510, %v518
    %v520 = vrot.slane %v496, 6
    %vm521 = vcmp.ge.s32.totalorder %v155, 2
    %v522 = vsel %vm521, %v520, 0.0
    %v523 = vlaneseq
    %v524 = vshrl.u32 %v523, 7
    %v525 = vsub.s32 1, %v524
    %v526 = vrot.slane %v497, %v525
    %v527 = vmul.f32 %v522, %v526
    %v528 = vadd.f32 %v519, %v527
    %v529 = vrot.slane %v496, 5
    %vm530 = vcmp.ge.s32.totalorder %v155, 3
    %v531 = vsel %vm530, %v529, 0.0
    %v532 = vlaneseq
    %v533 = vshrl.u32 %v532, 7
    %v534 = vsub.s32 0, %v533
    %v535 = vrot.slane %v497, %v534
    %v536 = vmul.f32 %v531, %v535
    %v537 = vadd.f32 %v528, %v536
    %v538 = vxor.u32 %v537, 2147483648
    %v539 = vmul.f32 %v538, 1.442695
    %v540 = vpow.pop %v539
    %v541 = vadd.f32 %v540, 1.0
    %v542 = vrcp.pop %v541
    %v543 = vmul.f32 1.0, %v542
    %v544 = vmul.f32 %v537, %v543
    %v545 = vld [vmem:[#allocation2] sm:$0xf]
    %v546 = vld [vmem:[#allocation2 + $0x4] sm:$0xf]
    %v547 = vld [vmem:[#allocation2 + $0x8] sm:$0xf]
    %v548 = vld [vmem:[#allocation2 + $0xc] sm:$0xf]
    %v549 = vld [vmem:[#allocation2 + $0x10] sm:$0xf]
    %v550 = vld [vmem:[#allocation2 + $0x14] sm:$0xf]
    %v551 = vld [vmem:[#allocation2 + $0x18] sm:$0xf]
    %v552 = vld [vmem:[#allocation2 + $0x1c] sm:$0xf]
    %v553 = vld [vmem:[#allocation2 + $0x20] sm:$0xf]
    %v554 = vld [vmem:[#allocation2 + $0x24] sm:$0xf]
    %v555 = vld [vmem:[#allocation2 + $0x28] sm:$0xf]
    %v556 = vld [vmem:[#allocation2 + $0x2c] sm:$0xf]
    %v557 = vld [vmem:[#allocation2 + $0x30] sm:$0xf]
    %v558 = vld [vmem:[#allocation2 + $0x34] sm:$0xf]
    %v559 = vld [vmem:[#allocation2 + $0x38] sm:$0xf]
    %v560 = vld [vmem:[#allocation2 + $0x3c] sm:$0xf]
    %v561 = vpack.c.bf16 %v544, %v544
    %v562 = vld [vmem:[%s25] sm:$0x1]
    %v564 = vlaneseq
    %v565 = vshrl.u32 %v564, 7
    %v566 = vsub.s32 0, %v565
    %v567 = vrot.slane %v562, %v566
    %v585 = vunpack.c.l.b16 %v545
    %v586 = vunpack.c.l.b16 %v546
    %v587 = vunpack.c.l.b16 %v547
    %v588 = vunpack.c.l.b16 %v548
    %v589 = vunpack.c.l.b16 %v549
    %v590 = vunpack.c.l.b16 %v550
    %v591 = vunpack.c.l.b16 %v551
    %v592 = vunpack.c.l.b16 %v552
    %v593 = vunpack.c.l.b16 %v553
    %v594 = vunpack.c.l.b16 %v554
    %v595 = vunpack.c.l.b16 %v555
    %v596 = vunpack.c.l.b16 %v556
    %v597 = vunpack.c.l.b16 %v557
    %v598 = vunpack.c.l.b16 %v558
    %v599 = vunpack.c.l.b16 %v559
    %v600 = vunpack.c.l.b16 %v560
    %v601 = vpack.c.b16 %v586, %v585
    %v602 = vpack.c.b16 %v588, %v587
    %v603 = vpack.c.b16 %v590, %v589
    %v604 = vpack.c.b16 %v592, %v591
    %v605 = vpack.c.b16 %v594, %v593
    %v606 = vpack.c.b16 %v596, %v595
    %v607 = vpack.c.b16 %v598, %v597
    %v608 = vpack.c.b16 %v600, %v599
    %617 = vmatprep.subr.bf16.mxu0 0
    %618 = vmatpush1.bf16.msra.mxu0 %v601
    %619 = vmatprep.subr.bf16.mxu0 0
    %620 = vmatpush1.bf16.msra.mxu0 %v602
    %621 = vmatprep.subr.bf16.mxu0 0
    %622 = vmatpush1.bf16.msra.mxu0 %v603
    %623 = vmatprep.subr.bf16.mxu0 0
    %624 = vmatpush1.bf16.msra.mxu0 %v604
    %625 = vmatprep.subr.bf16.mxu0 0
    %626 = vmatpush1.bf16.msra.mxu0 %v605
    %627 = vmatprep.subr.bf16.mxu0 0
    %628 = vmatpush1.bf16.msra.mxu0 %v606
    %629 = vmatprep.subr.bf16.mxu0 0
    %630 = vmatpush1.bf16.msra.mxu0 %v607
    %631 = vmatprep.subr.bf16.mxu0 0
    %632 = vmatpush1.bf16.msra.mxu0 %v608
    %633 = vmatprep.subr.bf16.mxu0 0
    %634 = vmatpush1.bf16.msra.mxu0 0
    %635 = vmatprep.subr.bf16.mxu0 0
    %636 = vmatpush1.bf16.msra.mxu0 0
    %637 = vmatprep.subr.bf16.mxu0 0
    %638 = vmatpush1.bf16.msra.mxu0 0
    %639 = vmatprep.subr.bf16.mxu0 0
    %640 = vmatpush1.bf16.msra.mxu0 0
    %641 = vmatprep.subr.bf16.mxu0 0
    %642 = vmatpush1.bf16.msra.mxu0 0
    %643 = vmatprep.subr.bf16.mxu0 0
    %644 = vmatpush1.bf16.msra.mxu0 0
    %645 = vmatprep.subr.bf16.mxu0 0
    %646 = vmatpush1.bf16.msra.mxu0 0
    %647 = vmatprep.subr.bf16.mxu0 0
    %648 = vmatpush1.bf16.msra.mxu0 0
    %649 = vmatprep.mubr.bf16.mxu0 0
    %650 = vmatmul.mubr.bf16.gmra.mrb[0].mxu0 %v561
    %v651 = vpop.f32.mrb[0].mxu0
    %v652 = vadd.f32 %v567, %v651
    %v653 = vpop.f32.mrb[0].mxu0
    %v654 = vpop.f32.mrb[0].mxu0
    %v655 = vpop.f32.mrb[0].mxu0
    %656 = vdwg.mxu0
    %v657 = vmax.f32 %v652, 0.0
    %vm658 = vcmp.ne.f32.partialorder %v652, %v652
    %v659 = vadd.f32 %v652, 0.0
    %v660 = vand.u32 2147483647, %v652
    %v661 = vsub.f32 0.0, %v660
    %v662 = vmul.f32 %v661, 1.442695
    %v663 = vpow.pop %v662
    %v664 = vadd.f32 %v663, 1.0
    %v665 = vlog2.pop %v664
    %v666 = vmul.f32 %v665, 0.6931472
    %v667 = vmul.f32 -0.5, %v663
    %v668 = vadd.f32 %v667, 1.0
    %v669 = vmul.f32 %v668, %v663
    %v670 = vand.u32 2147483647, %v663
    %vm671 = vcmp.lt.f32.partialorder %v670, 0.0004427343
    %v672 = vsel %vm671, %v669, %v666
    %v673 = vadd.f32 %v657, %v672
    %v674 = vsel %vm658, %v659, %v673
    %v675 = vxor.u32 %v674, 2147483648
    %v676 = vmul.f32 %v675, 1.442695
    %v677 = vpow.pop %v676
    %v678 = vadd.f32 %v677, 1.0
    %v679 = vrcp.pop %v678
    %v680 = vmul.f32 1.0, %v679
    %vm681 = vcmp.eq.s32.totalorder %v155, 0
    %v682 = vsub.f32 1.0, %v680
    %v683 = vsel %vm681, 0.0, %v682
    %v684 = vmul.f32 %v680, %v544
    %v685 = vsel %vm681, %v544, %v684
    %v686 = vrot.slane %v683, 7
    %v687 = vsel %vm512, %v686, 1.0
    %v688 = vrot.slane %v685, 7
    %v689 = vsel %vm512, %v688, 0.0
    %v690 = vmul.f32 %v683, %v689
    %v691 = vadd.f32 %v690, %v685
    %v692 = vmul.f32 %v683, %v687
    %v693 = vrot.slane %v692, 6
    %v694 = vsel %vm521, %v693, 1.0
    %v695 = vrot.slane %v691, 6
    %v696 = vsel %vm521, %v695, 0.0
    %v697 = vmul.f32 %v692, %v696
    %v698 = vadd.f32 %v697, %v691
    %v699 = vmul.f32 %v692, %v694
    %vm700 = vcmp.ge.s32.totalorder %v155, 4
    %v701 = vrot.slane %v698, 4
    %v702 = vsel %vm700, %v701, 0.0
    %v703 = vmul.f32 %v699, %v702
    %v704 = vadd.f32 %v703, %v698
    %v705 = vld [vmem:[%s27] sm:$0x1]
    %v707 = vlaneseq
    %v708 = vshrl.u32 %v707, 7
    %v709 = vsub.s32 0, %v708
    %v710 = vrot.slane %v705, %v709
    %v712 = vmul.f32 %v544, %v710
    %v713 = vadd.f32 %v704, %v712
    %v714 = vxor.u32 %v486, 2147483648
    %v715 = vmul.f32 %v714, 1.442695
    %v716 = vpow.pop %v715
    %v717 = vadd.f32 %v716, 1.0
    %v718 = vrcp.pop %v717
    %v719 = vmul.f32 1.0, %v718
    %v720 = vmul.f32 %v486, %v719
    %v721 = vmul.f32 %v713, %v720
    %v722 = vld [vmem:[%s29] sm:$0xf]
    %v723 = vld [vmem:[%s29 + $0x4] sm:$0xf]
    %v724 = vld [vmem:[%s29 + $0x8] sm:$0xf]
    %v725 = vld [vmem:[%s29 + $0xc] sm:$0xf]
    %v726 = vld [vmem:[%s29 + $0x10] sm:$0xf]
    %v727 = vld [vmem:[%s29 + $0x14] sm:$0xf]
    %v728 = vld [vmem:[%s29 + $0x18] sm:$0xf]
    %v729 = vld [vmem:[%s29 + $0x1c] sm:$0xf]
    %v730 = vld [vmem:[%s29 + $0x20] sm:$0xf]
    %v731 = vld [vmem:[%s29 + $0x24] sm:$0xf]
    %v732 = vld [vmem:[%s29 + $0x28] sm:$0xf]
    %v733 = vld [vmem:[%s29 + $0x2c] sm:$0xf]
    %v734 = vld [vmem:[%s29 + $0x30] sm:$0xf]
    %v735 = vld [vmem:[%s29 + $0x34] sm:$0xf]
    %v736 = vld [vmem:[%s29 + $0x38] sm:$0xf]
    %v737 = vld [vmem:[%s29 + $0x3c] sm:$0xf]
    %v738 = vpack.c.bf16 %v721, %v721
    %v739 = vld [vmem:[%s31] sm:$0x1]
    %v741 = vlaneseq
    %v742 = vshrl.u32 %v741, 7
    %v743 = vsub.s32 0, %v742
    %v744 = vrot.slane %v739, %v743
    %v762 = vunpack.c.l.b16 %v722
    %v763 = vunpack.c.l.b16 %v723
    %v764 = vunpack.c.l.b16 %v724
    %v765 = vunpack.c.l.b16 %v725
    %v766 = vunpack.c.l.b16 %v726
    %v767 = vunpack.c.l.b16 %v727
    %v768 = vunpack.c.l.b16 %v728
    %v769 = vunpack.c.l.b16 %v729
    %v770 = vunpack.c.l.b16 %v730
    %v771 = vunpack.c.l.b16 %v731
    %v772 = vunpack.c.l.b16 %v732
    %v773 = vunpack.c.l.b16 %v733
    %v774 = vunpack.c.l.b16 %v734
    %v775 = vunpack.c.l.b16 %v735
    %v776 = vunpack.c.l.b16 %v736
    %v777 = vunpack.c.l.b16 %v737
    %v778 = vpack.c.b16 %v763, %v762
    %v779 = vpack.c.b16 %v765, %v764
    %v780 = vpack.c.b16 %v767, %v766
    %v781 = vpack.c.b16 %v769, %v768
    %v782 = vpack.c.b16 %v771, %v770
    %v783 = vpack.c.b16 %v773, %v772
    %v784 = vpack.c.b16 %v775, %v774
    %v785 = vpack.c.b16 %v777, %v776
    %794 = vmatprep.subr.bf16.mxu0 0
    %795 = vmatpush1.bf16.msra.mxu0 %v778
    %796 = vmatprep.subr.bf16.mxu0 0
    %797 = vmatpush1.bf16.msra.mxu0 %v779
    %798 = vmatprep.subr.bf16.mxu0 0
    %799 = vmatpush1.bf16.msra.mxu0 %v780
    %800 = vmatprep.subr.bf16.mxu0 0
    %801 = vmatpush1.bf16.msra.mxu0 %v781
    %802 = vmatprep.subr.bf16.mxu0 0
    %803 = vmatpush1.bf16.msra.mxu0 %v782
    %804 = vmatprep.subr.bf16.mxu0 0
    %805 = vmatpush1.bf16.msra.mxu0 %v783
    %806 = vmatprep.subr.bf16.mxu0 0
    %807 = vmatpush1.bf16.msra.mxu0 %v784
    %808 = vmatprep.subr.bf16.mxu0 0
    %809 = vmatpush1.bf16.msra.mxu0 %v785
    %810 = vmatprep.subr.bf16.mxu0 0
    %811 = vmatpush1.bf16.msra.mxu0 0
    %812 = vmatprep.subr.bf16.mxu0 0
    %813 = vmatpush1.bf16.msra.mxu0 0
    %814 = vmatprep.subr.bf16.mxu0 0
    %815 = vmatpush1.bf16.msra.mxu0 0
    %816 = vmatprep.subr.bf16.mxu0 0
    %817 = vmatpush1.bf16.msra.mxu0 0
    %818 = vmatprep.subr.bf16.mxu0 0
    %819 = vmatpush1.bf16.msra.mxu0 0
    %820 = vmatprep.subr.bf16.mxu0 0
    %821 = vmatpush1.bf16.msra.mxu0 0
    %822 = vmatprep.subr.bf16.mxu0 0
    %823 = vmatpush1.bf16.msra.mxu0 0
    %824 = vmatprep.subr.bf16.mxu0 0
    %825 = vmatpush1.bf16.msra.mxu0 0
    %826 = vmatprep.mubr.bf16.mxu0 0
    %827 = vmatmul.mubr.bf16.gmra.mrb[0].mxu0 %v738
    %v828 = vpop.f32.mrb[0].mxu0
    %v829 = vadd.f32 %v744, %v828
    %v830 = vpop.f32.mrb[0].mxu0
    %v831 = vpop.f32.mrb[0].mxu0
    %v832 = vpop.f32.mrb[0].mxu0
    %833 = vdwg.mxu0
    %v834 = vadd.f32 %v829, %v384
    %v835 = vld [vmem:[%s33] sm:$0x1]
    %v836 = vld [vmem:[%s35] sm:$0x1]
    %v838 = vsel %vm219, %v834, 0
    %840 = vmatprep.subr.mxu0 0.0
    %841 = vmatpush1.msra.mxu0 %v146
    %842 = vmatprep.subr.mxu0 0.0
    %843 = vmatpush1.msra.mxu0 %v147
    %844 = vmatprep.subr.mxu0 0.0
    %845 = vmatpush1.msra.mxu0 %v148
    %846 = vmatprep.subr.mxu0 0.0
    %847 = vmatpush1.msra.mxu0 %v149
    %848 = vmatprep.subr.mxu0 0.0
    %849 = vmatpush1.msra.mxu0 %v150
    %850 = vmatprep.subr.mxu0 0.0
    %851 = vmatpush1.msra.mxu0 %v151
    %852 = vmatprep.subr.mxu0 0.0
    %853 = vmatpush1.msra.mxu0 %v152
    %854 = vmatprep.subr.mxu0 0.0
    %855 = vmatpush1.msra.mxu0 %v153
    %856 = vmatprep.subr.mxu0 0.0
    %857 = vmatpush1.msra.mxu0 0.0
    %858 = vmatprep.subr.mxu0 0.0
    %859 = vmatpush1.msra.mxu0 0.0
    %860 = vmatprep.subr.mxu0 0.0
    %861 = vmatpush1.msra.mxu0 0.0
    %862 = vmatprep.subr.mxu0 0.0
    %863 = vmatpush1.msra.mxu0 0.0
    %864 = vmatprep.subr.mxu0 0.0
    %865 = vmatpush1.msra.mxu0 0.0
    %866 = vmatprep.subr.mxu0 0.0
    %867 = vmatpush1.msra.mxu0 0.0
    %868 = vmatprep.subr.mxu0 0.0
    %869 = vmatpush1.msra.mxu0 0.0
    %870 = vmatprep.subr.mxu0 0.0
    %871 = vmatpush1.msra.mxu0 0.0
    %872 = vmatprep.subr.mxu0 0.0
    %873 = vmatpush1.msra.mxu0 0.0
    %874 = vmatprep.subr.mxu0 0.0
    %875 = vmatpush1.msra.mxu0 0.0
    %876 = vmatprep.subr.mxu0 0.0
    %877 = vmatpush1.msra.mxu0 0.0
    %878 = vmatprep.subr.mxu0 0.0
    %879 = vmatpush1.msra.mxu0 0.0
    %880 = vmatprep.subr.mxu0 0.0
    %881 = vmatpush1.msra.mxu0 0.0
    %882 = vmatprep.subr.mxu0 0.0
    %883 = vmatpush1.msra.mxu0 0.0
    %884 = vmatprep.subr.mxu0 0.0
    %885 = vmatpush1.msra.mxu0 0.0
    %886 = vmatprep.subr.mxu0 0.0
    %887 = vmatpush1.msra.mxu0 0.0
    %888 = vmatprep.subr.mxu0 0.0
    %889 = vmatpush1.msra.mxu0 0.0
    %890 = vmatprep.subr.mxu0 0.0
    %891 = vmatpush1.msra.mxu0 0.0
    %892 = vmatprep.subr.mxu0 0.0
    %893 = vmatpush1.msra.mxu0 0.0
    %894 = vmatprep.subr.mxu0 0.0
    %895 = vmatpush1.msra.mxu0 0.0
    %896 = vmatprep.subr.mxu0 0.0
    %897 = vmatpush1.msra.mxu0 0.0
    %898 = vmatprep.subr.mxu0 0.0
    %899 = vmatpush1.msra.mxu0 0.0
    %900 = vmatprep.subr.mxu0 0.0
    %901 = vmatpush1.msra.mxu0 0.0
    %902 = vmatprep.subr.mxu0 0.0
    %903 = vmatpush1.msra.mxu0 0.0
    %904 = vmatprep.mubr.f32.mxu0 0.0
    %905 = vmatmul.mubr.f32.gmra.mrb[0].mxu0 %v838
    %v906 = vpop.f32.mrb[0].mxu0
    %v907 = vadd.f32 0.0, %v906
    %v908 = vpop.f32.mrb[0].mxu0
    %909 = vdwg.mxu0
    %v910 = vsub.f32 %v834, %v907
    %v911 = vmul.f32 %v910, %v910
    %v913 = vsel %vm219, %v911, 0
    %915 = vmatprep.subr.mxu0 0.0
    %916 = vmatpush1.msra.mxu0 %v146
    %917 = vmatprep.subr.mxu0 0.0
    %918 = vmatpush1.msra.mxu0 %v147
    %919 = vmatprep.subr.mxu0 0.0
    %920 = vmatpush1.msra.mxu0 %v148
    %921 = vmatprep.subr.mxu0 0.0
    %922 = vmatpush1.msra.mxu0 %v149
    %923 = vmatprep.subr.mxu0 0.0
    %924 = vmatpush1.msra.mxu0 %v150
    %925 = vmatprep.subr.mxu0 0.0
    %926 = vmatpush1.msra.mxu0 %v151
    %927 = vmatprep.subr.mxu0 0.0
    %928 = vmatpush1.msra.mxu0 %v152
    %929 = vmatprep.subr.mxu0 0.0
    %930 = vmatpush1.msra.mxu0 %v153
    %931 = vmatprep.subr.mxu0 0.0
    %932 = vmatpush1.msra.mxu0 0.0
    %933 = vmatprep.subr.mxu0 0.0
    %934 = vmatpush1.msra.mxu0 0.0
    %935 = vmatprep.subr.mxu0 0.0
    %936 = vmatpush1.msra.mxu0 0.0
    %937 = vmatprep.subr.mxu0 0.0
    %938 = vmatpush1.msra.mxu0 0.0
    %939 = vmatprep.subr.mxu0 0.0
    %940 = vmatpush1.msra.mxu0 0.0
    %941 = vmatprep.subr.mxu0 0.0
    %942 = vmatpush1.msra.mxu0 0.0
    %943 = vmatprep.subr.mxu0 0.0
    %944 = vmatpush1.msra.mxu0 0.0
    %945 = vmatprep.subr.mxu0 0.0
    %946 = vmatpush1.msra.mxu0 0.0
    %947 = vmatprep.subr.mxu0 0.0
    %948 = vmatpush1.msra.mxu0 0.0
    %949 = vmatprep.subr.mxu0 0.0
    %950 = vmatpush1.msra.mxu0 0.0
    %951 = vmatprep.subr.mxu0 0.0
    %952 = vmatpush1.msra.mxu0 0.0
    %953 = vmatprep.subr.mxu0 0.0
    %954 = vmatpush1.msra.mxu0 0.0
    %955 = vmatprep.subr.mxu0 0.0
    %956 = vmatpush1.msra.mxu0 0.0
    %957 = vmatprep.subr.mxu0 0.0
    %958 = vmatpush1.msra.mxu0 0.0
    %959 = vmatprep.subr.mxu0 0.0
    %960 = vmatpush1.msra.mxu0 0.0
    %961 = vmatprep.subr.mxu0 0.0
    %962 = vmatpush1.msra.mxu0 0.0
    %963 = vmatprep.subr.mxu0 0.0
    %964 = vmatpush1.msra.mxu0 0.0
    %965 = vmatprep.subr.mxu0 0.0
    %966 = vmatpush1.msra.mxu0 0.0
    %967 = vmatprep.subr.mxu0 0.0
    %968 = vmatpush1.msra.mxu0 0.0
    %969 = vmatprep.subr.mxu0 0.0
    %970 = vmatpush1.msra.mxu0 0.0
    %971 = vmatprep.subr.mxu0 0.0
    %972 = vmatpush1.msra.mxu0 0.0
    %973 = vmatprep.subr.mxu0 0.0
    %974 = vmatpush1.msra.mxu0 0.0
    %975 = vmatprep.subr.mxu0 0.0
    %976 = vmatpush1.msra.mxu0 0.0
    %977 = vmatprep.subr.mxu0 0.0
    %978 = vmatpush1.msra.mxu0 0.0
    %979 = vmatprep.mubr.f32.mxu0 0.0
    %980 = vmatmul.mubr.f32.gmra.mrb[0].mxu0 %v913
    %v981 = vpop.f32.mrb[0].mxu0
    %v982 = vadd.f32 1e-05, %v981
    %v983 = vpop.f32.mrb[0].mxu0
    %984 = vdwg.mxu0
    %v985 = vrsqrt.pop %v982
    %v986 = vmul.f32 %v910, %v985
    %v988 = vlaneseq
    %v989 = vshrl.u32 %v988, 7
    %v990 = vsub.s32 0, %v989
    %v991 = vrot.slane %v835, %v990
    %v993 = vmul.f32 %v986, %v991
    %v995 = vlaneseq
    %v996 = vshrl.u32 %v995, 7
    %v997 = vsub.s32 0, %v996
    %v998 = vrot.slane %v836, %v997
    %v1000 = vadd.f32 %v993, %v998
    %s1001 = scalar_lea.vmem %s15, 64
    %v1002 = vld [vmem:[%s1001] sm:$0xff]
    %v1003 = vld [vmem:[%s1001 + $0x8] sm:$0xff]
    %v1004 = vld [vmem:[%s1001 + $0x10] sm:$0xff]
    %v1005 = vld [vmem:[%s1001 + $0x18] sm:$0xff]
    %v1006 = vld [vmem:[%s1001 + $0x20] sm:$0xff]
    %v1007 = vld [vmem:[%s1001 + $0x28] sm:$0xff]
    %v1008 = vld [vmem:[%s1001 + $0x30] sm:$0xff]
    %v1009 = vld [vmem:[%s1001 + $0x38] sm:$0xff]
    %v1010 = vpack.c.bf16 %v1000, %v1000
    %s1011 = scalar_lea.vmem %s17, 2
    %v1012 = vld [vmem:[%s1011] sm:$0x3]
    %v1014 = vlaneseq
    %v1015 = vshrl.u32 %v1014, 7
    %v1016 = vsub.s32 0, %v1015
    %v1017 = vrot.slane %v1012, %v1016
    %v1018 = vlaneseq
    %v1019 = vshrl.u32 %v1018, 7
    %v1020 = vsub.s32 1, %v1019
    %v1021 = vrot.slane %v1012, %v1020
    %v1032 = vunpack.c.l.b16 %v1002
    %v1033 = vunpack.c.h.b16 %v1002
    %v1034 = vunpack.c.l.b16 %v1003
    %v1035 = vunpack.c.h.b16 %v1003
    %v1036 = vunpack.c.l.b16 %v1004
    %v1037 = vunpack.c.h.b16 %v1004
    %v1038 = vunpack.c.l.b16 %v1005
    %v1039 = vunpack.c.h.b16 %v1005
    %v1040 = vunpack.c.l.b16 %v1006
    %v1041 = vunpack.c.h.b16 %v1006
    %v1042 = vunpack.c.l.b16 %v1007
    %v1043 = vunpack.c.h.b16 %v1007
    %v1044 = vunpack.c.l.b16 %v1008
    %v1045 = vunpack.c.h.b16 %v1008
    %v1046 = vunpack.c.l.b16 %v1009
    %v1047 = vunpack.c.h.b16 %v1009
    %v1048 = vpack.c.b16 %v1034, %v1032
    %v1049 = vpack.c.b16 %v1035, %v1033
    %v1050 = vpack.c.b16 %v1038, %v1036
    %v1051 = vpack.c.b16 %v1039, %v1037
    %v1052 = vpack.c.b16 %v1042, %v1040
    %v1053 = vpack.c.b16 %v1043, %v1041
    %v1054 = vpack.c.b16 %v1046, %v1044
    %v1055 = vpack.c.b16 %v1047, %v1045
    %v1065 = vsel %vm219, %v1010, 0
    %1067 = vmatprep.subr.bf16.mxu0 %v1049
    %1068 = vmatpush1.bf16.msra.mxu0 %v1048
    %1069 = vmatprep.subr.bf16.mxu0 %v1051
    %1070 = vmatpush1.bf16.msra.mxu0 %v1050
    %1071 = vmatprep.subr.bf16.mxu0 %v1053
    %1072 = vmatpush1.bf16.msra.mxu0 %v1052
    %1073 = vmatprep.subr.bf16.mxu0 %v1055
    %1074 = vmatpush1.bf16.msra.mxu0 %v1054
    %1075 = vmatprep.subr.bf16.mxu0 0
    %1076 = vmatpush1.bf16.msra.mxu0 0
    %1077 = vmatprep.subr.bf16.mxu0 0
    %1078 = vmatpush1.bf16.msra.mxu0 0
    %1079 = vmatprep.subr.bf16.mxu0 0
    %1080 = vmatpush1.bf16.msra.mxu0 0
    %1081 = vmatprep.subr.bf16.mxu0 0
    %1082 = vmatpush1.bf16.msra.mxu0 0
    %1083 = vmatprep.subr.bf16.mxu0 0
    %1084 = vmatpush1.bf16.msra.mxu0 0
    %1085 = vmatprep.subr.bf16.mxu0 0
    %1086 = vmatpush1.bf16.msra.mxu0 0
    %1087 = vmatprep.subr.bf16.mxu0 0
    %1088 = vmatpush1.bf16.msra.mxu0 0
    %1089 = vmatprep.subr.bf16.mxu0 0
    %1090 = vmatpush1.bf16.msra.mxu0 0
    %1091 = vmatprep.subr.bf16.mxu0 0
    %1092 = vmatpush1.bf16.msra.mxu0 0
    %1093 = vmatprep.subr.bf16.mxu0 0
    %1094 = vmatpush1.bf16.msra.mxu0 0
    %1095 = vmatprep.subr.bf16.mxu0 0
    %1096 = vmatpush1.bf16.msra.mxu0 0
    %1097 = vmatprep.subr.bf16.mxu0 0
    %1098 = vmatpush1.bf16.msra.mxu0 0
    %1099 = vmatprep.mubr.bf16.mxu0 0
    %1100 = vmatmul.mubr.bf16.gmra.mrb[0].mxu0 %v1065
    %v1101 = vpop.f32.mrb[0].mxu0
    %v1102 = vadd.f32 %v1017, %v1101
    %v1103 = vpop.f32.mrb[0].mxu0
    %v1104 = vadd.f32 %v1021, %v1103
    %v1105 = vpop.f32.mrb[0].mxu0
    %v1106 = vpop.f32.mrb[0].mxu0
    %1107 = vdwg.mxu0
    %v1108 = vxor.u32 %v1102, 2147483648
    %v1109 = vmul.f32 %v1108, 1.442695
    %v1110 = vpow.pop %v1109
    %v1111 = vadd.f32 %v1110, 1.0
    %v1112 = vrcp.pop %v1111
    %v1113 = vmul.f32 1.0, %v1112
    %v1114 = vmul.f32 %v1102, %v1113
    %s1115 = scalar_lea.vmem %s19, 4
    %v1116 = vld [vmem:[%s1115] sm:$0xf]
    %v1117 = vlaneseq
    %v1118 = vshrl.u32 %v1117, 7
    %v1119 = vsub.s32 3, %v1118
    %v1120 = vrot.slane %v1116, %v1119
    %v1121 = vmul.f32 %v1114, %v1120
    %s1122 = scalar_lea.vmem %s21, 1
    %v1123 = vld [vmem:[%s1122] sm:$0x1]
    %v1125 = vlaneseq
    %v1126 = vshrl.u32 %v1125, 7
    %v1127 = vsub.s32 0, %v1126
    %v1128 = vrot.slane %v1123, %v1127
    %v1130 = vadd.f32 %v1121, %v1128
    %v1131 = vrot.slane %v1114, 7
    %v1132 = vsel %vm512, %v1131, 0.0
    %v1133 = vlaneseq
    %v1134 = vshrl.u32 %v1133, 7
    %v1135 = vsub.s32 2, %v1134
    %v1136 = vrot.slane %v1116, %v1135
    %v1137 = vmul.f32 %v1132, %v1136
    %v1138 = vadd.f32 %v1130, %v1137
    %v1139 = vrot.slane %v1114, 6
    %v1140 = vsel %vm521, %v1139, 0.0
    %v1141 = vlaneseq
    %v1142 = vshrl.u32 %v1141, 7
    %v1143 = vsub.s32 1, %v1142
    %v1144 = vrot.slane %v1116, %v1143
    %v1145 = vmul.f32 %v1140, %v1144
    %v1146 = vadd.f32 %v1138, %v1145
    %v1147 = vrot.slane %v1114, 5
    %v1148 = vsel %vm530, %v1147, 0.0
    %v1149 = vlaneseq
    %v1150 = vshrl.u32 %v1149, 7
    %v1151 = vsub.s32 0, %v1150
    %v1152 = vrot.slane %v1116, %v1151
    %v1153 = vmul.f32 %v1148, %v1152
    %v1154 = vadd.f32 %v1146, %v1153
    %v1155 = vxor.u32 %v1154, 2147483648
    %v1156 = vmul.f32 %v1155, 1.442695
    %v1157 = vpow.pop %v1156
    %v1158 = vadd.f32 %v1157, 1.0
    %v1159 = vrcp.pop %v1158
    %v1160 = vmul.f32 1.0, %v1159
    %v1161 = vmul.f32 %v1154, %v1160
    %s1162 = scalar_lea.vmem [#allocation2], 64
    %v1163 = vld [vmem:[%s1162] sm:$0xf]
    %v1164 = vld [vmem:[%s1162 + $0x4] sm:$0xf]
    %v1165 = vld [vmem:[%s1162 + $0x8] sm:$0xf]
    %v1166 = vld [vmem:[%s1162 + $0xc] sm:$0xf]
    %v1167 = vld [vmem:[%s1162 + $0x10] sm:$0xf]
    %v1168 = vld [vmem:[%s1162 + $0x14] sm:$0xf]
    %v1169 = vld [vmem:[%s1162 + $0x18] sm:$0xf]
    %v1170 = vld [vmem:[%s1162 + $0x1c] sm:$0xf]
    %v1171 = vld [vmem:[%s1162 + $0x20] sm:$0xf]
    %v1172 = vld [vmem:[%s1162 + $0x24] sm:$0xf]
    %v1173 = vld [vmem:[%s1162 + $0x28] sm:$0xf]
    %v1174 = vld [vmem:[%s1162 + $0x2c] sm:$0xf]
    %v1175 = vld [vmem:[%s1162 + $0x30] sm:$0xf]
    %v1176 = vld [vmem:[%s1162 + $0x34] sm:$0xf]
    %v1177 = vld [vmem:[%s1162 + $0x38] sm:$0xf]
    %v1178 = vld [vmem:[%s1162 + $0x3c] sm:$0xf]
    %v1179 = vpack.c.bf16 %v1161, %v1161
    %s1180 = scalar_lea.vmem %s25, 1
    %v1181 = vld [vmem:[%s1180] sm:$0x1]
    %v1183 = vlaneseq
    %v1184 = vshrl.u32 %v1183, 7
    %v1185 = vsub.s32 0, %v1184
    %v1186 = vrot.slane %v1181, %v1185
    %v1204 = vunpack.c.l.b16 %v1163
    %v1205 = vunpack.c.l.b16 %v1164
    %v1206 = vunpack.c.l.b16 %v1165
    %v1207 = vunpack.c.l.b16 %v1166
    %v1208 = vunpack.c.l.b16 %v1167
    %v1209 = vunpack.c.l.b16 %v1168
    %v1210 = vunpack.c.l.b16 %v1169
    %v1211 = vunpack.c.l.b16 %v1170
    %v1212 = vunpack.c.l.b16 %v1171
    %v1213 = vunpack.c.l.b16 %v1172
    %v1214 = vunpack.c.l.b16 %v1173
    %v1215 = vunpack.c.l.b16 %v1174
    %v1216 = vunpack.c.l.b16 %v1175
    %v1217 = vunpack.c.l.b16 %v1176
    %v1218 = vunpack.c.l.b16 %v1177
    %v1219 = vunpack.c.l.b16 %v1178
    %v1220 = vpack.c.b16 %v1205, %v1204
    %v1221 = vpack.c.b16 %v1207, %v1206
    %v1222 = vpack.c.b16 %v1209, %v1208
    %v1223 = vpack.c.b16 %v1211, %v1210
    %v1224 = vpack.c.b16 %v1213, %v1212
    %v1225 = vpack.c.b16 %v1215, %v1214
    %v1226 = vpack.c.b16 %v1217, %v1216
    %v1227 = vpack.c.b16 %v1219, %v1218
    %1236 = vmatprep.subr.bf16.mxu0 0
    %1237 = vmatpush1.bf16.msra.mxu0 %v1220
    %1238 = vmatprep.subr.bf16.mxu0 0
    %1239 = vmatpush1.bf16.msra.mxu0 %v1221
    %1240 = vmatprep.subr.bf16.mxu0 0
    %1241 = vmatpush1.bf16.msra.mxu0 %v1222
    %1242 = vmatprep.subr.bf16.mxu0 0
    %1243 = vmatpush1.bf16.msra.mxu0 %v1223
    %1244 = vmatprep.subr.bf16.mxu0 0
    %1245 = vmatpush1.bf16.msra.mxu0 %v1224
    %1246 = vmatprep.subr.bf16.mxu0 0
    %1247 = vmatpush1.bf16.msra.mxu0 %v1225
    %1248 = vmatprep.subr.bf16.mxu0 0
    %1249 = vmatpush1.bf16.msra.mxu0 %v1226
    %1250 = vmatprep.subr.bf16.mxu0 0
    %1251 = vmatpush1.bf16.msra.mxu0 %v1227
    %1252 = vmatprep.subr.bf16.mxu0 0
    %1253 = vmatpush1.bf16.msra.mxu0 0
    %1254 = vmatprep.subr.bf16.mxu0 0
    %1255 = vmatpush1.bf16.msra.mxu0 0
    %1256 = vmatprep.subr.bf16.mxu0 0
    %1257 = vmatpush1.bf16.msra.mxu0 0
    %1258 = vmatprep.subr.bf16.mxu0 0
    %1259 = vmatpush1.bf16.msra.mxu0 0
    %1260 = vmatprep.subr.bf16.mxu0 0
    %1261 = vmatpush1.bf16.msra.mxu0 0
    %1262 = vmatprep.subr.bf16.mxu0 0
    %1263 = vmatpush1.bf16.msra.mxu0 0
    %1264 = vmatprep.subr.bf16.mxu0 0
    %1265 = vmatpush1.bf16.msra.mxu0 0
    %1266 = vmatprep.subr.bf16.mxu0 0
    %1267 = vmatpush1.bf16.msra.mxu0 0
    %1268 = vmatprep.mubr.bf16.mxu0 0
    %1269 = vmatmul.mubr.bf16.gmra.mrb[0].mxu0 %v1179
    %v1270 = vpop.f32.mrb[0].mxu0
    %v1271 = vadd.f32 %v1186, %v1270
    %v1272 = vpop.f32.mrb[0].mxu0
    %v1273 = vpop.f32.mrb[0].mxu0
    %v1274 = vpop.f32.mrb[0].mxu0
    %1275 = vdwg.mxu0
    %v1276 = vmax.f32 %v1271, 0.0
    %vm1277 = vcmp.ne.f32.partialorder %v1271, %v1271
    %v1278 = vadd.f32 %v1271, 0.0
    %v1279 = vand.u32 2147483647, %v1271
    %v1280 = vsub.f32 0.0, %v1279
    %v1281 = vmul.f32 %v1280, 1.442695
    %v1282 = vpow.pop %v1281
    %v1283 = vadd.f32 %v1282, 1.0
    %v1284 = vlog2.pop %v1283
    %v1285 = vmul.f32 %v1284, 0.6931472
    %v1286 = vmul.f32 -0.5, %v1282
    %v1287 = vadd.f32 %v1286, 1.0
    %v1288 = vmul.f32 %v1287, %v1282
    %v1289 = vand.u32 2147483647, %v1282
    %vm1290 = vcmp.lt.f32.partialorder %v1289, 0.0004427343
    %v1291 = vsel %vm1290, %v1288, %v1285
    %v1292 = vadd.f32 %v1276, %v1291
    %v1293 = vsel %vm1277, %v1278, %v1292
    %v1294 = vxor.u32 %v1293, 2147483648
    %v1295 = vmul.f32 %v1294, 1.442695
    %v1296 = vpow.pop %v1295
    %v1297 = vadd.f32 %v1296, 1.0
    %v1298 = vrcp.pop %v1297
    %v1299 = vmul.f32 1.0, %v1298
    %v1300 = vsub.f32 1.0, %v1299
    %v1301 = vsel %vm681, 0.0, %v1300
    %v1302 = vmul.f32 %v1299, %v1161
    %v1303 = vsel %vm681, %v1161, %v1302
    %v1304 = vrot.slane %v1301, 7
    %v1305 = vsel %vm512, %v1304, 1.0
    %v1306 = vrot.slane %v1303, 7
    %v1307 = vsel %vm512, %v1306, 0.0
    %v1308 = vmul.f32 %v1301, %v1307
    %v1309 = vadd.f32 %v1308, %v1303
    %v1310 = vmul.f32 %v1301, %v1305
    %v1311 = vrot.slane %v1310, 6
    %v1312 = vsel %vm521, %v1311, 1.0
    %v1313 = vrot.slane %v1309, 6
    %v1314 = vsel %vm521, %v1313, 0.0
    %v1315 = vmul.f32 %v1310, %v1314
    %v1316 = vadd.f32 %v1315, %v1309
    %v1317 = vmul.f32 %v1310, %v1312
    %v1318 = vrot.slane %v1316, 4
    %v1319 = vsel %vm700, %v1318, 0.0
    %v1320 = vmul.f32 %v1317, %v1319
    %v1321 = vadd.f32 %v1320, %v1316
    %s1322 = scalar_lea.vmem %s27, 1
    %v1323 = vld [vmem:[%s1322] sm:$0x1]
    %v1325 = vlaneseq
    %v1326 = vshrl.u32 %v1325, 7
    %v1327 = vsub.s32 0, %v1326
    %v1328 = vrot.slane %v1323, %v1327
    %v1330 = vmul.f32 %v1161, %v1328
    %v1331 = vadd.f32 %v1321, %v1330
    %v1332 = vxor.u32 %v1104, 2147483648
    %v1333 = vmul.f32 %v1332, 1.442695
    %v1334 = vpow.pop %v1333
    %v1335 = vadd.f32 %v1334, 1.0
    %v1336 = vrcp.pop %v1335
    %v1337 = vmul.f32 1.0, %v1336
    %v1338 = vmul.f32 %v1104, %v1337
    %v1339 = vmul.f32 %v1331, %v1338
    %s1340 = scalar_lea.vmem %s29, 64
    %v1341 = vld [vmem:[%s1340] sm:$0xf]
    %v1342 = vld [vmem:[%s1340 + $0x4] sm:$0xf]
    %v1343 = vld [vmem:[%s1340 + $0x8] sm:$0xf]
    %v1344 = vld [vmem:[%s1340 + $0xc] sm:$0xf]
    %v1345 = vld [vmem:[%s1340 + $0x10] sm:$0xf]
    %v1346 = vld [vmem:[%s1340 + $0x14] sm:$0xf]
    %v1347 = vld [vmem:[%s1340 + $0x18] sm:$0xf]
    %v1348 = vld [vmem:[%s1340 + $0x1c] sm:$0xf]
    %v1349 = vld [vmem:[%s1340 + $0x20] sm:$0xf]
    %v1350 = vld [vmem:[%s1340 + $0x24] sm:$0xf]
    %v1351 = vld [vmem:[%s1340 + $0x28] sm:$0xf]
    %v1352 = vld [vmem:[%s1340 + $0x2c] sm:$0xf]
    %v1353 = vld [vmem:[%s1340 + $0x30] sm:$0xf]
    %v1354 = vld [vmem:[%s1340 + $0x34] sm:$0xf]
    %v1355 = vld [vmem:[%s1340 + $0x38] sm:$0xf]
    %v1356 = vld [vmem:[%s1340 + $0x3c] sm:$0xf]
    %v1357 = vpack.c.bf16 %v1339, %v1339
    %s1358 = scalar_lea.vmem %s31, 1
    %v1359 = vld [vmem:[%s1358] sm:$0x1]
    %v1361 = vlaneseq
    %v1362 = vshrl.u32 %v1361, 7
    %v1363 = vsub.s32 0, %v1362
    %v1364 = vrot.slane %v1359, %v1363
    %v1382 = vunpack.c.l.b16 %v1341
    %v1383 = vunpack.c.l.b16 %v1342
    %v1384 = vunpack.c.l.b16 %v1343
    %v1385 = vunpack.c.l.b16 %v1344
    %v1386 = vunpack.c.l.b16 %v1345
    %v1387 = vunpack.c.l.b16 %v1346
    %v1388 = vunpack.c.l.b16 %v1347
    %v1389 = vunpack.c.l.b16 %v1348
    %v1390 = vunpack.c.l.b16 %v1349
    %v1391 = vunpack.c.l.b16 %v1350
    %v1392 = vunpack.c.l.b16 %v1351
    %v1393 = vunpack.c.l.b16 %v1352
    %v1394 = vunpack.c.l.b16 %v1353
    %v1395 = vunpack.c.l.b16 %v1354
    %v1396 = vunpack.c.l.b16 %v1355
    %v1397 = vunpack.c.l.b16 %v1356
    %v1398 = vpack.c.b16 %v1383, %v1382
    %v1399 = vpack.c.b16 %v1385, %v1384
    %v1400 = vpack.c.b16 %v1387, %v1386
    %v1401 = vpack.c.b16 %v1389, %v1388
    %v1402 = vpack.c.b16 %v1391, %v1390
    %v1403 = vpack.c.b16 %v1393, %v1392
    %v1404 = vpack.c.b16 %v1395, %v1394
    %v1405 = vpack.c.b16 %v1397, %v1396
    %1414 = vmatprep.subr.bf16.mxu0 0
    %1415 = vmatpush1.bf16.msra.mxu0 %v1398
    %1416 = vmatprep.subr.bf16.mxu0 0
    %1417 = vmatpush1.bf16.msra.mxu0 %v1399
    %1418 = vmatprep.subr.bf16.mxu0 0
    %1419 = vmatpush1.bf16.msra.mxu0 %v1400
    %1420 = vmatprep.subr.bf16.mxu0 0
    %1421 = vmatpush1.bf16.msra.mxu0 %v1401
    %1422 = vmatprep.subr.bf16.mxu0 0
    %1423 = vmatpush1.bf16.msra.mxu0 %v1402
    %1424 = vmatprep.subr.bf16.mxu0 0
    %1425 = vmatpush1.bf16.msra.mxu0 %v1403
    %1426 = vmatprep.subr.bf16.mxu0 0
    %1427 = vmatpush1.bf16.msra.mxu0 %v1404
    %1428 = vmatprep.subr.bf16.mxu0 0
    %1429 = vmatpush1.bf16.msra.mxu0 %v1405
    %1430 = vmatprep.subr.bf16.mxu0 0
    %1431 = vmatpush1.bf16.msra.mxu0 0
    %1432 = vmatprep.subr.bf16.mxu0 0
    %1433 = vmatpush1.bf16.msra.mxu0 0
    %1434 = vmatprep.subr.bf16.mxu0 0
    %1435 = vmatpush1.bf16.msra.mxu0 0
    %1436 = vmatprep.subr.bf16.mxu0 0
    %1437 = vmatpush1.bf16.msra.mxu0 0
    %1438 = vmatprep.subr.bf16.mxu0 0
    %1439 = vmatpush1.bf16.msra.mxu0 0
    %1440 = vmatprep.subr.bf16.mxu0 0
    %1441 = vmatpush1.bf16.msra.mxu0 0
    %1442 = vmatprep.subr.bf16.mxu0 0
    %1443 = vmatpush1.bf16.msra.mxu0 0
    %1444 = vmatprep.subr.bf16.mxu0 0
    %1445 = vmatpush1.bf16.msra.mxu0 0
    %1446 = vmatprep.mubr.bf16.mxu0 0
    %1447 = vmatmul.mubr.bf16.gmra.mrb[0].mxu0 %v1357
    %v1448 = vpop.f32.mrb[0].mxu0
    %v1449 = vadd.f32 %v1364, %v1448
    %v1450 = vpop.f32.mrb[0].mxu0
    %v1451 = vpop.f32.mrb[0].mxu0
    %v1452 = vpop.f32.mrb[0].mxu0
    %1453 = vdwg.mxu0
    %v1454 = vadd.f32 %v1449, %v1000
    %s1455 = scalar_lea.vmem %s33, 1
    %v1456 = vld [vmem:[%s1455] sm:$0x1]
    %s1457 = scalar_lea.vmem %s35, 1
    %v1458 = vld [vmem:[%s1457] sm:$0x1]
    %v1460 = vsel %vm219, %v1454, 0
    %1462 = vmatprep.subr.mxu0 0.0
    %1463 = vmatpush1.msra.mxu0 %v146
    %1464 = vmatprep.subr.mxu0 0.0
    %1465 = vmatpush1.msra.mxu0 %v147
    %1466 = vmatprep.subr.mxu0 0.0
    %1467 = vmatpush1.msra.mxu0 %v148
    %1468 = vmatprep.subr.mxu0 0.0
    %1469 = vmatpush1.msra.mxu0 %v149
    %1470 = vmatprep.subr.mxu0 0.0
    %1471 = vmatpush1.msra.mxu0 %v150
    %1472 = vmatprep.subr.mxu0 0.0
    %1473 = vmatpush1.msra.mxu0 %v151
    %1474 = vmatprep.subr.mxu0 0.0
    %1475 = vmatpush1.msra.mxu0 %v152
    %1476 = vmatprep.subr.mxu0 0.0
    %1477 = vmatpush1.msra.mxu0 %v153
    %1478 = vmatprep.subr.mxu0 0.0
    %1479 = vmatpush1.msra.mxu0 0.0
    %1480 = vmatprep.subr.mxu0 0.0
    %1481 = vmatpush1.msra.mxu0 0.0
    %1482 = vmatprep.subr.mxu0 0.0
    %1483 = vmatpush1.msra.mxu0 0.0
    %1484 = vmatprep.subr.mxu0 0.0
    %1485 = vmatpush1.msra.mxu0 0.0
    %1486 = vmatprep.subr.mxu0 0.0
    %1487 = vmatpush1.msra.mxu0 0.0
    %1488 = vmatprep.subr.mxu0 0.0
    %1489 = vmatpush1.msra.mxu0 0.0
    %1490 = vmatprep.subr.mxu0 0.0
    %1491 = vmatpush1.msra.mxu0 0.0
    %1492 = vmatprep.subr.mxu0 0.0
    %1493 = vmatpush1.msra.mxu0 0.0
    %1494 = vmatprep.subr.mxu0 0.0
    %1495 = vmatpush1.msra.mxu0 0.0
    %1496 = vmatprep.subr.mxu0 0.0
    %1497 = vmatpush1.msra.mxu0 0.0
    %1498 = vmatprep.subr.mxu0 0.0
    %1499 = vmatpush1.msra.mxu0 0.0
    %1500 = vmatprep.subr.mxu0 0.0
    %1501 = vmatpush1.msra.mxu0 0.0
    %1502 = vmatprep.subr.mxu0 0.0
    %1503 = vmatpush1.msra.mxu0 0.0
    %1504 = vmatprep.subr.mxu0 0.0
    %1505 = vmatpush1.msra.mxu0 0.0
    %1506 = vmatprep.subr.mxu0 0.0
    %1507 = vmatpush1.msra.mxu0 0.0
    %1508 = vmatprep.subr.mxu0 0.0
    %1509 = vmatpush1.msra.mxu0 0.0
    %1510 = vmatprep.subr.mxu0 0.0
    %1511 = vmatpush1.msra.mxu0 0.0
    %1512 = vmatprep.subr.mxu0 0.0
    %1513 = vmatpush1.msra.mxu0 0.0
    %1514 = vmatprep.subr.mxu0 0.0
    %1515 = vmatpush1.msra.mxu0 0.0
    %1516 = vmatprep.subr.mxu0 0.0
    %1517 = vmatpush1.msra.mxu0 0.0
    %1518 = vmatprep.subr.mxu0 0.0
    %1519 = vmatpush1.msra.mxu0 0.0
    %1520 = vmatprep.subr.mxu0 0.0
    %1521 = vmatpush1.msra.mxu0 0.0
    %1522 = vmatprep.subr.mxu0 0.0
    %1523 = vmatpush1.msra.mxu0 0.0
    %1524 = vmatprep.subr.mxu0 0.0
    %1525 = vmatpush1.msra.mxu0 0.0
    %1526 = vmatprep.mubr.f32.mxu0 0.0
    %1527 = vmatmul.mubr.f32.gmra.mrb[0].mxu0 %v1460
    %v1528 = vpop.f32.mrb[0].mxu0
    %v1529 = vadd.f32 0.0, %v1528
    %v1530 = vpop.f32.mrb[0].mxu0
    %1531 = vdwg.mxu0
    %v1532 = vsub.f32 %v1454, %v1529
    %v1533 = vmul.f32 %v1532, %v1532
    %v1535 = vsel %vm219, %v1533, 0
    %1537 = vmatprep.subr.mxu0 0.0
    %1538 = vmatpush1.msra.mxu0 %v146
    %1539 = vmatprep.subr.mxu0 0.0
    %1540 = vmatpush1.msra.mxu0 %v147
    %1541 = vmatprep.subr.mxu0 0.0
    %1542 = vmatpush1.msra.mxu0 %v148
    %1543 = vmatprep.subr.mxu0 0.0
    %1544 = vmatpush1.msra.mxu0 %v149
    %1545 = vmatprep.subr.mxu0 0.0
    %1546 = vmatpush1.msra.mxu0 %v150
    %1547 = vmatprep.subr.mxu0 0.0
    %1548 = vmatpush1.msra.mxu0 %v151
    %1549 = vmatprep.subr.mxu0 0.0
    %1550 = vmatpush1.msra.mxu0 %v152
    %1551 = vmatprep.subr.mxu0 0.0
    %1552 = vmatpush1.msra.mxu0 %v153
    %1553 = vmatprep.subr.mxu0 0.0
    %1554 = vmatpush1.msra.mxu0 0.0
    %1555 = vmatprep.subr.mxu0 0.0
    %1556 = vmatpush1.msra.mxu0 0.0
    %1557 = vmatprep.subr.mxu0 0.0
    %1558 = vmatpush1.msra.mxu0 0.0
    %1559 = vmatprep.subr.mxu0 0.0
    %1560 = vmatpush1.msra.mxu0 0.0
    %1561 = vmatprep.subr.mxu0 0.0
    %1562 = vmatpush1.msra.mxu0 0.0
    %1563 = vmatprep.subr.mxu0 0.0
    %1564 = vmatpush1.msra.mxu0 0.0
    %1565 = vmatprep.subr.mxu0 0.0
    %1566 = vmatpush1.msra.mxu0 0.0
    %1567 = vmatprep.subr.mxu0 0.0
    %1568 = vmatpush1.msra.mxu0 0.0
    %1569 = vmatprep.subr.mxu0 0.0
    %1570 = vmatpush1.msra.mxu0 0.0
    %1571 = vmatprep.subr.mxu0 0.0
    %1572 = vmatpush1.msra.mxu0 0.0
    %1573 = vmatprep.subr.mxu0 0.0
    %1574 = vmatpush1.msra.mxu0 0.0
    %1575 = vmatprep.subr.mxu0 0.0
    %1576 = vmatpush1.msra.mxu0 0.0
    %1577 = vmatprep.subr.mxu0 0.0
    %1578 = vmatpush1.msra.mxu0 0.0
    %1579 = vmatprep.subr.mxu0 0.0
    %1580 = vmatpush1.msra.mxu0 0.0
    %1581 = vmatprep.subr.mxu0 0.0
    %1582 = vmatpush1.msra.mxu0 0.0
    %1583 = vmatprep.subr.mxu0 0.0
    %1584 = vmatpush1.msra.mxu0 0.0
    %1585 = vmatprep.subr.mxu0 0.0
    %1586 = vmatpush1.msra.mxu0 0.0
    %1587 = vmatprep.subr.mxu0 0.0
    %1588 = vmatpush1.msra.mxu0 0.0
    %1589 = vmatprep.subr.mxu0 0.0
    %1590 = vmatpush1.msra.mxu0 0.0
    %1591 = vmatprep.subr.mxu0 0.0
    %1592 = vmatpush1.msra.mxu0 0.0
    %1593 = vmatprep.subr.mxu0 0.0
    %1594 = vmatpush1.msra.mxu0 0.0
    %1595 = vmatprep.subr.mxu0 0.0
    %1596 = vmatpush1.msra.mxu0 0.0
    %1597 = vmatprep.subr.mxu0 0.0
    %1598 = vmatpush1.msra.mxu0 0.0
    %1599 = vmatprep.subr.mxu0 0.0
    %1600 = vmatpush1.msra.mxu0 0.0
    %1601 = vmatprep.mubr.f32.mxu0 0.0
    %1602 = vmatmul.mubr.f32.gmra.mrb[0].mxu0 %v1535
    %v1603 = vpop.f32.mrb[0].mxu0
    %v1604 = vadd.f32 1e-05, %v1603
    %v1605 = vpop.f32.mrb[0].mxu0
    %1606 = vdwg.mxu0
    %v1607 = vrsqrt.pop %v1604
    %v1608 = vmul.f32 %v1532, %v1607
    %v1610 = vlaneseq
    %v1611 = vshrl.u32 %v1610, 7
    %v1612 = vsub.s32 0, %v1611
    %v1613 = vrot.slane %v1456, %v1612
    %v1615 = vmul.f32 %v1608, %v1613
    %v1617 = vlaneseq
    %v1618 = vshrl.u32 %v1617, 7
    %v1619 = vsub.s32 0, %v1618
    %v1620 = vrot.slane %v1458, %v1619
    %v1622 = vadd.f32 %v1615, %v1620
    %s1623 = scalar_lea.vmem %s15, 128
    %v1624 = vld [vmem:[%s1623] sm:$0xff]
    %v1625 = vld [vmem:[%s1623 + $0x8] sm:$0xff]
    %v1626 = vld [vmem:[%s1623 + $0x10] sm:$0xff]
    %v1627 = vld [vmem:[%s1623 + $0x18] sm:$0xff]
    %v1628 = vld [vmem:[%s1623 + $0x20] sm:$0xff]
    %v1629 = vld [vmem:[%s1623 + $0x28] sm:$0xff]
    %v1630 = vld [vmem:[%s1623 + $0x30] sm:$0xff]
    %v1631 = vld [vmem:[%s1623 + $0x38] sm:$0xff]
    %v1632 = vpack.c.bf16 %v1622, %v1622
    %s1633 = scalar_lea.vmem %s17, 4
    %v1634 = vld [vmem:[%s1633] sm:$0x3]
    %v1636 = vlaneseq
    %v1637 = vshrl.u32 %v1636, 7
    %v1638 = vsub.s32 0, %v1637
    %v1639 = vrot.slane %v1634, %v1638
    %v1640 = vlaneseq
    %v1641 = vshrl.u32 %v1640, 7
    %v1642 = vsub.s32 1, %v1641
    %v1643 = vrot.slane %v1634, %v1642
    %v1654 = vunpack.c.l.b16 %v1624
    %v1655 = vunpack.c.h.b16 %v1624
    %v1656 = vunpack.c.l.b16 %v1625
    %v1657 = vunpack.c.h.b16 %v1625
    %v1658 = vunpack.c.l.b16 %v1626
    %v1659 = vunpack.c.h.b16 %v1626
    %v1660 = vunpack.c.l.b16 %v1627
    %v1661 = vunpack.c.h.b16 %v1627
    %v1662 = vunpack.c.l.b16 %v1628
    %v1663 = vunpack.c.h.b16 %v1628
    %v1664 = vunpack.c.l.b16 %v1629
    %v1665 = vunpack.c.h.b16 %v1629
    %v1666 = vunpack.c.l.b16 %v1630
    %v1667 = vunpack.c.h.b16 %v1630
    %v1668 = vunpack.c.l.b16 %v1631
    %v1669 = vunpack.c.h.b16 %v1631
    %v1670 = vpack.c.b16 %v1656, %v1654
    %v1671 = vpack.c.b16 %v1657, %v1655
    %v1672 = vpack.c.b16 %v1660, %v1658
    %v1673 = vpack.c.b16 %v1661, %v1659
    %v1674 = vpack.c.b16 %v1664, %v1662
    %v1675 = vpack.c.b16 %v1665, %v1663
    %v1676 = vpack.c.b16 %v1668, %v1666
    %v1677 = vpack.c.b16 %v1669, %v1667
    %v1687 = vsel %vm219, %v1632, 0
    %1689 = vmatprep.subr.bf16.mxu0 %v1671
    %1690 = vmatpush1.bf16.msra.mxu0 %v1670
    %1691 = vmatprep.subr.bf16.mxu0 %v1673
    %1692 = vmatpush1.bf16.msra.mxu0 %v1672
    %1693 = vmatprep.subr.bf16.mxu0 %v1675
    %1694 = vmatpush1.bf16.msra.mxu0 %v1674
    %1695 = vmatprep.subr.bf16.mxu0 %v1677
    %1696 = vmatpush1.bf16.msra.mxu0 %v1676
    %1697 = vmatprep.subr.bf16.mxu0 0
    %1698 = vmatpush1.bf16.msra.mxu0 0
    %1699 = vmatprep.subr.bf16.mxu0 0
    %1700 = vmatpush1.bf16.msra.mxu0 0
    %1701 = vmatprep.subr.bf16.mxu0 0
    %1702 = vmatpush1.bf16.msra.mxu0 0
    %1703 = vmatprep.subr.bf16.mxu0 0
    %1704 = vmatpush1.bf16.msra.mxu0 0
    %1705 = vmatprep.subr.bf16.mxu0 0
    %1706 = vmatpush1.bf16.msra.mxu0 0
    %1707 = vmatprep.subr.bf16.mxu0 0
    %1708 = vmatpush1.bf16.msra.mxu0 0
    %1709 = vmatprep.subr.bf16.mxu0 0
    %1710 = vmatpush1.bf16.msra.mxu0 0
    %1711 = vmatprep.subr.bf16.mxu0 0
    %1712 = vmatpush1.bf16.msra.mxu0 0
    %1713 = vmatprep.subr.bf16.mxu0 0
    %1714 = vmatpush1.bf16.msra.mxu0 0
    %1715 = vmatprep.subr.bf16.mxu0 0
    %1716 = vmatpush1.bf16.msra.mxu0 0
    %1717 = vmatprep.subr.bf16.mxu0 0
    %1718 = vmatpush1.bf16.msra.mxu0 0
    %1719 = vmatprep.subr.bf16.mxu0 0
    %1720 = vmatpush1.bf16.msra.mxu0 0
    %1721 = vmatprep.mubr.bf16.mxu0 0
    %1722 = vmatmul.mubr.bf16.gmra.mrb[0].mxu0 %v1687
    %v1723 = vpop.f32.mrb[0].mxu0
    %v1724 = vadd.f32 %v1639, %v1723
    %v1725 = vpop.f32.mrb[0].mxu0
    %v1726 = vadd.f32 %v1643, %v1725
    %v1727 = vpop.f32.mrb[0].mxu0
    %v1728 = vpop.f32.mrb[0].mxu0
    %1729 = vdwg.mxu0
    %v1730 = vxor.u32 %v1724, 2147483648
    %v1731 = vmul.f32 %v1730, 1.442695
    %v1732 = vpow.pop %v1731
    %v1733 = vadd.f32 %v1732, 1.0
    %v1734 = vrcp.pop %v1733
    %v1735 = vmul.f32 1.0, %v1734
    %v1736 = vmul.f32 %v1724, %v1735
    %s1737 = scalar_lea.vmem %s19, 8
    %v1738 = vld [vmem:[%s1737] sm:$0xf]
    %v1739 = vlaneseq
    %v1740 = vshrl.u32 %v1739, 7
    %v1741 = vsub.s32 3, %v1740
    %v1742 = vrot.slane %v1738, %v1741
    %v1743 = vmul.f32 %v1736, %v1742
    %s1744 = scalar_lea.vmem %s21, 2
    %v1745 = vld [vmem:[%s1744] sm:$0x1]
    %v1747 = vlaneseq
    %v1748 = vshrl.u32 %v1747, 7
    %v1749 = vsub.s32 0, %v1748
    %v1750 = vrot.slane %v1745, %v1749
    %v1752 = vadd.f32 %v1743, %v1750
    %v1753 = vrot.slane %v1736, 7
    %v1754 = vsel %vm512, %v1753, 0.0
    %v1755 = vlaneseq
    %v1756 = vshrl.u32 %v1755, 7
    %v1757 = vsub.s32 2, %v1756
    %v1758 = vrot.slane %v1738, %v1757
    %v1759 = vmul.f32 %v1754, %v1758
    %v1760 = vadd.f32 %v1752, %v1759
    %v1761 = vrot.slane %v1736, 6
    %v1762 = vsel %vm521, %v1761, 0.0
    %v1763 = vlaneseq
    %v1764 = vshrl.u32 %v1763, 7
    %v1765 = vsub.s32 1, %v1764
    %v1766 = vrot.slane %v1738, %v1765
    %v1767 = vmul.f32 %v1762, %v1766
    %v1768 = vadd.f32 %v1760, %v1767
    %v1769 = vrot.slane %v1736, 5
    %v1770 = vsel %vm530, %v1769, 0.0
    %v1771 = vlaneseq
    %v1772 = vshrl.u32 %v1771, 7
    %v1773 = vsub.s32 0, %v1772
    %v1774 = vrot.slane %v1738, %v1773
    %v1775 = vmul.f32 %v1770, %v1774
    %v1776 = vadd.f32 %v1768, %v1775
    %v1777 = vxor.u32 %v1776, 2147483648
    %v1778 = vmul.f32 %v1777, 1.442695
    %v1779 = vpow.pop %v1778
    %v1780 = vadd.f32 %v1779, 1.0
    %v1781 = vrcp.pop %v1780
    %v1782 = vmul.f32 1.0, %v1781
    %v1783 = vmul.f32 %v1776, %v1782
    %s1784 = scalar_lea.vmem [#allocation2], 128
    %v1785 = vld [vmem:[%s1784] sm:$0xf]
    %v1786 = vld [vmem:[%s1784 + $0x4] sm:$0xf]
    %v1787 = vld [vmem:[%s1784 + $0x8] sm:$0xf]
    %v1788 = vld [vmem:[%s1784 + $0xc] sm:$0xf]
    %v1789 = vld [vmem:[%s1784 + $0x10] sm:$0xf]
    %v1790 = vld [vmem:[%s1784 + $0x14] sm:$0xf]
    %v1791 = vld [vmem:[%s1784 + $0x18] sm:$0xf]
    %v1792 = vld [vmem:[%s1784 + $0x1c] sm:$0xf]
    %v1793 = vld [vmem:[%s1784 + $0x20] sm:$0xf]
    %v1794 = vld [vmem:[%s1784 + $0x24] sm:$0xf]
    %v1795 = vld [vmem:[%s1784 + $0x28] sm:$0xf]
    %v1796 = vld [vmem:[%s1784 + $0x2c] sm:$0xf]
    %v1797 = vld [vmem:[%s1784 + $0x30] sm:$0xf]
    %v1798 = vld [vmem:[%s1784 + $0x34] sm:$0xf]
    %v1799 = vld [vmem:[%s1784 + $0x38] sm:$0xf]
    %v1800 = vld [vmem:[%s1784 + $0x3c] sm:$0xf]
    %v1801 = vpack.c.bf16 %v1783, %v1783
    %s1802 = scalar_lea.vmem %s25, 2
    %v1803 = vld [vmem:[%s1802] sm:$0x1]
    %v1805 = vlaneseq
    %v1806 = vshrl.u32 %v1805, 7
    %v1807 = vsub.s32 0, %v1806
    %v1808 = vrot.slane %v1803, %v1807
    %v1826 = vunpack.c.l.b16 %v1785
    %v1827 = vunpack.c.l.b16 %v1786
    %v1828 = vunpack.c.l.b16 %v1787
    %v1829 = vunpack.c.l.b16 %v1788
    %v1830 = vunpack.c.l.b16 %v1789
    %v1831 = vunpack.c.l.b16 %v1790
    %v1832 = vunpack.c.l.b16 %v1791
    %v1833 = vunpack.c.l.b16 %v1792
    %v1834 = vunpack.c.l.b16 %v1793
    %v1835 = vunpack.c.l.b16 %v1794
    %v1836 = vunpack.c.l.b16 %v1795
    %v1837 = vunpack.c.l.b16 %v1796
    %v1838 = vunpack.c.l.b16 %v1797
    %v1839 = vunpack.c.l.b16 %v1798
    %v1840 = vunpack.c.l.b16 %v1799
    %v1841 = vunpack.c.l.b16 %v1800
    %v1842 = vpack.c.b16 %v1827, %v1826
    %v1843 = vpack.c.b16 %v1829, %v1828
    %v1844 = vpack.c.b16 %v1831, %v1830
    %v1845 = vpack.c.b16 %v1833, %v1832
    %v1846 = vpack.c.b16 %v1835, %v1834
    %v1847 = vpack.c.b16 %v1837, %v1836
    %v1848 = vpack.c.b16 %v1839, %v1838
    %v1849 = vpack.c.b16 %v1841, %v1840
    %1858 = vmatprep.subr.bf16.mxu0 0
    %1859 = vmatpush1.bf16.msra.mxu0 %v1842
    %1860 = vmatprep.subr.bf16.mxu0 0
    %1861 = vmatpush1.bf16.msra.mxu0 %v1843
    %1862 = vmatprep.subr.bf16.mxu0 0
    %1863 = vmatpush1.bf16.msra.mxu0 %v1844
    %1864 = vmatprep.subr.bf16.mxu0 0
    %1865 = vmatpush1.bf16.msra.mxu0 %v1845
    %1866 = vmatprep.subr.bf16.mxu0 0
    %1867 = vmatpush1.bf16.msra.mxu0 %v1846
    %1868 = vmatprep.subr.bf16.mxu0 0
    %1869 = vmatpush1.bf16.msra.mxu0 %v1847
    %1870 = vmatprep.subr.bf16.mxu0 0
    %1871 = vmatpush1.bf16.msra.mxu0 %v1848
    %1872 = vmatprep.subr.bf16.mxu0 0
    %1873 = vmatpush1.bf16.msra.mxu0 %v1849
    %1874 = vmatprep.subr.bf16.mxu0 0
    %1875 = vmatpush1.bf16.msra.mxu0 0
    %1876 = vmatprep.subr.bf16.mxu0 0
    %1877 = vmatpush1.bf16.msra.mxu0 0
    %1878 = vmatprep.subr.bf16.mxu0 0
    %1879 = vmatpush1.bf16.msra.mxu0 0
    %1880 = vmatprep.subr.bf16.mxu0 0
    %1881 = vmatpush1.bf16.msra.mxu0 0
    %1882 = vmatprep.subr.bf16.mxu0 0
    %1883 = vmatpush1.bf16.msra.mxu0 0
    %1884 = vmatprep.subr.bf16.mxu0 0
    %1885 = vmatpush1.bf16.msra.mxu0 0
    %1886 = vmatprep.subr.bf16.mxu0 0
    %1887 = vmatpush1.bf16.msra.mxu0 0
    %1888 = vmatprep.subr.bf16.mxu0 0
    %1889 = vmatpush1.bf16.msra.mxu0 0
    %1890 = vmatprep.mubr.bf16.mxu0 0
    %1891 = vmatmul.mubr.bf16.gmra.mrb[0].mxu0 %v1801
    %v1892 = vpop.f32.mrb[0].mxu0
    %v1893 = vadd.f32 %v1808, %v1892
    %v1894 = vpop.f32.mrb[0].mxu0
    %v1895 = vpop.f32.mrb[0].mxu0
    %v1896 = vpop.f32.mrb[0].mxu0
    %1897 = vdwg.mxu0
    %v1898 = vmax.f32 %v1893, 0.0
    %vm1899 = vcmp.ne.f32.partialorder %v1893, %v1893
    %v1900 = vadd.f32 %v1893, 0.0
    %v1901 = vand.u32 2147483647, %v1893
    %v1902 = vsub.f32 0.0, %v1901
    %v1903 = vmul.f32 %v1902, 1.442695
    %v1904 = vpow.pop %v1903
    %v1905 = vadd.f32 %v1904, 1.0
    %v1906 = vlog2.pop %v1905
    %v1907 = vmul.f32 %v1906, 0.6931472
    %v1908 = vmul.f32 -0.5, %v1904
    %v1909 = vadd.f32 %v1908, 1.0
    %v1910 = vmul.f32 %v1909, %v1904
    %v1911 = vand.u32 2147483647, %v1904
    %vm1912 = vcmp.lt.f32.partialorder %v1911, 0.0004427343
    %v1913 = vsel %vm1912, %v1910, %v1907
    %v1914 = vadd.f32 %v1898, %v1913
    %v1915 = vsel %vm1899, %v1900, %v1914
    %v1916 = vxor.u32 %v1915, 2147483648
    %v1917 = vmul.f32 %v1916, 1.442695
    %v1918 = vpow.pop %v1917
    %v1919 = vadd.f32 %v1918, 1.0
    %v1920 = vrcp.pop %v1919
    %v1921 = vmul.f32 1.0, %v1920
    %v1922 = vsub.f32 1.0, %v1921
    %v1923 = vsel %vm681, 0.0, %v1922
    %v1924 = vmul.f32 %v1921, %v1783
    %v1925 = vsel %vm681, %v1783, %v1924
    %v1926 = vrot.slane %v1923, 7
    %v1927 = vsel %vm512, %v1926, 1.0
    %v1928 = vrot.slane %v1925, 7
    %v1929 = vsel %vm512, %v1928, 0.0
    %v1930 = vmul.f32 %v1923, %v1929
    %v1931 = vadd.f32 %v1930, %v1925
    %v1932 = vmul.f32 %v1923, %v1927
    %v1933 = vrot.slane %v1932, 6
    %v1934 = vsel %vm521, %v1933, 1.0
    %v1935 = vrot.slane %v1931, 6
    %v1936 = vsel %vm521, %v1935, 0.0
    %v1937 = vmul.f32 %v1932, %v1936
    %v1938 = vadd.f32 %v1937, %v1931
    %v1939 = vmul.f32 %v1932, %v1934
    %v1940 = vrot.slane %v1938, 4
    %v1941 = vsel %vm700, %v1940, 0.0
    %v1942 = vmul.f32 %v1939, %v1941
    %v1943 = vadd.f32 %v1942, %v1938
    %s1944 = scalar_lea.vmem %s27, 2
    %v1945 = vld [vmem:[%s1944] sm:$0x1]
    %v1947 = vlaneseq
    %v1948 = vshrl.u32 %v1947, 7
    %v1949 = vsub.s32 0, %v1948
    %v1950 = vrot.slane %v1945, %v1949
    %v1952 = vmul.f32 %v1783, %v1950
    %v1953 = vadd.f32 %v1943, %v1952
    %v1954 = vxor.u32 %v1726, 2147483648
    %v1955 = vmul.f32 %v1954, 1.442695
    %v1956 = vpow.pop %v1955
    %v1957 = vadd.f32 %v1956, 1.0
    %v1958 = vrcp.pop %v1957
    %v1959 = vmul.f32 1.0, %v1958
    %v1960 = vmul.f32 %v1726, %v1959
    %v1961 = vmul.f32 %v1953, %v1960
    %s1962 = scalar_lea.vmem %s29, 128
    %v1963 = vld [vmem:[%s1962] sm:$0xf]
    %v1964 = vld [vmem:[%s1962 + $0x4] sm:$0xf]
    %v1965 = vld [vmem:[%s1962 + $0x8] sm:$0xf]
    %v1966 = vld [vmem:[%s1962 + $0xc] sm:$0xf]
    %v1967 = vld [vmem:[%s1962 + $0x10] sm:$0xf]
    %v1968 = vld [vmem:[%s1962 + $0x14] sm:$0xf]
    %v1969 = vld [vmem:[%s1962 + $0x18] sm:$0xf]
    %v1970 = vld [vmem:[%s1962 + $0x1c] sm:$0xf]
    %v1971 = vld [vmem:[%s1962 + $0x20] sm:$0xf]
    %v1972 = vld [vmem:[%s1962 + $0x24] sm:$0xf]
    %v1973 = vld [vmem:[%s1962 + $0x28] sm:$0xf]
    %v1974 = vld [vmem:[%s1962 + $0x2c] sm:$0xf]
    %v1975 = vld [vmem:[%s1962 + $0x30] sm:$0xf]
    %v1976 = vld [vmem:[%s1962 + $0x34] sm:$0xf]
    %v1977 = vld [vmem:[%s1962 + $0x38] sm:$0xf]
    %v1978 = vld [vmem:[%s1962 + $0x3c] sm:$0xf]
    %v1979 = vpack.c.bf16 %v1961, %v1961
    %s1980 = scalar_lea.vmem %s31, 2
    %v1981 = vld [vmem:[%s1980] sm:$0x1]
    %v1983 = vlaneseq
    %v1984 = vshrl.u32 %v1983, 7
    %v1985 = vsub.s32 0, %v1984
    %v1986 = vrot.slane %v1981, %v1985
    %v2004 = vunpack.c.l.b16 %v1963
    %v2005 = vunpack.c.l.b16 %v1964
    %v2006 = vunpack.c.l.b16 %v1965
    %v2007 = vunpack.c.l.b16 %v1966
    %v2008 = vunpack.c.l.b16 %v1967
    %v2009 = vunpack.c.l.b16 %v1968
    %v2010 = vunpack.c.l.b16 %v1969
    %v2011 = vunpack.c.l.b16 %v1970
    %v2012 = vunpack.c.l.b16 %v1971
    %v2013 = vunpack.c.l.b16 %v1972
    %v2014 = vunpack.c.l.b16 %v1973
    %v2015 = vunpack.c.l.b16 %v1974
    %v2016 = vunpack.c.l.b16 %v1975
    %v2017 = vunpack.c.l.b16 %v1976
    %v2018 = vunpack.c.l.b16 %v1977
    %v2019 = vunpack.c.l.b16 %v1978
    %v2020 = vpack.c.b16 %v2005, %v2004
    %v2021 = vpack.c.b16 %v2007, %v2006
    %v2022 = vpack.c.b16 %v2009, %v2008
    %v2023 = vpack.c.b16 %v2011, %v2010
    %v2024 = vpack.c.b16 %v2013, %v2012
    %v2025 = vpack.c.b16 %v2015, %v2014
    %v2026 = vpack.c.b16 %v2017, %v2016
    %v2027 = vpack.c.b16 %v2019, %v2018
    %2036 = vmatprep.subr.bf16.mxu0 0
    %2037 = vmatpush1.bf16.msra.mxu0 %v2020
    %2038 = vmatprep.subr.bf16.mxu0 0
    %2039 = vmatpush1.bf16.msra.mxu0 %v2021
    %2040 = vmatprep.subr.bf16.mxu0 0
    %2041 = vmatpush1.bf16.msra.mxu0 %v2022
    %2042 = vmatprep.subr.bf16.mxu0 0
    %2043 = vmatpush1.bf16.msra.mxu0 %v2023
    %2044 = vmatprep.subr.bf16.mxu0 0
    %2045 = vmatpush1.bf16.msra.mxu0 %v2024
    %2046 = vmatprep.subr.bf16.mxu0 0
    %2047 = vmatpush1.bf16.msra.mxu0 %v2025
    %2048 = vmatprep.subr.bf16.mxu0 0
    %2049 = vmatpush1.bf16.msra.mxu0 %v2026
    %2050 = vmatprep.subr.bf16.mxu0 0
    %2051 = vmatpush1.bf16.msra.mxu0 %v2027
    %2052 = vmatprep.subr.bf16.mxu0 0
    %2053 = vmatpush1.bf16.msra.mxu0 0
    %2054 = vmatprep.subr.bf16.mxu0 0
    %2055 = vmatpush1.bf16.msra.mxu0 0
    %2056 = vmatprep.subr.bf16.mxu0 0
    %2057 = vmatpush1.bf16.msra.mxu0 0
    %2058 = vmatprep.subr.bf16.mxu0 0
    %2059 = vmatpush1.bf16.msra.mxu0 0
    %2060 = vmatprep.subr.bf16.mxu0 0
    %2061 = vmatpush1.bf16.msra.mxu0 0
    %2062 = vmatprep.subr.bf16.mxu0 0
    %2063 = vmatpush1.bf16.msra.mxu0 0
    %2064 = vmatprep.subr.bf16.mxu0 0
    %2065 = vmatpush1.bf16.msra.mxu0 0
    %2066 = vmatprep.subr.bf16.mxu0 0
    %2067 = vmatpush1.bf16.msra.mxu0 0
    %2068 = vmatprep.mubr.bf16.mxu0 0
    %2069 = vmatmul.mubr.bf16.gmra.mrb[0].mxu0 %v1979
    %v2070 = vpop.f32.mrb[0].mxu0
    %v2071 = vadd.f32 %v1986, %v2070
    %v2072 = vpop.f32.mrb[0].mxu0
    %v2073 = vpop.f32.mrb[0].mxu0
    %v2074 = vpop.f32.mrb[0].mxu0
    %2075 = vdwg.mxu0
    %v2076 = vadd.f32 %v2071, %v1622
    %s2077 = scalar_lea.vmem %s33, 2
    %v2078 = vld [vmem:[%s2077] sm:$0x1]
    %s2079 = scalar_lea.vmem %s35, 2
    %v2080 = vld [vmem:[%s2079] sm:$0x1]
    %v2082 = vsel %vm219, %v2076, 0
    %2084 = vmatprep.subr.mxu0 0.0
    %2085 = vmatpush1.msra.mxu0 %v146
    %2086 = vmatprep.subr.mxu0 0.0
    %2087 = vmatpush1.msra.mxu0 %v147
    %2088 = vmatprep.subr.mxu0 0.0
    %2089 = vmatpush1.msra.mxu0 %v148
    %2090 = vmatprep.subr.mxu0 0.0
    %2091 = vmatpush1.msra.mxu0 %v149
    %2092 = vmatprep.subr.mxu0 0.0
    %2093 = vmatpush1.msra.mxu0 %v150
    %2094 = vmatprep.subr.mxu0 0.0
    %2095 = vmatpush1.msra.mxu0 %v151
    %2096 = vmatprep.subr.mxu0 0.0
    %2097 = vmatpush1.msra.mxu0 %v152
    %2098 = vmatprep.subr.mxu0 0.0
    %2099 = vmatpush1.msra.mxu0 %v153
    %2100 = vmatprep.subr.mxu0 0.0
    %2101 = vmatpush1.msra.mxu0 0.0
    %2102 = vmatprep.subr.mxu0 0.0
    %2103 = vmatpush1.msra.mxu0 0.0
    %2104 = vmatprep.subr.mxu0 0.0
    %2105 = vmatpush1.msra.mxu0 0.0
    %2106 = vmatprep.subr.mxu0 0.0
    %2107 = vmatpush1.msra.mxu0 0.0
    %2108 = vmatprep.subr.mxu0 0.0
    %2109 = vmatpush1.msra.mxu0 0.0
    %2110 = vmatprep.subr.mxu0 0.0
    %2111 = vmatpush1.msra.mxu0 0.0
    %2112 = vmatprep.subr.mxu0 0.0
    %2113 = vmatpush1.msra.mxu0 0.0
    %2114 = vmatprep.subr.mxu0 0.0
    %2115 = vmatpush1.msra.mxu0 0.0
    %2116 = vmatprep.subr.mxu0 0.0
    %2117 = vmatpush1.msra.mxu0 0.0
    %2118 = vmatprep.subr.mxu0 0.0
    %2119 = vmatpush1.msra.mxu0 0.0
    %2120 = vmatprep.subr.mxu0 0.0
    %2121 = vmatpush1.msra.mxu0 0.0
    %2122 = vmatprep.subr.mxu0 0.0
    %2123 = vmatpush1.msra.mxu0 0.0
    %2124 = vmatprep.subr.mxu0 0.0
    %2125 = vmatpush1.msra.mxu0 0.0
    %2126 = vmatprep.subr.mxu0 0.0
    %2127 = vmatpush1.msra.mxu0 0.0
    %2128 = vmatprep.subr.mxu0 0.0
    %2129 = vmatpush1.msra.mxu0 0.0
    %2130 = vmatprep.subr.mxu0 0.0
    %2131 = vmatpush1.msra.mxu0 0.0
    %2132 = vmatprep.subr.mxu0 0.0
    %2133 = vmatpush1.msra.mxu0 0.0
    %2134 = vmatprep.subr.mxu0 0.0
    %2135 = vmatpush1.msra.mxu0 0.0
    %2136 = vmatprep.subr.mxu0 0.0
    %2137 = vmatpush1.msra.mxu0 0.0
    %2138 = vmatprep.subr.mxu0 0.0
    %2139 = vmatpush1.msra.mxu0 0.0
    %2140 = vmatprep.subr.mxu0 0.0
    %2141 = vmatpush1.msra.mxu0 0.0
    %2142 = vmatprep.subr.mxu0 0.0
    %2143 = vmatpush1.msra.mxu0 0.0
    %2144 = vmatprep.subr.mxu0 0.0
    %2145 = vmatpush1.msra.mxu0 0.0
    %2146 = vmatprep.subr.mxu0 0.0
    %2147 = vmatpush1.msra.mxu0 0.0
    %2148 = vmatprep.mubr.f32.mxu0 0.0
    %2149 = vmatmul.mubr.f32.gmra.mrb[0].mxu0 %v2082
    %v2150 = vpop.f32.mrb[0].mxu0
    %v2151 = vadd.f32 0.0, %v2150
    %v2152 = vpop.f32.mrb[0].mxu0
    %2153 = vdwg.mxu0
    %v2154 = vsub.f32 %v2076, %v2151
    %v2155 = vmul.f32 %v2154, %v2154
    %v2157 = vsel %vm219, %v2155, 0
    %2159 = vmatprep.subr.mxu0 0.0
    %2160 = vmatpush1.msra.mxu0 %v146
    %2161 = vmatprep.subr.mxu0 0.0
    %2162 = vmatpush1.msra.mxu0 %v147
    %2163 = vmatprep.subr.mxu0 0.0
    %2164 = vmatpush1.msra.mxu0 %v148
    %2165 = vmatprep.subr.mxu0 0.0
    %2166 = vmatpush1.msra.mxu0 %v149
    %2167 = vmatprep.subr.mxu0 0.0
    %2168 = vmatpush1.msra.mxu0 %v150
    %2169 = vmatprep.subr.mxu0 0.0
    %2170 = vmatpush1.msra.mxu0 %v151
    %2171 = vmatprep.subr.mxu0 0.0
    %2172 = vmatpush1.msra.mxu0 %v152
    %2173 = vmatprep.subr.mxu0 0.0
    %2174 = vmatpush1.msra.mxu0 %v153
    %2175 = vmatprep.subr.mxu0 0.0
    %2176 = vmatpush1.msra.mxu0 0.0
    %2177 = vmatprep.subr.mxu0 0.0
    %2178 = vmatpush1.msra.mxu0 0.0
    %2179 = vmatprep.subr.mxu0 0.0
    %2180 = vmatpush1.msra.mxu0 0.0
    %2181 = vmatprep.subr.mxu0 0.0
    %2182 = vmatpush1.msra.mxu0 0.0
    %2183 = vmatprep.subr.mxu0 0.0
    %2184 = vmatpush1.msra.mxu0 0.0
    %2185 = vmatprep.subr.mxu0 0.0
    %2186 = vmatpush1.msra.mxu0 0.0
    %2187 = vmatprep.subr.mxu0 0.0
    %2188 = vmatpush1.msra.mxu0 0.0
    %2189 = vmatprep.subr.mxu0 0.0
    %2190 = vmatpush1.msra.mxu0 0.0
    %2191 = vmatprep.subr.mxu0 0.0
    %2192 = vmatpush1.msra.mxu0 0.0
    %2193 = vmatprep.subr.mxu0 0.0
    %2194 = vmatpush1.msra.mxu0 0.0
    %2195 = vmatprep.subr.mxu0 0.0
    %2196 = vmatpush1.msra.mxu0 0.0
    %2197 = vmatprep.subr.mxu0 0.0
    %2198 = vmatpush1.msra.mxu0 0.0
    %2199 = vmatprep.subr.mxu0 0.0
    %2200 = vmatpush1.msra.mxu0 0.0
    %2201 = vmatprep.subr.mxu0 0.0
    %2202 = vmatpush1.msra.mxu0 0.0
    %2203 = vmatprep.subr.mxu0 0.0
    %2204 = vmatpush1.msra.mxu0 0.0
    %2205 = vmatprep.subr.mxu0 0.0
    %2206 = vmatpush1.msra.mxu0 0.0
    %2207 = vmatprep.subr.mxu0 0.0
    %2208 = vmatpush1.msra.mxu0 0.0
    %2209 = vmatprep.subr.mxu0 0.0
    %2210 = vmatpush1.msra.mxu0 0.0
    %2211 = vmatprep.subr.mxu0 0.0
    %2212 = vmatpush1.msra.mxu0 0.0
    %2213 = vmatprep.subr.mxu0 0.0
    %2214 = vmatpush1.msra.mxu0 0.0
    %2215 = vmatprep.subr.mxu0 0.0
    %2216 = vmatpush1.msra.mxu0 0.0
    %2217 = vmatprep.subr.mxu0 0.0
    %2218 = vmatpush1.msra.mxu0 0.0
    %2219 = vmatprep.subr.mxu0 0.0
    %2220 = vmatpush1.msra.mxu0 0.0
    %2221 = vmatprep.subr.mxu0 0.0
    %2222 = vmatpush1.msra.mxu0 0.0
    %2223 = vmatprep.mubr.f32.mxu0 0.0
    %2224 = vmatmul.mubr.f32.gmra.mrb[0].mxu0 %v2157
    %v2225 = vpop.f32.mrb[0].mxu0
    %v2226 = vadd.f32 1e-05, %v2225
    %v2227 = vpop.f32.mrb[0].mxu0
    %2228 = vdwg.mxu0
    %v2229 = vrsqrt.pop %v2226
    %v2230 = vmul.f32 %v2154, %v2229
    %v2232 = vlaneseq
    %v2233 = vshrl.u32 %v2232, 7
    %v2234 = vsub.s32 0, %v2233
    %v2235 = vrot.slane %v2078, %v2234
    %v2237 = vmul.f32 %v2230, %v2235
    %v2239 = vlaneseq
    %v2240 = vshrl.u32 %v2239, 7
    %v2241 = vsub.s32 0, %v2240
    %v2242 = vrot.slane %v2080, %v2241
    %v2244 = vadd.f32 %v2237, %v2242
    %s2245 = scalar_lea.vmem %s15, 192
    %v2246 = vld [vmem:[%s2245] sm:$0xff]
    %v2247 = vld [vmem:[%s2245 + $0x8] sm:$0xff]
    %v2248 = vld [vmem:[%s2245 + $0x10] sm:$0xff]
    %v2249 = vld [vmem:[%s2245 + $0x18] sm:$0xff]
    %v2250 = vld [vmem:[%s2245 + $0x20] sm:$0xff]
    %v2251 = vld [vmem:[%s2245 + $0x28] sm:$0xff]
    %v2252 = vld [vmem:[%s2245 + $0x30] sm:$0xff]
    %v2253 = vld [vmem:[%s2245 + $0x38] sm:$0xff]
    %v2254 = vpack.c.bf16 %v2244, %v2244
    %s2255 = scalar_lea.vmem %s17, 6
    %v2256 = vld [vmem:[%s2255] sm:$0x3]
    %v2258 = vlaneseq
    %v2259 = vshrl.u32 %v2258, 7
    %v2260 = vsub.s32 0, %v2259
    %v2261 = vrot.slane %v2256, %v2260
    %v2262 = vlaneseq
    %v2263 = vshrl.u32 %v2262, 7
    %v2264 = vsub.s32 1, %v2263
    %v2265 = vrot.slane %v2256, %v2264
    %v2276 = vunpack.c.l.b16 %v2246
    %v2277 = vunpack.c.h.b16 %v2246
    %v2278 = vunpack.c.l.b16 %v2247
    %v2279 = vunpack.c.h.b16 %v2247
    %v2280 = vunpack.c.l.b16 %v2248
    %v2281 = vunpack.c.h.b16 %v2248
    %v2282 = vunpack.c.l.b16 %v2249
    %v2283 = vunpack.c.h.b16 %v2249
    %v2284 = vunpack.c.l.b16 %v2250
    %v2285 = vunpack.c.h.b16 %v2250
    %v2286 = vunpack.c.l.b16 %v2251
    %v2287 = vunpack.c.h.b16 %v2251
    %v2288 = vunpack.c.l.b16 %v2252
    %v2289 = vunpack.c.h.b16 %v2252
    %v2290 = vunpack.c.l.b16 %v2253
    %v2291 = vunpack.c.h.b16 %v2253
    %v2292 = vpack.c.b16 %v2278, %v2276
    %v2293 = vpack.c.b16 %v2279, %v2277
    %v2294 = vpack.c.b16 %v2282, %v2280
    %v2295 = vpack.c.b16 %v2283, %v2281
    %v2296 = vpack.c.b16 %v2286, %v2284
    %v2297 = vpack.c.b16 %v2287, %v2285
    %v2298 = vpack.c.b16 %v2290, %v2288
    %v2299 = vpack.c.b16 %v2291, %v2289
    %v2309 = vsel %vm219, %v2254, 0
    %2311 = vmatprep.subr.bf16.mxu0 %v2293
    %2312 = vmatpush1.bf16.msra.mxu0 %v2292
    %2313 = vmatprep.subr.bf16.mxu0 %v2295
    %2314 = vmatpush1.bf16.msra.mxu0 %v2294
    %2315 = vmatprep.subr.bf16.mxu0 %v2297
    %2316 = vmatpush1.bf16.msra.mxu0 %v2296
    %2317 = vmatprep.subr.bf16.mxu0 %v2299
    %2318 = vmatpush1.bf16.msra.mxu0 %v2298
    %2319 = vmatprep.subr.bf16.mxu0 0
    %2320 = vmatpush1.bf16.msra.mxu0 0
    %2321 = vmatprep.subr.bf16.mxu0 0
    %2322 = vmatpush1.bf16.msra.mxu0 0
    %2323 = vmatprep.subr.bf16.mxu0 0
    %2324 = vmatpush1.bf16.msra.mxu0 0
    %2325 = vmatprep.subr.bf16.mxu0 0
    %2326 = vmatpush1.bf16.msra.mxu0 0
    %2327 = vmatprep.subr.bf16.mxu0 0
    %2328 = vmatpush1.bf16.msra.mxu0 0
    %2329 = vmatprep.subr.bf16.mxu0 0
    %2330 = vmatpush1.bf16.msra.mxu0 0
    %2331 = vmatprep.subr.bf16.mxu0 0
    %2332 = vmatpush1.bf16.msra.mxu0 0
    %2333 = vmatprep.subr.bf16.mxu0 0
    %2334 = vmatpush1.bf16.msra.mxu0 0
    %2335 = vmatprep.subr.bf16.mxu0 0
    %2336 = vmatpush1.bf16.msra.mxu0 0
    %2337 = vmatprep.subr.bf16.mxu0 0
    %2338 = vmatpush1.bf16.msra.mxu0 0
    %2339 = vmatprep.subr.bf16.mxu0 0
    %2340 = vmatpush1.bf16.msra.mxu0 0
    %2341 = vmatprep.subr.bf16.mxu0 0
    %2342 = vmatpush1.bf16.msra.mxu0 0
    %2343 = vmatprep.mubr.bf16.mxu0 0
    %2344 = vmatmul.mubr.bf16.gmra.mrb[0].mxu0 %v2309
    %v2345 = vpop.f32.mrb[0].mxu0
    %v2346 = vadd.f32 %v2261, %v2345
    %v2347 = vpop.f32.mrb[0].mxu0
    %v2348 = vadd.f32 %v2265, %v2347
    %v2349 = vpop.f32.mrb[0].mxu0
    %v2350 = vpop.f32.mrb[0].mxu0
    %2351 = vdwg.mxu0
    %v2352 = vxor.u32 %v2346, 2147483648
    %v2353 = vmul.f32 %v2352, 1.442695
    %v2354 = vpow.pop %v2353
    %v2355 = vadd.f32 %v2354, 1.0
    %v2356 = vrcp.pop %v2355
    %v2357 = vmul.f32 1.0, %v2356
    %v2358 = vmul.f32 %v2346, %v2357
    %s2359 = scalar_lea.vmem %s19, 12
    %v2360 = vld [vmem:[%s2359] sm:$0xf]
    %v2361 = vlaneseq
    %v2362 = vshrl.u32 %v2361, 7
    %v2363 = vsub.s32 3, %v2362
    %v2364 = vrot.slane %v2360, %v2363
    %v2365 = vmul.f32 %v2358, %v2364
    %s2366 = scalar_lea.vmem %s21, 3
    %v2367 = vld [vmem:[%s2366] sm:$0x1]
    %v2369 = vlaneseq
    %v2370 = vshrl.u32 %v2369, 7
    %v2371 = vsub.s32 0, %v2370
    %v2372 = vrot.slane %v2367, %v2371
    %v2374 = vadd.f32 %v2365, %v2372
    %v2375 = vrot.slane %v2358, 7
    %v2376 = vsel %vm512, %v2375, 0.0
    %v2377 = vlaneseq
    %v2378 = vshrl.u32 %v2377, 7
    %v2379 = vsub.s32 2, %v2378
    %v2380 = vrot.slane %v2360, %v2379
    %v2381 = vmul.f32 %v2376, %v2380
    %v2382 = vadd.f32 %v2374, %v2381
    %v2383 = vrot.slane %v2358, 6
    %v2384 = vsel %vm521, %v2383, 0.0
    %v2385 = vlaneseq
    %v2386 = vshrl.u32 %v2385, 7
    %v2387 = vsub.s32 1, %v2386
    %v2388 = vrot.slane %v2360, %v2387
    %v2389 = vmul.f32 %v2384, %v2388
    %v2390 = vadd.f32 %v2382, %v2389
    %v2391 = vrot.slane %v2358, 5
    %v2392 = vsel %vm530, %v2391, 0.0
    %v2393 = vlaneseq
    %v2394 = vshrl.u32 %v2393, 7
    %v2395 = vsub.s32 0, %v2394
    %v2396 = vrot.slane %v2360, %v2395
    %v2397 = vmul.f32 %v2392, %v2396
    %v2398 = vadd.f32 %v2390, %v2397
    %v2399 = vxor.u32 %v2398, 2147483648
    %v2400 = vmul.f32 %v2399, 1.442695
    %v2401 = vpow.pop %v2400
    %v2402 = vadd.f32 %v2401, 1.0
    %v2403 = vrcp.pop %v2402
    %v2404 = vmul.f32 1.0, %v2403
    %v2405 = vmul.f32 %v2398, %v2404
    %s2406 = scalar_lea.vmem [#allocation2], 192
    %v2407 = vld [vmem:[%s2406] sm:$0xf]
    %v2408 = vld [vmem:[%s2406 + $0x4] sm:$0xf]
    %v2409 = vld [vmem:[%s2406 + $0x8] sm:$0xf]
    %v2410 = vld [vmem:[%s2406 + $0xc] sm:$0xf]
    %v2411 = vld [vmem:[%s2406 + $0x10] sm:$0xf]
    %v2412 = vld [vmem:[%s2406 + $0x14] sm:$0xf]
    %v2413 = vld [vmem:[%s2406 + $0x18] sm:$0xf]
    %v2414 = vld [vmem:[%s2406 + $0x1c] sm:$0xf]
    %v2415 = vld [vmem:[%s2406 + $0x20] sm:$0xf]
    %v2416 = vld [vmem:[%s2406 + $0x24] sm:$0xf]
    %v2417 = vld [vmem:[%s2406 + $0x28] sm:$0xf]
    %v2418 = vld [vmem:[%s2406 + $0x2c] sm:$0xf]
    %v2419 = vld [vmem:[%s2406 + $0x30] sm:$0xf]
    %v2420 = vld [vmem:[%s2406 + $0x34] sm:$0xf]
    %v2421 = vld [vmem:[%s2406 + $0x38] sm:$0xf]
    %v2422 = vld [vmem:[%s2406 + $0x3c] sm:$0xf]
    %v2423 = vpack.c.bf16 %v2405, %v2405
    %s2424 = scalar_lea.vmem %s25, 3
    %v2425 = vld [vmem:[%s2424] sm:$0x1]
    %v2427 = vlaneseq
    %v2428 = vshrl.u32 %v2427, 7
    %v2429 = vsub.s32 0, %v2428
    %v2430 = vrot.slane %v2425, %v2429
    %v2448 = vunpack.c.l.b16 %v2407
    %v2449 = vunpack.c.l.b16 %v2408
    %v2450 = vunpack.c.l.b16 %v2409
    %v2451 = vunpack.c.l.b16 %v2410
    %v2452 = vunpack.c.l.b16 %v2411
    %v2453 = vunpack.c.l.b16 %v2412
    %v2454 = vunpack.c.l.b16 %v2413
    %v2455 = vunpack.c.l.b16 %v2414
    %v2456 = vunpack.c.l.b16 %v2415
    %v2457 = vunpack.c.l.b16 %v2416
    %v2458 = vunpack.c.l.b16 %v2417
    %v2459 = vunpack.c.l.b16 %v2418
    %v2460 = vunpack.c.l.b16 %v2419
    %v2461 = vunpack.c.l.b16 %v2420
    %v2462 = vunpack.c.l.b16 %v2421
    %v2463 = vunpack.c.l.b16 %v2422
    %v2464 = vpack.c.b16 %v2449, %v2448
    %v2465 = vpack.c.b16 %v2451, %v2450
    %v2466 = vpack.c.b16 %v2453, %v2452
    %v2467 = vpack.c.b16 %v2455, %v2454
    %v2468 = vpack.c.b16 %v2457, %v2456
    %v2469 = vpack.c.b16 %v2459, %v2458
    %v2470 = vpack.c.b16 %v2461, %v2460
    %v2471 = vpack.c.b16 %v2463, %v2462
    %2480 = vmatprep.subr.bf16.mxu0 0
    %2481 = vmatpush1.bf16.msra.mxu0 %v2464
    %2482 = vmatprep.subr.bf16.mxu0 0
    %2483 = vmatpush1.bf16.msra.mxu0 %v2465
    %2484 = vmatprep.subr.bf16.mxu0 0
    %2485 = vmatpush1.bf16.msra.mxu0 %v2466
    %2486 = vmatprep.subr.bf16.mxu0 0
    %2487 = vmatpush1.bf16.msra.mxu0 %v2467
    %2488 = vmatprep.subr.bf16.mxu0 0
    %2489 = vmatpush1.bf16.msra.mxu0 %v2468
    %2490 = vmatprep.subr.bf16.mxu0 0
    %2491 = vmatpush1.bf16.msra.mxu0 %v2469
    %2492 = vmatprep.subr.bf16.mxu0 0
    %2493 = vmatpush1.bf16.msra.mxu0 %v2470
    %2494 = vmatprep.subr.bf16.mxu0 0
    %2495 = vmatpush1.bf16.msra.mxu0 %v2471
    %2496 = vmatprep.subr.bf16.mxu0 0
    %2497 = vmatpush1.bf16.msra.mxu0 0
    %2498 = vmatprep.subr.bf16.mxu0 0
    %2499 = vmatpush1.bf16.msra.mxu0 0
    %2500 = vmatprep.subr.bf16.mxu0 0
    %2501 = vmatpush1.bf16.msra.mxu0 0
    %2502 = vmatprep.subr.bf16.mxu0 0
    %2503 = vmatpush1.bf16.msra.mxu0 0
    %2504 = vmatprep.subr.bf16.mxu0 0
    %2505 = vmatpush1.bf16.msra.mxu0 0
    %2506 = vmatprep.subr.bf16.mxu0 0
    %2507 = vmatpush1.bf16.msra.mxu0 0
    %2508 = vmatprep.subr.bf16.mxu0 0
    %2509 = vmatpush1.bf16.msra.mxu0 0
    %2510 = vmatprep.subr.bf16.mxu0 0
    %2511 = vmatpush1.bf16.msra.mxu0 0
    %2512 = vmatprep.mubr.bf16.mxu0 0
    %2513 = vmatmul.mubr.bf16.gmra.mrb[0].mxu0 %v2423
    %v2514 = vpop.f32.mrb[0].mxu0
    %v2515 = vadd.f32 %v2430, %v2514
    %v2516 = vpop.f32.mrb[0].mxu0
    %v2517 = vpop.f32.mrb[0].mxu0
    %v2518 = vpop.f32.mrb[0].mxu0
    %2519 = vdwg.mxu0
    %v2520 = vmax.f32 %v2515, 0.0
    %vm2521 = vcmp.ne.f32.partialorder %v2515, %v2515
    %v2522 = vadd.f32 %v2515, 0.0
    %v2523 = vand.u32 2147483647, %v2515
    %v2524 = vsub.f32 0.0, %v2523
    %v2525 = vmul.f32 %v2524, 1.442695
    %v2526 = vpow.pop %v2525
    %v2527 = vadd.f32 %v2526, 1.0
    %v2528 = vlog2.pop %v2527
    %v2529 = vmul.f32 %v2528, 0.6931472
    %v2530 = vmul.f32 -0.5, %v2526
    %v2531 = vadd.f32 %v2530, 1.0
    %v2532 = vmul.f32 %v2531, %v2526
    %v2533 = vand.u32 2147483647, %v2526
    %vm2534 = vcmp.lt.f32.partialorder %v2533, 0.0004427343
    %v2535 = vsel %vm2534, %v2532, %v2529
    %v2536 = vadd.f32 %v2520, %v2535
    %v2537 = vsel %vm2521, %v2522, %v2536
    %v2538 = vxor.u32 %v2537, 2147483648
    %v2539 = vmul.f32 %v2538, 1.442695
    %v2540 = vpow.pop %v2539
    %v2541 = vadd.f32 %v2540, 1.0
    %v2542 = vrcp.pop %v2541
    %v2543 = vmul.f32 1.0, %v2542
    %v2544 = vsub.f32 1.0, %v2543
    %v2545 = vsel %vm681, 0.0, %v2544
    %v2546 = vmul.f32 %v2543, %v2405
    %v2547 = vsel %vm681, %v2405, %v2546
    %v2548 = vrot.slane %v2545, 7
    %v2549 = vsel %vm512, %v2548, 1.0
    %v2550 = vrot.slane %v2547, 7
    %v2551 = vsel %vm512, %v2550, 0.0
    %v2552 = vmul.f32 %v2545, %v2551
    %v2553 = vadd.f32 %v2552, %v2547
    %v2554 = vmul.f32 %v2545, %v2549
    %v2555 = vrot.slane %v2554, 6
    %v2556 = vsel %vm521, %v2555, 1.0
    %v2557 = vrot.slane %v2553, 6
    %v2558 = vsel %vm521, %v2557, 0.0
    %v2559 = vmul.f32 %v2554, %v2558
    %v2560 = vadd.f32 %v2559, %v2553
    %v2561 = vmul.f32 %v2554, %v2556
    %v2562 = vrot.slane %v2560, 4
    %v2563 = vsel %vm700, %v2562, 0.0
    %v2564 = vmul.f32 %v2561, %v2563
    %v2565 = vadd.f32 %v2564, %v2560
    %s2566 = scalar_lea.vmem %s27, 3
    %v2567 = vld [vmem:[%s2566] sm:$0x1]
    %v2569 = vlaneseq
    %v2570 = vshrl.u32 %v2569, 7
    %v2571 = vsub.s32 0, %v2570
    %v2572 = vrot.slane %v2567, %v2571
    %v2574 = vmul.f32 %v2405, %v2572
    %v2575 = vadd.f32 %v2565, %v2574
    %v2576 = vxor.u32 %v2348, 2147483648
    %v2577 = vmul.f32 %v2576, 1.442695
    %v2578 = vpow.pop %v2577
    %v2579 = vadd.f32 %v2578, 1.0
    %v2580 = vrcp.pop %v2579
    %v2581 = vmul.f32 1.0, %v2580
    %v2582 = vmul.f32 %v2348, %v2581
    %v2583 = vmul.f32 %v2575, %v2582
    %s2584 = scalar_lea.vmem %s29, 192
    %v2585 = vld [vmem:[%s2584] sm:$0xf]
    %v2586 = vld [vmem:[%s2584 + $0x4] sm:$0xf]
    %v2587 = vld [vmem:[%s2584 + $0x8] sm:$0xf]
    %v2588 = vld [vmem:[%s2584 + $0xc] sm:$0xf]
    %v2589 = vld [vmem:[%s2584 + $0x10] sm:$0xf]
    %v2590 = vld [vmem:[%s2584 + $0x14] sm:$0xf]
    %v2591 = vld [vmem:[%s2584 + $0x18] sm:$0xf]
    %v2592 = vld [vmem:[%s2584 + $0x1c] sm:$0xf]
    %v2593 = vld [vmem:[%s2584 + $0x20] sm:$0xf]
    %v2594 = vld [vmem:[%s2584 + $0x24] sm:$0xf]
    %v2595 = vld [vmem:[%s2584 + $0x28] sm:$0xf]
    %v2596 = vld [vmem:[%s2584 + $0x2c] sm:$0xf]
    %v2597 = vld [vmem:[%s2584 + $0x30] sm:$0xf]
    %v2598 = vld [vmem:[%s2584 + $0x34] sm:$0xf]
    %v2599 = vld [vmem:[%s2584 + $0x38] sm:$0xf]
    %v2600 = vld [vmem:[%s2584 + $0x3c] sm:$0xf]
    %v2601 = vpack.c.bf16 %v2583, %v2583
    %s2602 = scalar_lea.vmem %s31, 3
    %v2603 = vld [vmem:[%s2602] sm:$0x1]
    %v2605 = vlaneseq
    %v2606 = vshrl.u32 %v2605, 7
    %v2607 = vsub.s32 0, %v2606
    %v2608 = vrot.slane %v2603, %v2607
    %v2626 = vunpack.c.l.b16 %v2585
    %v2627 = vunpack.c.l.b16 %v2586
    %v2628 = vunpack.c.l.b16 %v2587
    %v2629 = vunpack.c.l.b16 %v2588
    %v2630 = vunpack.c.l.b16 %v2589
    %v2631 = vunpack.c.l.b16 %v2590
    %v2632 = vunpack.c.l.b16 %v2591
    %v2633 = vunpack.c.l.b16 %v2592
    %v2634 = vunpack.c.l.b16 %v2593
    %v2635 = vunpack.c.l.b16 %v2594
    %v2636 = vunpack.c.l.b16 %v2595
    %v2637 = vunpack.c.l.b16 %v2596
    %v2638 = vunpack.c.l.b16 %v2597
    %v2639 = vunpack.c.l.b16 %v2598
    %v2640 = vunpack.c.l.b16 %v2599
    %v2641 = vunpack.c.l.b16 %v2600
    %v2642 = vpack.c.b16 %v2627, %v2626
    %v2643 = vpack.c.b16 %v2629, %v2628
    %v2644 = vpack.c.b16 %v2631, %v2630
    %v2645 = vpack.c.b16 %v2633, %v2632
    %v2646 = vpack.c.b16 %v2635, %v2634
    %v2647 = vpack.c.b16 %v2637, %v2636
    %v2648 = vpack.c.b16 %v2639, %v2638
    %v2649 = vpack.c.b16 %v2641, %v2640
    %2658 = vmatprep.subr.bf16.mxu0 0
    %2659 = vmatpush1.bf16.msra.mxu0 %v2642
    %2660 = vmatprep.subr.bf16.mxu0 0
    %2661 = vmatpush1.bf16.msra.mxu0 %v2643
    %2662 = vmatprep.subr.bf16.mxu0 0
    %2663 = vmatpush1.bf16.msra.mxu0 %v2644
    %2664 = vmatprep.subr.bf16.mxu0 0
    %2665 = vmatpush1.bf16.msra.mxu0 %v2645
    %2666 = vmatprep.subr.bf16.mxu0 0
    %2667 = vmatpush1.bf16.msra.mxu0 %v2646
    %2668 = vmatprep.subr.bf16.mxu0 0
    %2669 = vmatpush1.bf16.msra.mxu0 %v2647
    %2670 = vmatprep.subr.bf16.mxu0 0
    %2671 = vmatpush1.bf16.msra.mxu0 %v2648
    %2672 = vmatprep.subr.bf16.mxu0 0
    %2673 = vmatpush1.bf16.msra.mxu0 %v2649
    %2674 = vmatprep.subr.bf16.mxu0 0
    %2675 = vmatpush1.bf16.msra.mxu0 0
    %2676 = vmatprep.subr.bf16.mxu0 0
    %2677 = vmatpush1.bf16.msra.mxu0 0
    %2678 = vmatprep.subr.bf16.mxu0 0
    %2679 = vmatpush1.bf16.msra.mxu0 0
    %2680 = vmatprep.subr.bf16.mxu0 0
    %2681 = vmatpush1.bf16.msra.mxu0 0
    %2682 = vmatprep.subr.bf16.mxu0 0
    %2683 = vmatpush1.bf16.msra.mxu0 0
    %2684 = vmatprep.subr.bf16.mxu0 0
    %2685 = vmatpush1.bf16.msra.mxu0 0
    %2686 = vmatprep.subr.bf16.mxu0 0
    %2687 = vmatpush1.bf16.msra.mxu0 0
    %2688 = vmatprep.subr.bf16.mxu0 0
    %2689 = vmatpush1.bf16.msra.mxu0 0
    %2690 = vmatprep.mubr.bf16.mxu0 0
    %2691 = vmatmul.mubr.bf16.gmra.mrb[0].mxu0 %v2601
    %v2692 = vpop.f32.mrb[0].mxu0
    %v2693 = vadd.f32 %v2608, %v2692
    %v2694 = vpop.f32.mrb[0].mxu0
    %v2695 = vpop.f32.mrb[0].mxu0
    %v2696 = vpop.f32.mrb[0].mxu0
    %2697 = vdwg.mxu0
    %v2698 = vadd.f32 %v2693, %v2244
    %s2699 = scalar_lea.vmem %s33, 3
    %v2700 = vld [vmem:[%s2699] sm:$0x1]
    %s2701 = scalar_lea.vmem %s35, 3
    %v2702 = vld [vmem:[%s2701] sm:$0x1]
    %v2704 = vsel %vm219, %v2698, 0
    %2706 = vmatprep.subr.mxu0 0.0
    %2707 = vmatpush1.msra.mxu0 %v146
    %2708 = vmatprep.subr.mxu0 0.0
    %2709 = vmatpush1.msra.mxu0 %v147
    %2710 = vmatprep.subr.mxu0 0.0
    %2711 = vmatpush1.msra.mxu0 %v148
    %2712 = vmatprep.subr.mxu0 0.0
    %2713 = vmatpush1.msra.mxu0 %v149
    %2714 = vmatprep.subr.mxu0 0.0
    %2715 = vmatpush1.msra.mxu0 %v150
    %2716 = vmatprep.subr.mxu0 0.0
    %2717 = vmatpush1.msra.mxu0 %v151
    %2718 = vmatprep.subr.mxu0 0.0
    %2719 = vmatpush1.msra.mxu0 %v152
    %2720 = vmatprep.subr.mxu0 0.0
    %2721 = vmatpush1.msra.mxu0 %v153
    %2722 = vmatprep.subr.mxu0 0.0
    %2723 = vmatpush1.msra.mxu0 0.0
    %2724 = vmatprep.subr.mxu0 0.0
    %2725 = vmatpush1.msra.mxu0 0.0
    %2726 = vmatprep.subr.mxu0 0.0
    %2727 = vmatpush1.msra.mxu0 0.0
    %2728 = vmatprep.subr.mxu0 0.0
    %2729 = vmatpush1.msra.mxu0 0.0
    %2730 = vmatprep.subr.mxu0 0.0
    %2731 = vmatpush1.msra.mxu0 0.0
    %2732 = vmatprep.subr.mxu0 0.0
    %2733 = vmatpush1.msra.mxu0 0.0
    %2734 = vmatprep.subr.mxu0 0.0
    %2735 = vmatpush1.msra.mxu0 0.0
    %2736 = vmatprep.subr.mxu0 0.0
    %2737 = vmatpush1.msra.mxu0 0.0
    %2738 = vmatprep.subr.mxu0 0.0
    %2739 = vmatpush1.msra.mxu0 0.0
    %2740 = vmatprep.subr.mxu0 0.0
    %2741 = vmatpush1.msra.mxu0 0.0
    %2742 = vmatprep.subr.mxu0 0.0
    %2743 = vmatpush1.msra.mxu0 0.0
    %2744 = vmatprep.subr.mxu0 0.0
    %2745 = vmatpush1.msra.mxu0 0.0
    %2746 = vmatprep.subr.mxu0 0.0
    %2747 = vmatpush1.msra.mxu0 0.0
    %2748 = vmatprep.subr.mxu0 0.0
    %2749 = vmatpush1.msra.mxu0 0.0
    %2750 = vmatprep.subr.mxu0 0.0
    %2751 = vmatpush1.msra.mxu0 0.0
    %2752 = vmatprep.subr.mxu0 0.0
    %2753 = vmatpush1.msra.mxu0 0.0
    %2754 = vmatprep.subr.mxu0 0.0
    %2755 = vmatpush1.msra.mxu0 0.0
    %2756 = vmatprep.subr.mxu0 0.0
    %2757 = vmatpush1.msra.mxu0 0.0
    %2758 = vmatprep.subr.mxu0 0.0
    %2759 = vmatpush1.msra.mxu0 0.0
    %2760 = vmatprep.subr.mxu0 0.0
    %2761 = vmatpush1.msra.mxu0 0.0
    %2762 = vmatprep.subr.mxu0 0.0
    %2763 = vmatpush1.msra.mxu0 0.0
    %2764 = vmatprep.subr.mxu0 0.0
    %2765 = vmatpush1.msra.mxu0 0.0
    %2766 = vmatprep.subr.mxu0 0.0
    %2767 = vmatpush1.msra.mxu0 0.0
    %2768 = vmatprep.subr.mxu0 0.0
    %2769 = vmatpush1.msra.mxu0 0.0
    %2770 = vmatprep.mubr.f32.mxu0 0.0
    %2771 = vmatmul.mubr.f32.gmra.mrb[0].mxu0 %v2704
    %v2772 = vpop.f32.mrb[0].mxu0
    %v2773 = vadd.f32 0.0, %v2772
    %v2774 = vpop.f32.mrb[0].mxu0
    %2775 = vdwg.mxu0
    %v2776 = vsub.f32 %v2698, %v2773
    %v2777 = vmul.f32 %v2776, %v2776
    %v2779 = vsel %vm219, %v2777, 0
    %2781 = vmatprep.subr.mxu0 0.0
    %2782 = vmatpush1.msra.mxu0 %v146
    %2783 = vmatprep.subr.mxu0 0.0
    %2784 = vmatpush1.msra.mxu0 %v147
    %2785 = vmatprep.subr.mxu0 0.0
    %2786 = vmatpush1.msra.mxu0 %v148
    %2787 = vmatprep.subr.mxu0 0.0
    %2788 = vmatpush1.msra.mxu0 %v149
    %2789 = vmatprep.subr.mxu0 0.0
    %2790 = vmatpush1.msra.mxu0 %v150
    %2791 = vmatprep.subr.mxu0 0.0
    %2792 = vmatpush1.msra.mxu0 %v151
    %2793 = vmatprep.subr.mxu0 0.0
    %2794 = vmatpush1.msra.mxu0 %v152
    %2795 = vmatprep.subr.mxu0 0.0
    %2796 = vmatpush1.msra.mxu0 %v153
    %2797 = vmatprep.subr.mxu0 0.0
    %2798 = vmatpush1.msra.mxu0 0.0
    %2799 = vmatprep.subr.mxu0 0.0
    %2800 = vmatpush1.msra.mxu0 0.0
    %2801 = vmatprep.subr.mxu0 0.0
    %2802 = vmatpush1.msra.mxu0 0.0
    %2803 = vmatprep.subr.mxu0 0.0
    %2804 = vmatpush1.msra.mxu0 0.0
    %2805 = vmatprep.subr.mxu0 0.0
    %2806 = vmatpush1.msra.mxu0 0.0
    %2807 = vmatprep.subr.mxu0 0.0
    %2808 = vmatpush1.msra.mxu0 0.0
    %2809 = vmatprep.subr.mxu0 0.0
    %2810 = vmatpush1.msra.mxu0 0.0
    %2811 = vmatprep.subr.mxu0 0.0
    %2812 = vmatpush1.msra.mxu0 0.0
    %2813 = vmatprep.subr.mxu0 0.0
    %2814 = vmatpush1.msra.mxu0 0.0
    %2815 = vmatprep.subr.mxu0 0.0
    %2816 = vmatpush1.msra.mxu0 0.0
    %2817 = vmatprep.subr.mxu0 0.0
    %2818 = vmatpush1.msra.mxu0 0.0
    %2819 = vmatprep.subr.mxu0 0.0
    %2820 = vmatpush1.msra.mxu0 0.0
    %2821 = vmatprep.subr.mxu0 0.0
    %2822 = vmatpush1.msra.mxu0 0.0
    %2823 = vmatprep.subr.mxu0 0.0
    %2824 = vmatpush1.msra.mxu0 0.0
    %2825 = vmatprep.subr.mxu0 0.0
    %2826 = vmatpush1.msra.mxu0 0.0
    %2827 = vmatprep.subr.mxu0 0.0
    %2828 = vmatpush1.msra.mxu0 0.0
    %2829 = vmatprep.subr.mxu0 0.0
    %2830 = vmatpush1.msra.mxu0 0.0
    %2831 = vmatprep.subr.mxu0 0.0
    %2832 = vmatpush1.msra.mxu0 0.0
    %2833 = vmatprep.subr.mxu0 0.0
    %2834 = vmatpush1.msra.mxu0 0.0
    %2835 = vmatprep.subr.mxu0 0.0
    %2836 = vmatpush1.msra.mxu0 0.0
    %2837 = vmatprep.subr.mxu0 0.0
    %2838 = vmatpush1.msra.mxu0 0.0
    %2839 = vmatprep.subr.mxu0 0.0
    %2840 = vmatpush1.msra.mxu0 0.0
    %2841 = vmatprep.subr.mxu0 0.0
    %2842 = vmatpush1.msra.mxu0 0.0
    %2843 = vmatprep.subr.mxu0 0.0
    %2844 = vmatpush1.msra.mxu0 0.0
    %2845 = vmatprep.mubr.f32.mxu0 0.0
    %2846 = vmatmul.mubr.f32.gmra.mrb[0].mxu0 %v2779
    %v2847 = vpop.f32.mrb[0].mxu0
    %v2848 = vadd.f32 1e-05, %v2847
    %v2849 = vpop.f32.mrb[0].mxu0
    %2850 = vdwg.mxu0
    %v2851 = vrsqrt.pop %v2848
    %v2852 = vmul.f32 %v2776, %v2851
    %v2854 = vlaneseq
    %v2855 = vshrl.u32 %v2854, 7
    %v2856 = vsub.s32 0, %v2855
    %v2857 = vrot.slane %v2700, %v2856
    %v2859 = vmul.f32 %v2852, %v2857
    %v2861 = vlaneseq
    %v2862 = vshrl.u32 %v2861, 7
    %v2863 = vsub.s32 0, %v2862
    %v2864 = vrot.slane %v2702, %v2863
    %v2866 = vadd.f32 %v2859, %v2864
    %v2868 = vrot.slane %v2866, 7
    %v2870 = vrot.slane %v2866, 6
    %2871 = vrot.lane.b32.xlu0 %v2870, 96
    %v2872 = vpop.permute.xlu0 %2871
    %vm2874 = vcmask 1040384
    %v2875 = vsel %vm2874, %v2868, %v2872
    %v2876 = vld [vmem:[%s3] sm:$0x3]
    %v2877 = vld [vmem:[%s37] sm:$0x3]
    %2879 = vset.pattern.permute.xlu0 0
    %2880 = vperm.xlu0 %2879, %v2876
    %v2881 = vpop.permute.xlu0 %2880
    %v2883 = vlaneseq
    %v2884 = vshrl.u32 %v2883, 7
    %v2885 = vsub.s32 0, %v2884
    %v2886 = vrot.slane %v2877, %v2885
    %v2887 = vmul.f32 %v2881, %v2886
    %2888 = vset.pattern.permute.xlu0 1
    %2889 = vperm.xlu0 %2888, %v2876
    %v2890 = vpop.permute.xlu0 %2889
    %v2892 = vlaneseq
    %v2893 = vshrl.u32 %v2892, 7
    %v2894 = vsub.s32 1, %v2893
    %v2895 = vrot.slane %v2877, %v2894
    %v2896 = vmul.f32 %v2890, %v2895
    %v2897 = vadd.f32 %v2887, %v2896
    %v2898 = vld [vmem:[%s39] sm:$0x1]
    %v2900 = vlaneseq
    %v2901 = vshrl.u32 %v2900, 7
    %v2902 = vsub.s32 0, %v2901
    %v2903 = vrot.slane %v2898, %v2902
    %v2905 = vadd.f32 %v2897, %v2903
    %v2906 = vmax.f32 %v2905, 0.0
    %v2907 = vld [vmem:[%s41] sm:$0xf]
    %v2908 = vld [vmem:[%s41 + $0x4] sm:$0xf]
    %v2909 = vld [vmem:[%s41 + $0x8] sm:$0xf]
    %v2910 = vld [vmem:[%s41 + $0xc] sm:$0xf]
    %v2911 = vpack.c.bf16 %v2875, %v2875
    %v2912 = vld [vmem:[%s43] sm:$0xf]
    %v2913 = vpack.c.bf16 %v2906, %v2906
    %vm2914 = vcmask 64512
    %v2916 = vsel %vm2914, %v2913, 0
    %vm2918 = vcmask 1043456
    %v2920 = vsel %vm2918, %v2912, 0
    %2922 = vmatprep.subr.bf16.mxu0 0
    %2923 = vmatpush1.bf16.msra.mxu0 %v2920
    %2924 = vmatprep.subr.bf16.mxu0 0
    %2925 = vmatpush1.bf16.msra.mxu0 0
    %2926 = vmatprep.subr.bf16.mxu0 0
    %2927 = vmatpush1.bf16.msra.mxu0 0
    %2928 = vmatprep.subr.bf16.mxu0 0
    %2929 = vmatpush1.bf16.msra.mxu0 0
    %2930 = vmatprep.subr.bf16.mxu0 0
    %2931 = vmatpush1.bf16.msra.mxu0 0
    %2932 = vmatprep.subr.bf16.mxu0 0
    %2933 = vmatpush1.bf16.msra.mxu0 0
    %2934 = vmatprep.subr.bf16.mxu0 0
    %2935 = vmatpush1.bf16.msra.mxu0 0
    %2936 = vmatprep.subr.bf16.mxu0 0
    %2937 = vmatpush1.bf16.msra.mxu0 0
    %2938 = vmatprep.subr.bf16.mxu0 0
    %2939 = vmatpush1.bf16.msra.mxu0 0
    %2940 = vmatprep.subr.bf16.mxu0 0
    %2941 = vmatpush1.bf16.msra.mxu0 0
    %2942 = vmatprep.subr.bf16.mxu0 0
    %2943 = vmatpush1.bf16.msra.mxu0 0
    %2944 = vmatprep.subr.bf16.mxu0 0
    %2945 = vmatpush1.bf16.msra.mxu0 0
    %2946 = vmatprep.subr.bf16.mxu0 0
    %2947 = vmatpush1.bf16.msra.mxu0 0
    %2948 = vmatprep.subr.bf16.mxu0 0
    %2949 = vmatpush1.bf16.msra.mxu0 0
    %2950 = vmatprep.subr.bf16.mxu0 0
    %2951 = vmatpush1.bf16.msra.mxu0 0
    %2952 = vmatprep.subr.bf16.mxu0 0
    %2953 = vmatpush1.bf16.msra.mxu0 0
    %2954 = vmatprep.mubr.bf16.mxu0 0
    %2955 = vmatmul.mubr.bf16.gmra.mrb[0].mxu0 %v2916
    %v2956 = vpop.f32.mrb[0].mxu0
    %v2957 = vadd.f32 0.0, %v2956
    %v2958 = vpop.f32.mrb[0].mxu0
    %v2959 = vpop.f32.mrb[0].mxu0
    %v2960 = vpop.f32.mrb[0].mxu0
    %2961 = vdwg.mxu0
    %v2966 = vunpack.c.l.b16 %v2907
    %v2967 = vunpack.c.l.b16 %v2908
    %v2968 = vunpack.c.l.b16 %v2909
    %v2969 = vunpack.c.l.b16 %v2910
    %v2970 = vpack.c.b16 %v2967, %v2966
    %v2971 = vpack.c.b16 %v2969, %v2968
    %vm2974 = vcmask 261120
    %v2976 = vsel %vm2974, %v2911, 0
    %2978 = vmatprep.subr.bf16.mxu0 0
    %2979 = vmatpush1.bf16.msra.mxu0 %v2970
    %2980 = vmatprep.subr.bf16.mxu0 0
    %2981 = vmatpush1.bf16.msra.mxu0 %v2971
    %2982 = vmatprep.subr.bf16.mxu0 0
    %2983 = vmatpush1.bf16.msra.mxu0 0
    %2984 = vmatprep.subr.bf16.mxu0 0
    %2985 = vmatpush1.bf16.msra.mxu0 0
    %2986 = vmatprep.subr.bf16.mxu0 0
    %2987 = vmatpush1.bf16.msra.mxu0 0
    %2988 = vmatprep.subr.bf16.mxu0 0
    %2989 = vmatpush1.bf16.msra.mxu0 0
    %2990 = vmatprep.subr.bf16.mxu0 0
    %2991 = vmatpush1.bf16.msra.mxu0 0
    %2992 = vmatprep.subr.bf16.mxu0 0
    %2993 = vmatpush1.bf16.msra.mxu0 0
    %2994 = vmatprep.subr.bf16.mxu0 0
    %2995 = vmatpush1.bf16.msra.mxu0 0
    %2996 = vmatprep.subr.bf16.mxu0 0
    %2997 = vmatpush1.bf16.msra.mxu0 0
    %2998 = vmatprep.subr.bf16.mxu0 0
    %2999 = vmatpush1.bf16.msra.mxu0 0
    %3000 = vmatprep.subr.bf16.mxu0 0
    %3001 = vmatpush1.bf16.msra.mxu0 0
    %3002 = vmatprep.subr.bf16.mxu0 0
    %3003 = vmatpush1.bf16.msra.mxu0 0
    %3004 = vmatprep.subr.bf16.mxu0 0
    %3005 = vmatpush1.bf16.msra.mxu0 0
    %3006 = vmatprep.subr.bf16.mxu0 0
    %3007 = vmatpush1.bf16.msra.mxu0 0
    %3008 = vmatprep.subr.bf16.mxu0 0
    %3009 = vmatpush1.bf16.msra.mxu0 0
    %3010 = vmatprep.mubr.bf16.mxu0 0
    %3011 = vmatmul.mubr.bf16.gmra.mrb[0].mxu0 %v2976
    %v3012 = vpop.f32.mrb[0].mxu0
    %v3013 = vadd.f32 %v2957, %v3012
    %v3014 = vpop.f32.mrb[0].mxu0
    %v3015 = vpop.f32.mrb[0].mxu0
    %v3016 = vpop.f32.mrb[0].mxu0
    %3017 = vdwg.mxu0
    %v3018 = vld [vmem:[%s45] sm:$0x1]
    %v3020 = vlaneseq
    %v3021 = vshrl.u32 %v3020, 7
    %v3022 = vsub.s32 0, %v3021
    %v3023 = vrot.slane %v3018, %v3022
    %v3025 = vadd.f32 %v3013, %v3023
    %v3026 = vld [vmem:[%s47] sm:$0x1]
    %v3027 = vld [vmem:[%s49] sm:$0x1]
    %vm3028 = vcmask 254976
    %v3029 = vsel %vm3028, %v3025, 0.0
    %3030 = vadd.xlane.f32.xlu0 %v3029
    %v3031 = vpop.xlane.xlu0 %3030
    %v3032 = vrcp.pop 32.0
    %v3033 = vmul.f32 %v3031, %v3032
    %v3034 = vsub.f32 %v3025, %v3033
    %v3035 = vmul.f32 %v3034, %v3034
    %v3036 = vsel %vm3028, %v3035, 0.0
    %3037 = vadd.xlane.f32.xlu0 %v3036
    %v3038 = vpop.xlane.xlu0 %3037
    %v3039 = vmul.f32 %v3038, %v3032
    %v3040 = vadd.f32 %v3039, 1e-05
    %v3041 = vrsqrt.pop %v3040
    %v3042 = vmul.f32 %v3034, %v3041
    %v3044 = vlaneseq
    %v3045 = vshrl.u32 %v3044, 7
    %v3046 = vsub.s32 0, %v3045
    %v3047 = vrot.slane %v3026, %v3046
    %v3049 = vmul.f32 %v3042, %v3047
    %v3051 = vlaneseq
    %v3052 = vshrl.u32 %v3051, 7
    %v3053 = vsub.s32 0, %v3052
    %v3054 = vrot.slane %v3027, %v3053
    %v3056 = vadd.f32 %v3049, %v3054
    %v3057 = vmax.f32 %v3056, 0.0
    %v3058 = vld [vmem:[%s51] sm:$0xf]
    %v3059 = vld [vmem:[%s51 + $0x4] sm:$0xf]
    %v3060 = vld [vmem:[%s51 + $0x8] sm:$0xf]
    %v3061 = vld [vmem:[%s51 + $0xc] sm:$0xf]
    %v3062 = vpack.c.bf16 %v3057, %v3057
    %v3063 = vld [vmem:[%s53] sm:$0x1]
    %v3065 = vlaneseq
    %v3066 = vshrl.u32 %v3065, 7
    %v3067 = vsub.s32 0, %v3066
    %v3068 = vrot.slane %v3063, %v3067
    %v3074 = vunpack.c.l.b16 %v3058
    %v3075 = vunpack.c.l.b16 %v3059
    %v3076 = vunpack.c.l.b16 %v3060
    %v3077 = vunpack.c.l.b16 %v3061
    %v3078 = vpack.c.b16 %v3075, %v3074
    %v3079 = vpack.c.b16 %v3077, %v3076
    %v3083 = vsel %vm2974, %v3062, 0
    %3085 = vmatprep.subr.bf16.mxu0 0
    %3086 = vmatpush1.bf16.msra.mxu0 %v3078
    %3087 = vmatprep.subr.bf16.mxu0 0
    %3088 = vmatpush1.bf16.msra.mxu0 %v3079
    %3089 = vmatprep.subr.bf16.mxu0 0
    %3090 = vmatpush1.bf16.msra.mxu0 0
    %3091 = vmatprep.subr.bf16.mxu0 0
    %3092 = vmatpush1.bf16.msra.mxu0 0
    %3093 = vmatprep.subr.bf16.mxu0 0
    %3094 = vmatpush1.bf16.msra.mxu0 0
    %3095 = vmatprep.subr.bf16.mxu0 0
    %3096 = vmatpush1.bf16.msra.mxu0 0
    %3097 = vmatprep.subr.bf16.mxu0 0
    %3098 = vmatpush1.bf16.msra.mxu0 0
    %3099 = vmatprep.subr.bf16.mxu0 0
    %3100 = vmatpush1.bf16.msra.mxu0 0
    %3101 = vmatprep.subr.bf16.mxu0 0
    %3102 = vmatpush1.bf16.msra.mxu0 0
    %3103 = vmatprep.subr.bf16.mxu0 0
    %3104 = vmatpush1.bf16.msra.mxu0 0
    %3105 = vmatprep.subr.bf16.mxu0 0
    %3106 = vmatpush1.bf16.msra.mxu0 0
    %3107 = vmatprep.subr.bf16.mxu0 0
    %3108 = vmatpush1.bf16.msra.mxu0 0
    %3109 = vmatprep.subr.bf16.mxu0 0
    %3110 = vmatpush1.bf16.msra.mxu0 0
    %3111 = vmatprep.subr.bf16.mxu0 0
    %3112 = vmatpush1.bf16.msra.mxu0 0
    %3113 = vmatprep.subr.bf16.mxu0 0
    %3114 = vmatpush1.bf16.msra.mxu0 0
    %3115 = vmatprep.subr.bf16.mxu0 0
    %3116 = vmatpush1.bf16.msra.mxu0 0
    %3117 = vmatprep.mubr.bf16.mxu0 0
    %3118 = vmatmul.mubr.bf16.gmra.mrb[0].mxu0 %v3083
    %v3119 = vpop.f32.mrb[0].mxu0
    %v3120 = vadd.f32 %v3068, %v3119
    %v3121 = vpop.f32.mrb[0].mxu0
    %v3122 = vpop.f32.mrb[0].mxu0
    %v3123 = vpop.f32.mrb[0].mxu0
    %3124 = vdwg.mxu0
    %v3125 = vld [vmem:[%s55] sm:$0x1]
    %v3126 = vld [vmem:[%s57] sm:$0x1]
    %v3127 = vsel %vm3028, %v3120, 0.0
    %3128 = vadd.xlane.f32.xlu0 %v3127
    %v3129 = vpop.xlane.xlu0 %3128
    %v3130 = vmul.f32 %v3129, %v3032
    %v3131 = vsub.f32 %v3120, %v3130
    %v3132 = vmul.f32 %v3131, %v3131
    %v3133 = vsel %vm3028, %v3132, 0.0
    %3134 = vadd.xlane.f32.xlu0 %v3133
    %v3135 = vpop.xlane.xlu0 %3134
    %v3136 = vmul.f32 %v3135, %v3032
    %v3137 = vadd.f32 %v3136, 1e-05
    %v3138 = vrsqrt.pop %v3137
    %v3139 = vmul.f32 %v3131, %v3138
    %v3141 = vlaneseq
    %v3142 = vshrl.u32 %v3141, 7
    %v3143 = vsub.s32 0, %v3142
    %v3144 = vrot.slane %v3125, %v3143
    %v3146 = vmul.f32 %v3139, %v3144
    %v3148 = vlaneseq
    %v3149 = vshrl.u32 %v3148, 7
    %v3150 = vsub.s32 0, %v3149
    %v3151 = vrot.slane %v3126, %v3150
    %v3153 = vadd.f32 %v3146, %v3151
    %v3154 = vmax.f32 %v3153, 0.0
    %v3155 = vld [vmem:[%s59] sm:$0xf]
    %v3156 = vld [vmem:[%s59 + $0x4] sm:$0xf]
    %v3157 = vld [vmem:[%s59 + $0x8] sm:$0xf]
    %v3158 = vld [vmem:[%s59 + $0xc] sm:$0xf]
    %v3159 = vpack.c.bf16 %v3154, %v3154
    %v3160 = vld [vmem:[%s61] sm:$0x1]
    %v3162 = vlaneseq
    %v3163 = vshrl.u32 %v3162, 7
    %v3164 = vsub.s32 0, %v3163
    %v3165 = vrot.slane %v3160, %v3164
    %v3171 = vunpack.c.l.b16 %v3155
    %v3172 = vunpack.c.l.b16 %v3156
    %v3173 = vunpack.c.l.b16 %v3157
    %v3174 = vunpack.c.l.b16 %v3158
    %v3175 = vpack.c.b16 %v3172, %v3171
    %v3176 = vpack.c.b16 %v3174, %v3173
    %v3180 = vsel %vm2974, %v3159, 0
    %3182 = vmatprep.subr.bf16.mxu0 0
    %3183 = vmatpush1.bf16.msra.mxu0 %v3175
    %3184 = vmatprep.subr.bf16.mxu0 0
    %3185 = vmatpush1.bf16.msra.mxu0 %v3176
    %3186 = vmatprep.subr.bf16.mxu0 0
    %3187 = vmatpush1.bf16.msra.mxu0 0
    %3188 = vmatprep.subr.bf16.mxu0 0
    %3189 = vmatpush1.bf16.msra.mxu0 0
    %3190 = vmatprep.subr.bf16.mxu0 0
    %3191 = vmatpush1.bf16.msra.mxu0 0
    %3192 = vmatprep.subr.bf16.mxu0 0
    %3193 = vmatpush1.bf16.msra.mxu0 0
    %3194 = vmatprep.subr.bf16.mxu0 0
    %3195 = vmatpush1.bf16.msra.mxu0 0
    %3196 = vmatprep.subr.bf16.mxu0 0
    %3197 = vmatpush1.bf16.msra.mxu0 0
    %3198 = vmatprep.subr.bf16.mxu0 0
    %3199 = vmatpush1.bf16.msra.mxu0 0
    %3200 = vmatprep.subr.bf16.mxu0 0
    %3201 = vmatpush1.bf16.msra.mxu0 0
    %3202 = vmatprep.subr.bf16.mxu0 0
    %3203 = vmatpush1.bf16.msra.mxu0 0
    %3204 = vmatprep.subr.bf16.mxu0 0
    %3205 = vmatpush1.bf16.msra.mxu0 0
    %3206 = vmatprep.subr.bf16.mxu0 0
    %3207 = vmatpush1.bf16.msra.mxu0 0
    %3208 = vmatprep.subr.bf16.mxu0 0
    %3209 = vmatpush1.bf16.msra.mxu0 0
    %3210 = vmatprep.subr.bf16.mxu0 0
    %3211 = vmatpush1.bf16.msra.mxu0 0
    %3212 = vmatprep.subr.bf16.mxu0 0
    %3213 = vmatpush1.bf16.msra.mxu0 0
    %3214 = vmatprep.mubr.bf16.mxu0 0
    %3215 = vmatmul.mubr.bf16.gmra.mrb[0].mxu0 %v3180
    %v3216 = vpop.f32.mrb[0].mxu0
    %v3217 = vadd.f32 %v3165, %v3216
    %v3218 = vpop.f32.mrb[0].mxu0
    %v3219 = vpop.f32.mrb[0].mxu0
    %v3220 = vpop.f32.mrb[0].mxu0
    %3221 = vdwg.mxu0
    %v3222 = vmax.f32 %v3217, -2.0
    %v3223 = vmin.f32 %v3222, 2.0
    %vm3224 = vcmask 7168
    %v3225 = vsel %vm3224, %v3217, %v3223
    %vm3226 = vcmask 9216
    %3227 = vst.msk [vmem:[#allocation5] sm:$0x3] %vm3226, %v3225
    // Predicated region
    $region130: #{tpu_custom_call.1} parent=1 // pred_check
      _
    $region131: #{tpu_custom_call.1} parent=1 // pred_check_branch
      %3229 = sbr.rel (0) target = $region133
    $region132: #{tpu_custom_call.1} parent=1 // pred_region
      %s3231 = ssub.s32 32, 32
      %3232 = vsyncadd [#allocation4], %s3231
      %s3234 = sshll.u32 [#allocation5], 4
      %s3235 = int_to_ptr.vmem [resolvable:$true] %s3234
      %3237 = dma.vmem_to_hbm [thread:$0]  %s3235, 32, %s63, [#allocation4]
    $region133: #{tpu_custom_call.1} parent=1 // pred_fallthru
      _
    // Predicated region
    $region134: #{tpu_custom_call.1} parent=1 // pred_check
      _
    $region135: #{tpu_custom_call.1} parent=1 // pred_check_branch
      %3239 = sbr.rel (0) target = $region137
    $region136: #{tpu_custom_call.1} parent=1 // pred_region
      %3240 = dma.done [#allocation4], 32
    $region137: #{tpu_custom_call.1} parent=1 // pred_fallthru
      _
    %3241 = vsyncpa [#allocation3], 1
    %3242 = vsyncpa [#allocation4], 1

</llo_original>
